<compile_context>
chip_gen: v7x
topology: tpu7x:2x2x1
jax: 0.10.0
libtpu: 0.0.40
codegen_flags: <defaults>
</compile_context>

<pallas_src>
import functools

import jax
import jax.numpy as jnp
from jax import lax
from jax.experimental import pallas as pl
from jax.experimental.pallas import tpu as pltpu

EPS = 1e-5      # PyTorch BatchNorm2d default
_HALO = 128     # aligned zero halo on each side of the flattened spatial axis


def _round_up(x, m):
    return (x + m - 1) // m * m


def _dense_block_kernel(x_ref, mask_ref, *refs, W, S, C0p, Gp, tap_needs_mask):
    """Fused _DenseBlock forward for one block of lane-packed images.

    x_ref:    (1, C0p, S)   input channels (zero-padded to C0p), spatial+batch
                            flattened on the lane axis (S = nb*H*W)
    mask_ref: (9, S)        per-tap validity masks (1.0 where the tap's read
                            position is inside the same image)
    refs:     per layer (scale (cp,1) f32, shift (cp,1) f32, w (9, Gp, cp) bf16),
              then o_ref
    o_ref:    (1, C0p + L*Gp, S)   running channel concat == the block output
    """
    o_ref = refs[-1]
    layer_refs = refs[:-1]
    n_layers = len(layer_refs) // 3

    # The running channel concat lives in the output block.  The input block
    # (zero-padded to C0p rows on the host) seeds it; every later row is
    # written by a layer's matmul before being read, so no block-wide zero
    # initialization is needed (padded output rows come from zero weight rows).
    o_ref[0, :C0p, :] = x_ref[0]

    for i in range(n_layers):
        cp = C0p + i * Gp              # padded input channels == output slot
        scale_ref, shift_ref, w_ref = layer_refs[3 * i:3 * i + 3]

        # BatchNorm (folded to scale/shift on the host) + ReLU.  Padded gap
        # rows hold exact zeros with zero scale/shift -> they stay zero.
        x_cur = o_ref[0, :cp, :]                              # (cp, S) f32
        a = jnp.maximum(x_cur * scale_ref[...] + shift_ref[...], 0.0)

        # Aligned zero halo so every conv tap is a static lane-slice of `ext`
        # (all concat pieces are multiples of 128 lanes).
        zpad = jnp.zeros((cp, _HALO), jnp.float32)
        ext = jnp.concatenate([zpad, a, zpad], axis=1)        # (cp, S + 2*_HALO)

        # 3x3 conv as 9 accumulating matmuls (one per tap) on the MXU; bf16
        # operands, f32 accumulation.  No materialized im2col patch.
        acc = jnp.zeros((Gp, S), jnp.float32)
        for t in range(9):
            ky, kx = t // 3, t % 3
            off = (ky - 1) * W + (kx - 1)
            tap = a if t == 4 else ext[:, _HALO + off:_HALO + off + S]
            if tap_needs_mask[t]:
                tap = tap * mask_ref[t:t + 1, :]
            acc = acc + jnp.dot(w_ref[t], tap.astype(jnp.bfloat16),
                                preferred_element_type=jnp.float32)

        # Gp is a multiple of 8 and the slot starts at cp (also a multiple of
        # 8) -> full-tile unmasked store.
        o_ref[0, cp:cp + Gp, :] = acc


def dense_block(x_nchw, folded_params, growth_rate, images_per_step=None):
    """_DenseBlock.forward (eval mode) via one fused pallas_call."""
    N, C0, H, Wd = x_nchw.shape
    HW = H * Wd
    L = len(folded_params)
    G = growth_rate
    C0p = _round_up(C0, 8)
    Gp = _round_up(G, 8)
    c_tot = C0 + L * G
    ct_pad = C0p + L * Gp

    # Fold a few images into the lane axis so the matmul N dim is wide and the
    # fixed per-grid-step overhead is amortized.
    if images_per_step is None:
        nb = 1
        for cand in range(min(N, max(1, 2048 // HW)), 0, -1):
            if N % cand == 0:
                nb = cand
                break
    else:
        nb = images_per_step
    assert N % nb == 0
    NB = N // nb
    S = nb * HW

    # Host-side layout: NCHW -> zero-pad channels to C0p -> pack nb images per
    # grid step along the lane axis: (NB, C0p, nb*HW).  (Cheap XLA reshapes.)
    x = x_nchw.reshape(N, C0, HW).astype(jnp.float32)
    x = jnp.pad(x, ((0, 0), (0, C0p - C0), (0, 0)))
    x = x.reshape(NB, nb, C0p, HW).transpose(0, 2, 1, 3).reshape(NB, C0p, S)

    # Per-tap validity masks (combined row+column, tiled per packed image).
    # Column-shift taps always need masking; row-shift taps only when nb > 1.
    hh = jnp.arange(HW, dtype=jnp.int32) // Wd
    ww = jnp.arange(HW, dtype=jnp.int32) % Wd
    mask_rows, tap_needs_mask = [], []
    for ky in range(3):
        for kx in range(3):
            dy, dx = ky - 1, kx - 1
            ok = ((hh + dy >= 0) & (hh + dy <= H - 1) &
                  (ww + dx >= 0) & (ww + dx <= Wd - 1))
            mask_rows.append(ok.astype(jnp.float32))
            tap_needs_mask.append(dx != 0 or (dy != 0 and nb > 1))
    masks = jnp.tile(jnp.stack(mask_rows), (1, nb))            # (9, S)

    in_specs = [
        pl.BlockSpec((1, C0p, S), lambda n: (n, 0, 0)),
        pl.BlockSpec((9, S), lambda n: (0, 0)),
    ]
    args = [x, masks]
    for i, (scale_p, shift_p, w_taps) in enumerate(folded_params):
        cp = C0p + i * Gp
        assert scale_p.shape == (cp, 1) and w_taps.shape == (9, Gp, cp)
        in_specs += [
            pl.BlockSpec((cp, 1), lambda n: (0, 0)),
            pl.BlockSpec((cp, 1), lambda n: (0, 0)),
            pl.BlockSpec((9, Gp, cp), lambda n: (0, 0, 0)),
        ]
        args += [scale_p, shift_p, w_taps]

    kernel = functools.partial(
        _dense_block_kernel, W=Wd, S=S, C0p=C0p, Gp=Gp,
        tap_needs_mask=tuple(tap_needs_mask))

    out = pl.pallas_call(
        kernel,
        out_shape=jax.ShapeDtypeStruct((NB, ct_pad, S), jnp.float32),
        grid_spec=pltpu.PrefetchScalarGridSpec(
            num_scalar_prefetch=0,
            grid=(NB,),
            in_specs=in_specs,
            out_specs=pl.BlockSpec((1, ct_pad, S), lambda n: (n, 0, 0)),
        ),
        compiler_params=pltpu.CompilerParams(
            dimension_semantics=("parallel",),
        ),
    )(*args)

    # Unpack lanes back to images and drop the padded gap channels.
    out = out.reshape(NB, ct_pad, nb, HW).transpose(0, 2, 1, 3).reshape(N, ct_pad, HW)
    ch_idx = jnp.array(
        list(range(C0)) + [C0p + j * Gp + g for j in range(L) for g in range(G)],
        dtype=jnp.int32)
    out = jnp.take(out, ch_idx, axis=1)
    return out.reshape(N, c_tot, H, Wd)


# -------------------- parameter construction (deterministic) --------------------

def make_params(key, num_layers, num_input_features, growth_rate):
    """Returns (raw params for the reference, padded/folded params for the kernel)."""
    C0, G = num_input_features, growth_rate
    C0p, Gp = _round_up(C0, 8), _round_up(G, 8)
    raw, folded = [], []
    for i in range(num_layers):
        cin = C0 + i * G
        cp = C0p + i * Gp
        k = jax.random.fold_in(key, i)
        k1, k2, k3, k4, k5 = jax.random.split(k, 5)
        gamma = jax.random.uniform(k1, (cin,), jnp.float32, 0.5, 1.5)
        beta = 0.1 * jax.random.normal(k2, (cin,), jnp.float32)
        mean = 0.1 * jax.random.normal(k3, (cin,), jnp.float32)
        var = jax.random.uniform(k4, (cin,), jnp.float32, 0.5, 1.5)
        w = 0.1 * jax.random.normal(k5, (G, cin, 3, 3), jnp.float32)   # OIHW
        raw.append((gamma, beta, mean, var, w))

        scale = gamma / jnp.sqrt(var + EPS)
        shift = beta - mean * scale

        # Map the real concat channel order [x(C0), y0(G), y1(G), ...] into the
        # kernel's 8-aligned padded layout [x(C0p), y0(Gp), y1(Gp), ...].
        def pad_vec(v):
            parts = [jnp.pad(v[:C0], (0, C0p - C0))]
            for j in range(i):
                parts.append(jnp.pad(v[C0 + j * G:C0 + (j + 1) * G], (0, Gp - G)))
            return jnp.concatenate(parts) if len(parts) > 1 else parts[0]

        scale_p = pad_vec(scale).reshape(cp, 1)
        shift_p = pad_vec(shift).reshape(cp, 1)

        w_parts = [jnp.pad(w[:, :C0], ((0, 0), (0, C0p - C0), (0, 0), (0, 0)))]
        for j in range(i):
            seg = w[:, C0 + j * G:C0 + (j + 1) * G]
            w_parts.append(jnp.pad(seg, ((0, 0), (0, Gp - G), (0, 0), (0, 0))))
        w_pad = jnp.concatenate(w_parts, axis=1) if len(w_parts) > 1 else w_parts[0]
        w_pad = jnp.pad(w_pad, ((0, Gp - G), (0, 0), (0, 0), (0, 0)))   # (Gp, cp, 3, 3)
        # (Gp, cp, ky, kx) -> (ky, kx, Gp, cp) -> (9, Gp, cp); tap index t = ky*3+kx.
        w_taps = jnp.transpose(w_pad, (2, 3, 0, 1)).reshape(9, Gp, cp)
        folded.append((scale_p, shift_p, w_taps.astype(jnp.bfloat16)))
    return raw, folded


# -------------------- pure-JAX reference (eval-mode semantics) --------------------

def ref_dense_block(x, raw_params):
    for gamma, beta, mean, var, w in raw_params:
        a = (x - mean[None, :, None, None]) / jnp.sqrt(var[None, :, None, None] + EPS)
        a = a * gamma[None, :, None, None] + beta[None, :, None, None]
        a = jnp.maximum(a, 0.0)
        y = lax.conv_general_dilated(
            a, w, window_strides=(1, 1), padding=((1, 1), (1, 1)),
            dimension_numbers=("NCHW", "OIHW", "NCHW"))
        x = jnp.concatenate([x, y], axis=1)
    return x


if __name__ == "__main__":
    # TODO(synk): dropout (drop_rate > 0) is only active in training mode; this
    # kernel implements eval-mode forward where it is the identity.
    num_layers = 3
    num_input_features = 4
    growth_rate = 4
    N, H, W = 2, 16, 16

    key = jax.random.PRNGKey(0)
    kx, kp = jax.random.split(key)
    x = jax.random.normal(kx, (N, num_input_features, H, W), jnp.float32)  # NCHW

    raw_params, folded_params = make_params(kp, num_layers, num_input_features,
                                            growth_rate)

    out = jax.block_until_ready(dense_block(x, folded_params, growth_rate))
    expected = jax.block_until_ready(ref_dense_block(x, raw_params))

    c_tot = num_input_features + num_layers * growth_rate
    assert out.shape == expected.shape == (N, c_tot, H, W), out.shape
    # bf16 MXU operands (f32 accumulation) -> relaxed tolerance vs f32 reference.
    max_err = float(jnp.max(jnp.abs(out - expected)))
    assert jnp.allclose(out, expected, atol=5e-2, rtol=5e-2), max_err

    print("KERNEL_OK")
</pallas_src>

<mosaic_0001>
module attributes {stable_mosaic.version = 11 : i64} {
  func.func @_dense_block_kernel(%arg0: i32, %arg1: memref<1x8x512xf32, #tpu.memory_space<vmem>>, %arg2: memref<9x512xf32, #tpu.memory_space<vmem>>, %arg3: memref<8x1xf32, #tpu.memory_space<vmem>>, %arg4: memref<8x1xf32, #tpu.memory_space<vmem>>, %arg5: memref<9x8x8xbf16, #tpu.memory_space<vmem>>, %arg6: memref<16x1xf32, #tpu.memory_space<vmem>>, %arg7: memref<16x1xf32, #tpu.memory_space<vmem>>, %arg8: memref<9x8x16xbf16, #tpu.memory_space<vmem>>, %arg9: memref<24x1xf32, #tpu.memory_space<vmem>>, %arg10: memref<24x1xf32, #tpu.memory_space<vmem>>, %arg11: memref<9x8x24xbf16, #tpu.memory_space<vmem>>, %arg12: memref<1x32x512xf32, #tpu.memory_space<vmem>>) attributes {dimension_semantics = [#tpu.dimension_semantics<parallel>], iteration_bounds = array<i64: 1>, scalar_prefetch = 0 : i64, scratch_operands = 0 : i64, tpu.core_type = #tpu.core_type<tc>, window_params = [{transform_indices = @transform_0, window_bounds = array<i64: 1, 8, 512>}, {pipeline_mode = #tpu.pipeline_mode<synchronous>, transform_indices = @transform_1, window_bounds = array<i64: 9, 512>}, {pipeline_mode = #tpu.pipeline_mode<synchronous>, transform_indices = @transform_2, window_bounds = array<i64: 8, 1>}, {pipeline_mode = #tpu.pipeline_mode<synchronous>, transform_indices = @transform_3, window_bounds = array<i64: 8, 1>}, {pipeline_mode = #tpu.pipeline_mode<synchronous>, transform_indices = @transform_4, window_bounds = array<i64: 9, 8, 8>}, {pipeline_mode = #tpu.pipeline_mode<synchronous>, transform_indices = @transform_5, window_bounds = array<i64: 16, 1>}, {pipeline_mode = #tpu.pipeline_mode<synchronous>, transform_indices = @transform_6, window_bounds = array<i64: 16, 1>}, {pipeline_mode = #tpu.pipeline_mode<synchronous>, transform_indices = @transform_7, window_bounds = array<i64: 9, 8, 16>}, {pipeline_mode = #tpu.pipeline_mode<synchronous>, transform_indices = @transform_8, window_bounds = array<i64: 24, 1>}, {pipeline_mode = #tpu.pipeline_mode<synchronous>, transform_indices = @transform_9, window_bounds = array<i64: 24, 1>}, {pipeline_mode = #tpu.pipeline_mode<synchronous>, transform_indices = @transform_10, window_bounds = array<i64: 9, 8, 24>}, {transform_indices = @transform_11, window_bounds = array<i64: 1, 32, 512>}]} {
    %c0 = arith.constant 0 : index
    %c0_0 = arith.constant 0 : index
    %c0_1 = arith.constant 0 : index
    %0 = vector.load %arg1[%c0, %c0_0, %c0_1] : memref<1x8x512xf32, #tpu.memory_space<vmem>>, vector<1x8x512xf32>
    %1 = vector.shape_cast %0 : vector<1x8x512xf32> to vector<8x512xf32>
    %c0_2 = arith.constant 0 : index
    %c0_3 = arith.constant 0 : index
    %c0_4 = arith.constant 0 : index
    %2 = vector.load %arg12[%c0_2, %c0_3, %c0_4] : memref<1x32x512xf32, #tpu.memory_space<vmem>>, vector<1x8x512xf32>
    %3 = vector.shape_cast %2 : vector<1x8x512xf32> to vector<8x512xf32>
    %4 = vector.shape_cast %1 : vector<8x512xf32> to vector<1x8x512xf32>
    tpu.vector_store %arg12[%c0_2, %c0_3, %c0_4], %4 {strides = array<i32>} : memref<1x32x512xf32, #tpu.memory_space<vmem>>, vector<1x8x512xf32>,
    %c0_5 = arith.constant 0 : index
    %c0_6 = arith.constant 0 : index
    %c0_7 = arith.constant 0 : index
    %5 = vector.load %arg12[%c0_5, %c0_6, %c0_7] : memref<1x32x512xf32, #tpu.memory_space<vmem>>, vector<1x8x512xf32>
    %6 = vector.shape_cast %5 : vector<1x8x512xf32> to vector<8x512xf32>
    %c0_8 = arith.constant 0 : index
    %c0_9 = arith.constant 0 : index
    %7 = vector.load %arg3[%c0_8, %c0_9] : memref<8x1xf32, #tpu.memory_space<vmem>>, vector<8x1xf32>
    %8 = vector.broadcast %7 : vector<8x1xf32> to vector<8x512xf32>
    %9 = arith.mulf %6, %8 : vector<8x512xf32>
    %c0_10 = arith.constant 0 : index
    %c0_11 = arith.constant 0 : index
    %10 = vector.load %arg4[%c0_10, %c0_11] : memref<8x1xf32, #tpu.memory_space<vmem>>, vector<8x1xf32>
    %11 = vector.broadcast %10 : vector<8x1xf32> to vector<8x512xf32>
    %12 = arith.addf %9, %11 : vector<8x512xf32>
    %cst = arith.constant 0.000000e+00 : f32
    %13 = vector.broadcast %cst : f32 to vector<8x512xf32>
    %14 = arith.maximumf %12, %13 : vector<8x512xf32>
    %cst_12 = arith.constant 0.000000e+00 : f32
    %15 = vector.broadcast %cst_12 : f32 to vector<8x128xf32>
    %16 = tpu.concatenate %15, %14, %15 in 1 : vector<8x128xf32>, vector<8x512xf32>, vector<8x128xf32> -> vector<8x768xf32>
    %cst_13 = arith.constant 0.000000e+00 : f32
    %17 = vector.broadcast %cst_13 : f32 to vector<8x512xf32>
    %18 = vector.extract_strided_slice %16 {offsets = [0, 111], sizes = [8, 512], strides = [1, 1]} : vector<8x768xf32> to vector<8x512xf32>
    %c0_14 = arith.constant 0 : index
    %c0_15 = arith.constant 0 : index
    %19 = vector.load %arg2[%c0_14, %c0_15] : memref<9x512xf32, #tpu.memory_space<vmem>>, vector<1x512xf32>
    %20 = vector.broadcast %19 : vector<1x512xf32> to vector<8x512xf32>
    %21 = arith.mulf %18, %20 : vector<8x512xf32>
    %c0_16 = arith.constant 0 : index
    %c0_17 = arith.constant 0 : index
    %c0_18 = arith.constant 0 : index
    %22 = vector.load %arg5[%c0_16, %c0_17, %c0_18] : memref<9x8x8xbf16, #tpu.memory_space<vmem>>, vector<1x8x8xbf16>
    %23 = vector.shape_cast %22 : vector<1x8x8xbf16> to vector<8x8xbf16>
    %24 = arith.truncf %21 : vector<8x512xf32> to vector<8x512xbf16>
    %cst_19 = arith.constant dense<0.000000e+00> : vector<8x512xf32>
    %25 = tpu.matmul %23, %24, %cst_19 {dimension_numbers = #tpu.dot_dimension_numbers<[1], [0], [0], [1], [0, 0, 1, 1], [], []>} : vector<8x8xbf16>, vector<8x512xbf16>, vector<8x512xf32> -> vector<8x512xf32>
    %26 = arith.addf %17, %25 : vector<8x512xf32>
    %27 = vector.extract_strided_slice %16 {offsets = [0, 112], sizes = [8, 512], strides = [1, 1]} : vector<8x768xf32> to vector<8x512xf32>
    %c1 = arith.constant 1 : index
    %c0_20 = arith.constant 0 : index
    %28 = vector.load %arg2[%c1, %c0_20] : memref<9x512xf32, #tpu.memory_space<vmem>>, vector<1x512xf32>
    %29 = vector.broadcast %28 : vector<1x512xf32> to vector<8x512xf32>
    %30 = arith.mulf %27, %29 : vector<8x512xf32>
    %c1_21 = arith.constant 1 : index
    %c0_22 = arith.constant 0 : index
    %c0_23 = arith.constant 0 : index
    %31 = vector.load %arg5[%c1_21, %c0_22, %c0_23] : memref<9x8x8xbf16, #tpu.memory_space<vmem>>, vector<1x8x8xbf16>
    %32 = vector.shape_cast %31 : vector<1x8x8xbf16> to vector<8x8xbf16>
    %33 = arith.truncf %30 : vector<8x512xf32> to vector<8x512xbf16>
    %cst_24 = arith.constant dense<0.000000e+00> : vector<8x512xf32>
    %34 = tpu.matmul %32, %33, %cst_24 {dimension_numbers = #tpu.dot_dimension_numbers<[1], [0], [0], [1], [0, 0, 1, 1], [], []>} : vector<8x8xbf16>, vector<8x512xbf16>, vector<8x512xf32> -> vector<8x512xf32>
    %35 = arith.addf %26, %34 : vector<8x512xf32>
    %36 = vector.extract_strided_slice %16 {offsets = [0, 113], sizes = [8, 512], strides = [1, 1]} : vector<8x768xf32> to vector<8x512xf32>
    %c2 = arith.constant 2 : index
    %c0_25 = arith.constant 0 : index
    %37 = vector.load %arg2[%c2, %c0_25] : memref<9x512xf32, #tpu.memory_space<vmem>>, vector<1x512xf32>
    %38 = vector.broadcast %37 : vector<1x512xf32> to vector<8x512xf32>
    %39 = arith.mulf %36, %38 : vector<8x512xf32>
    %c2_26 = arith.constant 2 : index
    %c0_27 = arith.constant 0 : index
    %c0_28 = arith.constant 0 : index
    %40 = vector.load %arg5[%c2_26, %c0_27, %c0_28] : memref<9x8x8xbf16, #tpu.memory_space<vmem>>, vector<1x8x8xbf16>
    %41 = vector.shape_cast %40 : vector<1x8x8xbf16> to vector<8x8xbf16>
    %42 = arith.truncf %39 : vector<8x512xf32> to vector<8x512xbf16>
    %cst_29 = arith.constant dense<0.000000e+00> : vector<8x512xf32>
    %43 = tpu.matmul %41, %42, %cst_29 {dimension_numbers = #tpu.dot_dimension_numbers<[1], [0], [0], [1], [0, 0, 1, 1], [], []>} : vector<8x8xbf16>, vector<8x512xbf16>, vector<8x512xf32> -> vector<8x512xf32>
    %44 = arith.addf %35, %43 : vector<8x512xf32>
    %45 = vector.extract_strided_slice %16 {offsets = [0, 127], sizes = [8, 512], strides = [1, 1]} : vector<8x768xf32> to vector<8x512xf32>
    %c3 = arith.constant 3 : index
    %c0_30 = arith.constant 0 : index
    %46 = vector.load %arg2[%c3, %c0_30] : memref<9x512xf32, #tpu.memory_space<vmem>>, vector<1x512xf32>
    %47 = vector.broadcast %46 : vector<1x512xf32> to vector<8x512xf32>
    %48 = arith.mulf %45, %47 : vector<8x512xf32>
    %c3_31 = arith.constant 3 : index
    %c0_32 = arith.constant 0 : index
    %c0_33 = arith.constant 0 : index
    %49 = vector.load %arg5[%c3_31, %c0_32, %c0_33] : memref<9x8x8xbf16, #tpu.memory_space<vmem>>, vector<1x8x8xbf16>
    %50 = vector.shape_cast %49 : vector<1x8x8xbf16> to vector<8x8xbf16>
    %51 = arith.truncf %48 : vector<8x512xf32> to vector<8x512xbf16>
    %cst_34 = arith.constant dense<0.000000e+00> : vector<8x512xf32>
    %52 = tpu.matmul %50, %51, %cst_34 {dimension_numbers = #tpu.dot_dimension_numbers<[1], [0], [0], [1], [0, 0, 1, 1], [], []>} : vector<8x8xbf16>, vector<8x512xbf16>, vector<8x512xf32> -> vector<8x512xf32>
    %53 = arith.addf %44, %52 : vector<8x512xf32>
    %c4 = arith.constant 4 : index
    %c0_35 = arith.constant 0 : index
    %c0_36 = arith.constant 0 : index
    %54 = vector.load %arg5[%c4, %c0_35, %c0_36] : memref<9x8x8xbf16, #tpu.memory_space<vmem>>, vector<1x8x8xbf16>
    %55 = vector.shape_cast %54 : vector<1x8x8xbf16> to vector<8x8xbf16>
    %56 = arith.truncf %14 : vector<8x512xf32> to vector<8x512xbf16>
    %cst_37 = arith.constant dense<0.000000e+00> : vector<8x512xf32>
    %57 = tpu.matmul %55, %56, %cst_37 {dimension_numbers = #tpu.dot_dimension_numbers<[1], [0], [0], [1], [0, 0, 1, 1], [], []>} : vector<8x8xbf16>, vector<8x512xbf16>, vector<8x512xf32> -> vector<8x512xf32>
    %58 = arith.addf %53, %57 : vector<8x512xf32>
    %59 = vector.extract_strided_slice %16 {offsets = [0, 129], sizes = [8, 512], strides = [1, 1]} : vector<8x768xf32> to vector<8x512xf32>
    %c5 = arith.constant 5 : index
    %c0_38 = arith.constant 0 : index
    %60 = vector.load %arg2[%c5, %c0_38] : memref<9x512xf32, #tpu.memory_space<vmem>>, vector<1x512xf32>
    %61 = vector.broadcast %60 : vector<1x512xf32> to vector<8x512xf32>
    %62 = arith.mulf %59, %61 : vector<8x512xf32>
    %c5_39 = arith.constant 5 : index
    %c0_40 = arith.constant 0 : index
    %c0_41 = arith.constant 0 : index
    %63 = vector.load %arg5[%c5_39, %c0_40, %c0_41] : memref<9x8x8xbf16, #tpu.memory_space<vmem>>, vector<1x8x8xbf16>
    %64 = vector.shape_cast %63 : vector<1x8x8xbf16> to vector<8x8xbf16>
    %65 = arith.truncf %62 : vector<8x512xf32> to vector<8x512xbf16>
    %cst_42 = arith.constant dense<0.000000e+00> : vector<8x512xf32>
    %66 = tpu.matmul %64, %65, %cst_42 {dimension_numbers = #tpu.dot_dimension_numbers<[1], [0], [0], [1], [0, 0, 1, 1], [], []>} : vector<8x8xbf16>, vector<8x512xbf16>, vector<8x512xf32> -> vector<8x512xf32>
    %67 = arith.addf %58, %66 : vector<8x512xf32>
    %68 = vector.extract_strided_slice %16 {offsets = [0, 143], sizes = [8, 512], strides = [1, 1]} : vector<8x768xf32> to vector<8x512xf32>
    %c6 = arith.constant 6 : index
    %c0_43 = arith.constant 0 : index
    %69 = vector.load %arg2[%c6, %c0_43] : memref<9x512xf32, #tpu.memory_space<vmem>>, vector<1x512xf32>
    %70 = vector.broadcast %69 : vector<1x512xf32> to vector<8x512xf32>
    %71 = arith.mulf %68, %70 : vector<8x512xf32>
    %c6_44 = arith.constant 6 : index
    %c0_45 = arith.constant 0 : index
    %c0_46 = arith.constant 0 : index
    %72 = vector.load %arg5[%c6_44, %c0_45, %c0_46] : memref<9x8x8xbf16, #tpu.memory_space<vmem>>, vector<1x8x8xbf16>
    %73 = vector.shape_cast %72 : vector<1x8x8xbf16> to vector<8x8xbf16>
    %74 = arith.truncf %71 : vector<8x512xf32> to vector<8x512xbf16>
    %cst_47 = arith.constant dense<0.000000e+00> : vector<8x512xf32>
    %75 = tpu.matmul %73, %74, %cst_47 {dimension_numbers = #tpu.dot_dimension_numbers<[1], [0], [0], [1], [0, 0, 1, 1], [], []>} : vector<8x8xbf16>, vector<8x512xbf16>, vector<8x512xf32> -> vector<8x512xf32>
    %76 = arith.addf %67, %75 : vector<8x512xf32>
    %77 = vector.extract_strided_slice %16 {offsets = [0, 144], sizes = [8, 512], strides = [1, 1]} : vector<8x768xf32> to vector<8x512xf32>
    %c7 = arith.constant 7 : index
    %c0_48 = arith.constant 0 : index
    %78 = vector.load %arg2[%c7, %c0_48] : memref<9x512xf32, #tpu.memory_space<vmem>>, vector<1x512xf32>
    %79 = vector.broadcast %78 : vector<1x512xf32> to vector<8x512xf32>
    %80 = arith.mulf %77, %79 : vector<8x512xf32>
    %c7_49 = arith.constant 7 : index
    %c0_50 = arith.constant 0 : index
    %c0_51 = arith.constant 0 : index
    %81 = vector.load %arg5[%c7_49, %c0_50, %c0_51] : memref<9x8x8xbf16, #tpu.memory_space<vmem>>, vector<1x8x8xbf16>
    %82 = vector.shape_cast %81 : vector<1x8x8xbf16> to vector<8x8xbf16>
    %83 = arith.truncf %80 : vector<8x512xf32> to vector<8x512xbf16>
    %cst_52 = arith.constant dense<0.000000e+00> : vector<8x512xf32>
    %84 = tpu.matmul %82, %83, %cst_52 {dimension_numbers = #tpu.dot_dimension_numbers<[1], [0], [0], [1], [0, 0, 1, 1], [], []>} : vector<8x8xbf16>, vector<8x512xbf16>, vector<8x512xf32> -> vector<8x512xf32>
    %85 = arith.addf %76, %84 : vector<8x512xf32>
    %86 = vector.extract_strided_slice %16 {offsets = [0, 145], sizes = [8, 512], strides = [1, 1]} : vector<8x768xf32> to vector<8x512xf32>
    %c8 = arith.constant 8 : index
    %c0_53 = arith.constant 0 : index
    %87 = vector.load %arg2[%c8, %c0_53] : memref<9x512xf32, #tpu.memory_space<vmem>>, vector<1x512xf32>
    %88 = vector.broadcast %87 : vector<1x512xf32> to vector<8x512xf32>
    %89 = arith.mulf %86, %88 : vector<8x512xf32>
    %c8_54 = arith.constant 8 : index
    %c0_55 = arith.constant 0 : index
    %c0_56 = arith.constant 0 : index
    %90 = vector.load %arg5[%c8_54, %c0_55, %c0_56] : memref<9x8x8xbf16, #tpu.memory_space<vmem>>, vector<1x8x8xbf16>
    %91 = vector.shape_cast %90 : vector<1x8x8xbf16> to vector<8x8xbf16>
    %92 = arith.truncf %89 : vector<8x512xf32> to vector<8x512xbf16>
    %cst_57 = arith.constant dense<0.000000e+00> : vector<8x512xf32>
    %93 = tpu.matmul %91, %92, %cst_57 {dimension_numbers = #tpu.dot_dimension_numbers<[1], [0], [0], [1], [0, 0, 1, 1], [], []>} : vector<8x8xbf16>, vector<8x512xbf16>, vector<8x512xf32> -> vector<8x512xf32>
    %94 = arith.addf %85, %93 : vector<8x512xf32>
    %c0_58 = arith.constant 0 : index
    %c8_59 = arith.constant 8 : index
    %c0_60 = arith.constant 0 : index
    %95 = vector.load %arg12[%c0_58, %c8_59, %c0_60] : memref<1x32x512xf32, #tpu.memory_space<vmem>>, vector<1x8x512xf32>
    %96 = vector.shape_cast %95 : vector<1x8x512xf32> to vector<8x512xf32>
    %97 = vector.shape_cast %94 : vector<8x512xf32> to vector<1x8x512xf32>
    tpu.vector_store %arg12[%c0_58, %c8_59, %c0_60], %97 {strides = array<i32>} : memref<1x32x512xf32, #tpu.memory_space<vmem>>, vector<1x8x512xf32>,
    %c0_61 = arith.constant 0 : index
    %c0_62 = arith.constant 0 : index
    %c0_63 = arith.constant 0 : index
    %98 = vector.load %arg12[%c0_61, %c0_62, %c0_63] : memref<1x32x512xf32, #tpu.memory_space<vmem>>, vector<1x16x512xf32>
    %99 = vector.shape_cast %98 : vector<1x16x512xf32> to vector<16x512xf32>
    %c0_64 = arith.constant 0 : index
    %c0_65 = arith.constant 0 : index
    %100 = vector.load %arg6[%c0_64, %c0_65] : memref<16x1xf32, #tpu.memory_space<vmem>>, vector<16x1xf32>
    %101 = vector.broadcast %100 : vector<16x1xf32> to vector<16x512xf32>
    %102 = arith.mulf %99, %101 : vector<16x512xf32>
    %c0_66 = arith.constant 0 : index
    %c0_67 = arith.constant 0 : index
    %103 = vector.load %arg7[%c0_66, %c0_67] : memref<16x1xf32, #tpu.memory_space<vmem>>, vector<16x1xf32>
    %104 = vector.broadcast %103 : vector<16x1xf32> to vector<16x512xf32>
    %105 = arith.addf %102, %104 : vector<16x512xf32>
    %cst_68 = arith.constant 0.000000e+00 : f32
    %106 = vector.broadcast %cst_68 : f32 to vector<16x512xf32>
    %107 = arith.maximumf %105, %106 : vector<16x512xf32>
    %cst_69 = arith.constant 0.000000e+00 : f32
    %108 = vector.broadcast %cst_69 : f32 to vector<16x128xf32>
    %109 = tpu.concatenate %108, %107, %108 in 1 : vector<16x128xf32>, vector<16x512xf32>, vector<16x128xf32> -> vector<16x768xf32>
    %cst_70 = arith.constant 0.000000e+00 : f32
    %110 = vector.broadcast %cst_70 : f32 to vector<8x512xf32>
    %111 = vector.extract_strided_slice %109 {offsets = [0, 111], sizes = [16, 512], strides = [1, 1]} : vector<16x768xf32> to vector<16x512xf32>
    %c0_71 = arith.constant 0 : index
    %c0_72 = arith.constant 0 : index
    %112 = vector.load %arg2[%c0_71, %c0_72] : memref<9x512xf32, #tpu.memory_space<vmem>>, vector<1x512xf32>
    %113 = vector.broadcast %112 : vector<1x512xf32> to vector<16x512xf32>
    %114 = arith.mulf %111, %113 : vector<16x512xf32>
    %c0_73 = arith.constant 0 : index
    %c0_74 = arith.constant 0 : index
    %c0_75 = arith.constant 0 : index
    %115 = vector.load %arg8[%c0_73, %c0_74, %c0_75] : memref<9x8x16xbf16, #tpu.memory_space<vmem>>, vector<1x8x16xbf16>
    %116 = vector.shape_cast %115 : vector<1x8x16xbf16> to vector<8x16xbf16>
    %117 = arith.truncf %114 : vector<16x512xf32> to vector<16x512xbf16>
    %cst_76 = arith.constant dense<0.000000e+00> : vector<8x512xf32>
    %118 = tpu.matmul %116, %117, %cst_76 {dimension_numbers = #tpu.dot_dimension_numbers<[1], [0], [0], [1], [0, 0, 1, 1], [], []>} : vector<8x16xbf16>, vector<16x512xbf16>, vector<8x512xf32> -> vector<8x512xf32>
    %119 = arith.addf %110, %118 : vector<8x512xf32>
    %120 = vector.extract_strided_slice %109 {offsets = [0, 112], sizes = [16, 512], strides = [1, 1]} : vector<16x768xf32> to vector<16x512xf32>
    %c1_77 = arith.constant 1 : index
    %c0_78 = arith.constant 0 : index
    %121 = vector.load %arg2[%c1_77, %c0_78] : memref<9x512xf32, #tpu.memory_space<vmem>>, vector<1x512xf32>
    %122 = vector.broadcast %121 : vector<1x512xf32> to vector<16x512xf32>
    %123 = arith.mulf %120, %122 : vector<16x512xf32>
    %c1_79 = arith.constant 1 : index
    %c0_80 = arith.constant 0 : index
    %c0_81 = arith.constant 0 : index
    %124 = vector.load %arg8[%c1_79, %c0_80, %c0_81] : memref<9x8x16xbf16, #tpu.memory_space<vmem>>, vector<1x8x16xbf16>
    %125 = vector.shape_cast %124 : vector<1x8x16xbf16> to vector<8x16xbf16>
    %126 = arith.truncf %123 : vector<16x512xf32> to vector<16x512xbf16>
    %cst_82 = arith.constant dense<0.000000e+00> : vector<8x512xf32>
    %127 = tpu.matmul %125, %126, %cst_82 {dimension_numbers = #tpu.dot_dimension_numbers<[1], [0], [0], [1], [0, 0, 1, 1], [], []>} : vector<8x16xbf16>, vector<16x512xbf16>, vector<8x512xf32> -> vector<8x512xf32>
    %128 = arith.addf %119, %127 : vector<8x512xf32>
    %129 = vector.extract_strided_slice %109 {offsets = [0, 113], sizes = [16, 512], strides = [1, 1]} : vector<16x768xf32> to vector<16x512xf32>
    %c2_83 = arith.constant 2 : index
    %c0_84 = arith.constant 0 : index
    %130 = vector.load %arg2[%c2_83, %c0_84] : memref<9x512xf32, #tpu.memory_space<vmem>>, vector<1x512xf32>
    %131 = vector.broadcast %130 : vector<1x512xf32> to vector<16x512xf32>
    %132 = arith.mulf %129, %131 : vector<16x512xf32>
    %c2_85 = arith.constant 2 : index
    %c0_86 = arith.constant 0 : index
    %c0_87 = arith.constant 0 : index
    %133 = vector.load %arg8[%c2_85, %c0_86, %c0_87] : memref<9x8x16xbf16, #tpu.memory_space<vmem>>, vector<1x8x16xbf16>
    %134 = vector.shape_cast %133 : vector<1x8x16xbf16> to vector<8x16xbf16>
    %135 = arith.truncf %132 : vector<16x512xf32> to vector<16x512xbf16>
    %cst_88 = arith.constant dense<0.000000e+00> : vector<8x512xf32>
    %136 = tpu.matmul %134, %135, %cst_88 {dimension_numbers = #tpu.dot_dimension_numbers<[1], [0], [0], [1], [0, 0, 1, 1], [], []>} : vector<8x16xbf16>, vector<16x512xbf16>, vector<8x512xf32> -> vector<8x512xf32>
    %137 = arith.addf %128, %136 : vector<8x512xf32>
    %138 = vector.extract_strided_slice %109 {offsets = [0, 127], sizes = [16, 512], strides = [1, 1]} : vector<16x768xf32> to vector<16x512xf32>
    %c3_89 = arith.constant 3 : index
    %c0_90 = arith.constant 0 : index
    %139 = vector.load %arg2[%c3_89, %c0_90] : memref<9x512xf32, #tpu.memory_space<vmem>>, vector<1x512xf32>
    %140 = vector.broadcast %139 : vector<1x512xf32> to vector<16x512xf32>
    %141 = arith.mulf %138, %140 : vector<16x512xf32>
    %c3_91 = arith.constant 3 : index
    %c0_92 = arith.constant 0 : index
    %c0_93 = arith.constant 0 : index
    %142 = vector.load %arg8[%c3_91, %c0_92, %c0_93] : memref<9x8x16xbf16, #tpu.memory_space<vmem>>, vector<1x8x16xbf16>
    %143 = vector.shape_cast %142 : vector<1x8x16xbf16> to vector<8x16xbf16>
    %144 = arith.truncf %141 : vector<16x512xf32> to vector<16x512xbf16>
    %cst_94 = arith.constant dense<0.000000e+00> : vector<8x512xf32>
    %145 = tpu.matmul %143, %144, %cst_94 {dimension_numbers = #tpu.dot_dimension_numbers<[1], [0], [0], [1], [0, 0, 1, 1], [], []>} : vector<8x16xbf16>, vector<16x512xbf16>, vector<8x512xf32> -> vector<8x512xf32>
    %146 = arith.addf %137, %145 : vector<8x512xf32>
    %c4_95 = arith.constant 4 : index
    %c0_96 = arith.constant 0 : index
    %c0_97 = arith.constant 0 : index
    %147 = vector.load %arg8[%c4_95, %c0_96, %c0_97] : memref<9x8x16xbf16, #tpu.memory_space<vmem>>, vector<1x8x16xbf16>
    %148 = vector.shape_cast %147 : vector<1x8x16xbf16> to vector<8x16xbf16>
    %149 = arith.truncf %107 : vector<16x512xf32> to vector<16x512xbf16>
    %cst_98 = arith.constant dense<0.000000e+00> : vector<8x512xf32>
    %150 = tpu.matmul %148, %149, %cst_98 {dimension_numbers = #tpu.dot_dimension_numbers<[1], [0], [0], [1], [0, 0, 1, 1], [], []>} : vector<8x16xbf16>, vector<16x512xbf16>, vector<8x512xf32> -> vector<8x512xf32>
    %151 = arith.addf %146, %150 : vector<8x512xf32>
    %152 = vector.extract_strided_slice %109 {offsets = [0, 129], sizes = [16, 512], strides = [1, 1]} : vector<16x768xf32> to vector<16x512xf32>
    %c5_99 = arith.constant 5 : index
    %c0_100 = arith.constant 0 : index
    %153 = vector.load %arg2[%c5_99, %c0_100] : memref<9x512xf32, #tpu.memory_space<vmem>>, vector<1x512xf32>
    %154 = vector.broadcast %153 : vector<1x512xf32> to vector<16x512xf32>
    %155 = arith.mulf %152, %154 : vector<16x512xf32>
    %c5_101 = arith.constant 5 : index
    %c0_102 = arith.constant 0 : index
    %c0_103 = arith.constant 0 : index
    %156 = vector.load %arg8[%c5_101, %c0_102, %c0_103] : memref<9x8x16xbf16, #tpu.memory_space<vmem>>, vector<1x8x16xbf16>
    %157 = vector.shape_cast %156 : vector<1x8x16xbf16> to vector<8x16xbf16>
    %158 = arith.truncf %155 : vector<16x512xf32> to vector<16x512xbf16>
    %cst_104 = arith.constant dense<0.000000e+00> : vector<8x512xf32>
    %159 = tpu.matmul %157, %158, %cst_104 {dimension_numbers = #tpu.dot_dimension_numbers<[1], [0], [0], [1], [0, 0, 1, 1], [], []>} : vector<8x16xbf16>, vector<16x512xbf16>, vector<8x512xf32> -> vector<8x512xf32>
    %160 = arith.addf %151, %159 : vector<8x512xf32>
    %161 = vector.extract_strided_slice %109 {offsets = [0, 143], sizes = [16, 512], strides = [1, 1]} : vector<16x768xf32> to vector<16x512xf32>
    %c6_105 = arith.constant 6 : index
    %c0_106 = arith.constant 0 : index
    %162 = vector.load %arg2[%c6_105, %c0_106] : memref<9x512xf32, #tpu.memory_space<vmem>>, vector<1x512xf32>
    %163 = vector.broadcast %162 : vector<1x512xf32> to vector<16x512xf32>
    %164 = arith.mulf %161, %163 : vector<16x512xf32>
    %c6_107 = arith.constant 6 : index
    %c0_108 = arith.constant 0 : index
    %c0_109 = arith.constant 0 : index
    %165 = vector.load %arg8[%c6_107, %c0_108, %c0_109] : memref<9x8x16xbf16, #tpu.memory_space<vmem>>, vector<1x8x16xbf16>
    %166 = vector.shape_cast %165 : vector<1x8x16xbf16> to vector<8x16xbf16>
    %167 = arith.truncf %164 : vector<16x512xf32> to vector<16x512xbf16>
    %cst_110 = arith.constant dense<0.000000e+00> : vector<8x512xf32>
    %168 = tpu.matmul %166, %167, %cst_110 {dimension_numbers = #tpu.dot_dimension_numbers<[1], [0], [0], [1], [0, 0, 1, 1], [], []>} : vector<8x16xbf16>, vector<16x512xbf16>, vector<8x512xf32> -> vector<8x512xf32>
    %169 = arith.addf %160, %168 : vector<8x512xf32>
    %170 = vector.extract_strided_slice %109 {offsets = [0, 144], sizes = [16, 512], strides = [1, 1]} : vector<16x768xf32> to vector<16x512xf32>
    %c7_111 = arith.constant 7 : index
    %c0_112 = arith.constant 0 : index
    %171 = vector.load %arg2[%c7_111, %c0_112] : memref<9x512xf32, #tpu.memory_space<vmem>>, vector<1x512xf32>
    %172 = vector.broadcast %171 : vector<1x512xf32> to vector<16x512xf32>
    %173 = arith.mulf %170, %172 : vector<16x512xf32>
    %c7_113 = arith.constant 7 : index
    %c0_114 = arith.constant 0 : index
    %c0_115 = arith.constant 0 : index
    %174 = vector.load %arg8[%c7_113, %c0_114, %c0_115] : memref<9x8x16xbf16, #tpu.memory_space<vmem>>, vector<1x8x16xbf16>
    %175 = vector.shape_cast %174 : vector<1x8x16xbf16> to vector<8x16xbf16>
    %176 = arith.truncf %173 : vector<16x512xf32> to vector<16x512xbf16>
    %cst_116 = arith.constant dense<0.000000e+00> : vector<8x512xf32>
    %177 = tpu.matmul %175, %176, %cst_116 {dimension_numbers = #tpu.dot_dimension_numbers<[1], [0], [0], [1], [0, 0, 1, 1], [], []>} : vector<8x16xbf16>, vector<16x512xbf16>, vector<8x512xf32> -> vector<8x512xf32>
    %178 = arith.addf %169, %177 : vector<8x512xf32>
    %179 = vector.extract_strided_slice %109 {offsets = [0, 145], sizes = [16, 512], strides = [1, 1]} : vector<16x768xf32> to vector<16x512xf32>
    %c8_117 = arith.constant 8 : index
    %c0_118 = arith.constant 0 : index
    %180 = vector.load %arg2[%c8_117, %c0_118] : memref<9x512xf32, #tpu.memory_space<vmem>>, vector<1x512xf32>
    %181 = vector.broadcast %180 : vector<1x512xf32> to vector<16x512xf32>
    %182 = arith.mulf %179, %181 : vector<16x512xf32>
    %c8_119 = arith.constant 8 : index
    %c0_120 = arith.constant 0 : index
    %c0_121 = arith.constant 0 : index
    %183 = vector.load %arg8[%c8_119, %c0_120, %c0_121] : memref<9x8x16xbf16, #tpu.memory_space<vmem>>, vector<1x8x16xbf16>
    %184 = vector.shape_cast %183 : vector<1x8x16xbf16> to vector<8x16xbf16>
    %185 = arith.truncf %182 : vector<16x512xf32> to vector<16x512xbf16>
    %cst_122 = arith.constant dense<0.000000e+00> : vector<8x512xf32>
    %186 = tpu.matmul %184, %185, %cst_122 {dimension_numbers = #tpu.dot_dimension_numbers<[1], [0], [0], [1], [0, 0, 1, 1], [], []>} : vector<8x16xbf16>, vector<16x512xbf16>, vector<8x512xf32> -> vector<8x512xf32>
    %187 = arith.addf %178, %186 : vector<8x512xf32>
    %c0_123 = arith.constant 0 : index
    %c16 = arith.constant 16 : index
    %c0_124 = arith.constant 0 : index
    %188 = vector.load %arg12[%c0_123, %c16, %c0_124] : memref<1x32x512xf32, #tpu.memory_space<vmem>>, vector<1x8x512xf32>
    %189 = vector.shape_cast %188 : vector<1x8x512xf32> to vector<8x512xf32>
    %190 = vector.shape_cast %187 : vector<8x512xf32> to vector<1x8x512xf32>
    tpu.vector_store %arg12[%c0_123, %c16, %c0_124], %190 {strides = array<i32>} : memref<1x32x512xf32, #tpu.memory_space<vmem>>, vector<1x8x512xf32>,
    %c0_125 = arith.constant 0 : index
    %c0_126 = arith.constant 0 : index
    %c0_127 = arith.constant 0 : index
    %191 = vector.load %arg12[%c0_125, %c0_126, %c0_127] : memref<1x32x512xf32, #tpu.memory_space<vmem>>, vector<1x24x512xf32>
    %192 = vector.shape_cast %191 : vector<1x24x512xf32> to vector<24x512xf32>
    %c0_128 = arith.constant 0 : index
    %c0_129 = arith.constant 0 : index
    %193 = vector.load %arg9[%c0_128, %c0_129] : memref<24x1xf32, #tpu.memory_space<vmem>>, vector<24x1xf32>
    %194 = vector.broadcast %193 : vector<24x1xf32> to vector<24x512xf32>
    %195 = arith.mulf %192, %194 : vector<24x512xf32>
    %c0_130 = arith.constant 0 : index
    %c0_131 = arith.constant 0 : index
    %196 = vector.load %arg10[%c0_130, %c0_131] : memref<24x1xf32, #tpu.memory_space<vmem>>, vector<24x1xf32>
    %197 = vector.broadcast %196 : vector<24x1xf32> to vector<24x512xf32>
    %198 = arith.addf %195, %197 : vector<24x512xf32>
    %cst_132 = arith.constant 0.000000e+00 : f32
    %199 = vector.broadcast %cst_132 : f32 to vector<24x512xf32>
    %200 = arith.maximumf %198, %199 : vector<24x512xf32>
    %cst_133 = arith.constant 0.000000e+00 : f32
    %201 = vector.broadcast %cst_133 : f32 to vector<24x128xf32>
    %202 = tpu.concatenate %201, %200, %201 in 1 : vector<24x128xf32>, vector<24x512xf32>, vector<24x128xf32> -> vector<24x768xf32>
    %cst_134 = arith.constant 0.000000e+00 : f32
    %203 = vector.broadcast %cst_134 : f32 to vector<8x512xf32>
    %204 = vector.extract_strided_slice %202 {offsets = [0, 111], sizes = [24, 512], strides = [1, 1]} : vector<24x768xf32> to vector<24x512xf32>
    %c0_135 = arith.constant 0 : index
    %c0_136 = arith.constant 0 : index
    %205 = vector.load %arg2[%c0_135, %c0_136] : memref<9x512xf32, #tpu.memory_space<vmem>>, vector<1x512xf32>
    %206 = vector.broadcast %205 : vector<1x512xf32> to vector<24x512xf32>
    %207 = arith.mulf %204, %206 : vector<24x512xf32>
    %c0_137 = arith.constant 0 : index
    %c0_138 = arith.constant 0 : index
    %c0_139 = arith.constant 0 : index
    %208 = vector.load %arg11[%c0_137, %c0_138, %c0_139] : memref<9x8x24xbf16, #tpu.memory_space<vmem>>, vector<1x8x24xbf16>
    %209 = vector.shape_cast %208 : vector<1x8x24xbf16> to vector<8x24xbf16>
    %210 = arith.truncf %207 : vector<24x512xf32> to vector<24x512xbf16>
    %cst_140 = arith.constant dense<0.000000e+00> : vector<8x512xf32>
    %211 = tpu.matmul %209, %210, %cst_140 {dimension_numbers = #tpu.dot_dimension_numbers<[1], [0], [0], [1], [0, 0, 1, 1], [], []>} : vector<8x24xbf16>, vector<24x512xbf16>, vector<8x512xf32> -> vector<8x512xf32>
    %212 = arith.addf %203, %211 : vector<8x512xf32>
    %213 = vector.extract_strided_slice %202 {offsets = [0, 112], sizes = [24, 512], strides = [1, 1]} : vector<24x768xf32> to vector<24x512xf32>
    %c1_141 = arith.constant 1 : index
    %c0_142 = arith.constant 0 : index
    %214 = vector.load %arg2[%c1_141, %c0_142] : memref<9x512xf32, #tpu.memory_space<vmem>>, vector<1x512xf32>
    %215 = vector.broadcast %214 : vector<1x512xf32> to vector<24x512xf32>
    %216 = arith.mulf %213, %215 : vector<24x512xf32>
    %c1_143 = arith.constant 1 : index
    %c0_144 = arith.constant 0 : index
    %c0_145 = arith.constant 0 : index
    %217 = vector.load %arg11[%c1_143, %c0_144, %c0_145] : memref<9x8x24xbf16, #tpu.memory_space<vmem>>, vector<1x8x24xbf16>
    %218 = vector.shape_cast %217 : vector<1x8x24xbf16> to vector<8x24xbf16>
    %219 = arith.truncf %216 : vector<24x512xf32> to vector<24x512xbf16>
    %cst_146 = arith.constant dense<0.000000e+00> : vector<8x512xf32>
    %220 = tpu.matmul %218, %219, %cst_146 {dimension_numbers = #tpu.dot_dimension_numbers<[1], [0], [0], [1], [0, 0, 1, 1], [], []>} : vector<8x24xbf16>, vector<24x512xbf16>, vector<8x512xf32> -> vector<8x512xf32>
    %221 = arith.addf %212, %220 : vector<8x512xf32>
    %222 = vector.extract_strided_slice %202 {offsets = [0, 113], sizes = [24, 512], strides = [1, 1]} : vector<24x768xf32> to vector<24x512xf32>
    %c2_147 = arith.constant 2 : index
    %c0_148 = arith.constant 0 : index
    %223 = vector.load %arg2[%c2_147, %c0_148] : memref<9x512xf32, #tpu.memory_space<vmem>>, vector<1x512xf32>
    %224 = vector.broadcast %223 : vector<1x512xf32> to vector<24x512xf32>
    %225 = arith.mulf %222, %224 : vector<24x512xf32>
    %c2_149 = arith.constant 2 : index
    %c0_150 = arith.constant 0 : index
    %c0_151 = arith.constant 0 : index
    %226 = vector.load %arg11[%c2_149, %c0_150, %c0_151] : memref<9x8x24xbf16, #tpu.memory_space<vmem>>, vector<1x8x24xbf16>
    %227 = vector.shape_cast %226 : vector<1x8x24xbf16> to vector<8x24xbf16>
    %228 = arith.truncf %225 : vector<24x512xf32> to vector<24x512xbf16>
    %cst_152 = arith.constant dense<0.000000e+00> : vector<8x512xf32>
    %229 = tpu.matmul %227, %228, %cst_152 {dimension_numbers = #tpu.dot_dimension_numbers<[1], [0], [0], [1], [0, 0, 1, 1], [], []>} : vector<8x24xbf16>, vector<24x512xbf16>, vector<8x512xf32> -> vector<8x512xf32>
    %230 = arith.addf %221, %229 : vector<8x512xf32>
    %231 = vector.extract_strided_slice %202 {offsets = [0, 127], sizes = [24, 512], strides = [1, 1]} : vector<24x768xf32> to vector<24x512xf32>
    %c3_153 = arith.constant 3 : index
    %c0_154 = arith.constant 0 : index
    %232 = vector.load %arg2[%c3_153, %c0_154] : memref<9x512xf32, #tpu.memory_space<vmem>>, vector<1x512xf32>
    %233 = vector.broadcast %232 : vector<1x512xf32> to vector<24x512xf32>
    %234 = arith.mulf %231, %233 : vector<24x512xf32>
    %c3_155 = arith.constant 3 : index
    %c0_156 = arith.constant 0 : index
    %c0_157 = arith.constant 0 : index
    %235 = vector.load %arg11[%c3_155, %c0_156, %c0_157] : memref<9x8x24xbf16, #tpu.memory_space<vmem>>, vector<1x8x24xbf16>
    %236 = vector.shape_cast %235 : vector<1x8x24xbf16> to vector<8x24xbf16>
    %237 = arith.truncf %234 : vector<24x512xf32> to vector<24x512xbf16>
    %cst_158 = arith.constant dense<0.000000e+00> : vector<8x512xf32>
    %238 = tpu.matmul %236, %237, %cst_158 {dimension_numbers = #tpu.dot_dimension_numbers<[1], [0], [0], [1], [0, 0, 1, 1], [], []>} : vector<8x24xbf16>, vector<24x512xbf16>, vector<8x512xf32> -> vector<8x512xf32>
    %239 = arith.addf %230, %238 : vector<8x512xf32>
    %c4_159 = arith.constant 4 : index
    %c0_160 = arith.constant 0 : index
    %c0_161 = arith.constant 0 : index
    %240 = vector.load %arg11[%c4_159, %c0_160, %c0_161] : memref<9x8x24xbf16, #tpu.memory_space<vmem>>, vector<1x8x24xbf16>
    %241 = vector.shape_cast %240 : vector<1x8x24xbf16> to vector<8x24xbf16>
    %242 = arith.truncf %200 : vector<24x512xf32> to vector<24x512xbf16>
    %cst_162 = arith.constant dense<0.000000e+00> : vector<8x512xf32>
    %243 = tpu.matmul %241, %242, %cst_162 {dimension_numbers = #tpu.dot_dimension_numbers<[1], [0], [0], [1], [0, 0, 1, 1], [], []>} : vector<8x24xbf16>, vector<24x512xbf16>, vector<8x512xf32> -> vector<8x512xf32>
    %244 = arith.addf %239, %243 : vector<8x512xf32>
    %245 = vector.extract_strided_slice %202 {offsets = [0, 129], sizes = [24, 512], strides = [1, 1]} : vector<24x768xf32> to vector<24x512xf32>
    %c5_163 = arith.constant 5 : index
    %c0_164 = arith.constant 0 : index
    %246 = vector.load %arg2[%c5_163, %c0_164] : memref<9x512xf32, #tpu.memory_space<vmem>>, vector<1x512xf32>
    %247 = vector.broadcast %246 : vector<1x512xf32> to vector<24x512xf32>
    %248 = arith.mulf %245, %247 : vector<24x512xf32>
    %c5_165 = arith.constant 5 : index
    %c0_166 = arith.constant 0 : index
    %c0_167 = arith.constant 0 : index
    %249 = vector.load %arg11[%c5_165, %c0_166, %c0_167] : memref<9x8x24xbf16, #tpu.memory_space<vmem>>, vector<1x8x24xbf16>
    %250 = vector.shape_cast %249 : vector<1x8x24xbf16> to vector<8x24xbf16>
    %251 = arith.truncf %248 : vector<24x512xf32> to vector<24x512xbf16>
    %cst_168 = arith.constant dense<0.000000e+00> : vector<8x512xf32>
    %252 = tpu.matmul %250, %251, %cst_168 {dimension_numbers = #tpu.dot_dimension_numbers<[1], [0], [0], [1], [0, 0, 1, 1], [], []>} : vector<8x24xbf16>, vector<24x512xbf16>, vector<8x512xf32> -> vector<8x512xf32>
    %253 = arith.addf %244, %252 : vector<8x512xf32>
    %254 = vector.extract_strided_slice %202 {offsets = [0, 143], sizes = [24, 512], strides = [1, 1]} : vector<24x768xf32> to vector<24x512xf32>
    %c6_169 = arith.constant 6 : index
    %c0_170 = arith.constant 0 : index
    %255 = vector.load %arg2[%c6_169, %c0_170] : memref<9x512xf32, #tpu.memory_space<vmem>>, vector<1x512xf32>
    %256 = vector.broadcast %255 : vector<1x512xf32> to vector<24x512xf32>
    %257 = arith.mulf %254, %256 : vector<24x512xf32>
    %c6_171 = arith.constant 6 : index
    %c0_172 = arith.constant 0 : index
    %c0_173 = arith.constant 0 : index
    %258 = vector.load %arg11[%c6_171, %c0_172, %c0_173] : memref<9x8x24xbf16, #tpu.memory_space<vmem>>, vector<1x8x24xbf16>
    %259 = vector.shape_cast %258 : vector<1x8x24xbf16> to vector<8x24xbf16>
    %260 = arith.truncf %257 : vector<24x512xf32> to vector<24x512xbf16>
    %cst_174 = arith.constant dense<0.000000e+00> : vector<8x512xf32>
    %261 = tpu.matmul %259, %260, %cst_174 {dimension_numbers = #tpu.dot_dimension_numbers<[1], [0], [0], [1], [0, 0, 1, 1], [], []>} : vector<8x24xbf16>, vector<24x512xbf16>, vector<8x512xf32> -> vector<8x512xf32>
    %262 = arith.addf %253, %261 : vector<8x512xf32>
    %263 = vector.extract_strided_slice %202 {offsets = [0, 144], sizes = [24, 512], strides = [1, 1]} : vector<24x768xf32> to vector<24x512xf32>
    %c7_175 = arith.constant 7 : index
    %c0_176 = arith.constant 0 : index
    %264 = vector.load %arg2[%c7_175, %c0_176] : memref<9x512xf32, #tpu.memory_space<vmem>>, vector<1x512xf32>
    %265 = vector.broadcast %264 : vector<1x512xf32> to vector<24x512xf32>
    %266 = arith.mulf %263, %265 : vector<24x512xf32>
    %c7_177 = arith.constant 7 : index
    %c0_178 = arith.constant 0 : index
    %c0_179 = arith.constant 0 : index
    %267 = vector.load %arg11[%c7_177, %c0_178, %c0_179] : memref<9x8x24xbf16, #tpu.memory_space<vmem>>, vector<1x8x24xbf16>
    %268 = vector.shape_cast %267 : vector<1x8x24xbf16> to vector<8x24xbf16>
    %269 = arith.truncf %266 : vector<24x512xf32> to vector<24x512xbf16>
    %cst_180 = arith.constant dense<0.000000e+00> : vector<8x512xf32>
    %270 = tpu.matmul %268, %269, %cst_180 {dimension_numbers = #tpu.dot_dimension_numbers<[1], [0], [0], [1], [0, 0, 1, 1], [], []>} : vector<8x24xbf16>, vector<24x512xbf16>, vector<8x512xf32> -> vector<8x512xf32>
    %271 = arith.addf %262, %270 : vector<8x512xf32>
    %272 = vector.extract_strided_slice %202 {offsets = [0, 145], sizes = [24, 512], strides = [1, 1]} : vector<24x768xf32> to vector<24x512xf32>
    %c8_181 = arith.constant 8 : index
    %c0_182 = arith.constant 0 : index
    %273 = vector.load %arg2[%c8_181, %c0_182] : memref<9x512xf32, #tpu.memory_space<vmem>>, vector<1x512xf32>
    %274 = vector.broadcast %273 : vector<1x512xf32> to vector<24x512xf32>
    %275 = arith.mulf %272, %274 : vector<24x512xf32>
    %c8_183 = arith.constant 8 : index
    %c0_184 = arith.constant 0 : index
    %c0_185 = arith.constant 0 : index
    %276 = vector.load %arg11[%c8_183, %c0_184, %c0_185] : memref<9x8x24xbf16, #tpu.memory_space<vmem>>, vector<1x8x24xbf16>
    %277 = vector.shape_cast %276 : vector<1x8x24xbf16> to vector<8x24xbf16>
    %278 = arith.truncf %275 : vector<24x512xf32> to vector<24x512xbf16>
    %cst_186 = arith.constant dense<0.000000e+00> : vector<8x512xf32>
    %279 = tpu.matmul %277, %278, %cst_186 {dimension_numbers = #tpu.dot_dimension_numbers<[1], [0], [0], [1], [0, 0, 1, 1], [], []>} : vector<8x24xbf16>, vector<24x512xbf16>, vector<8x512xf32> -> vector<8x512xf32>
    %280 = arith.addf %271, %279 : vector<8x512xf32>
    %c0_187 = arith.constant 0 : index
    %c24 = arith.constant 24 : index
    %c0_188 = arith.constant 0 : index
    %281 = vector.load %arg12[%c0_187, %c24, %c0_188] : memref<1x32x512xf32, #tpu.memory_space<vmem>>, vector<1x8x512xf32>
    %282 = vector.shape_cast %281 : vector<1x8x512xf32> to vector<8x512xf32>
    %283 = vector.shape_cast %280 : vector<8x512xf32> to vector<1x8x512xf32>
    tpu.vector_store %arg12[%c0_187, %c24, %c0_188], %283 {strides = array<i32>} : memref<1x32x512xf32, #tpu.memory_space<vmem>>, vector<1x8x512xf32>,
    return
  }
  func.func @transform_0(%arg0: i32) -> (i32, i32, i32) {
    %c0_i32 = arith.constant 0 : i32
    %c0_i32_0 = arith.constant 0 : i32
    %c0_i32_1 = arith.constant 0 : i32
    return %arg0, %c0_i32, %c0_i32_0 : i32, i32, i32
  }
  func.func @transform_1(%arg0: i32) -> (i32, i32) {
    %c0_i32 = arith.constant 0 : i32
    %c0_i32_0 = arith.constant 0 : i32
    %c0_i32_1 = arith.constant 0 : i32
    return %c0_i32, %c0_i32_0 : i32, i32
  }
  func.func @transform_2(%arg0: i32) -> (i32, i32) {
    %c0_i32 = arith.constant 0 : i32
    %c0_i32_0 = arith.constant 0 : i32
    %c0_i32_1 = arith.constant 0 : i32
    return %c0_i32, %c0_i32_0 : i32, i32
  }
  func.func @transform_3(%arg0: i32) -> (i32, i32) {
    %c0_i32 = arith.constant 0 : i32
    %c0_i32_0 = arith.constant 0 : i32
    %c0_i32_1 = arith.constant 0 : i32
    return %c0_i32, %c0_i32_0 : i32, i32
  }
  func.func @transform_4(%arg0: i32) -> (i32, i32, i32) {
    %c0_i32 = arith.constant 0 : i32
    %c0_i32_0 = arith.constant 0 : i32
    %c0_i32_1 = arith.constant 0 : i32
    %c0_i32_2 = arith.constant 0 : i32
    return %c0_i32, %c0_i32_0, %c0_i32_1 : i32, i32, i32
  }
  func.func @transform_5(%arg0: i32) -> (i32, i32) {
    %c0_i32 = arith.constant 0 : i32
    %c0_i32_0 = arith.constant 0 : i32
    %c0_i32_1 = arith.constant 0 : i32
    return %c0_i32, %c0_i32_0 : i32, i32
  }
  func.func @transform_6(%arg0: i32) -> (i32, i32) {
    %c0_i32 = arith.constant 0 : i32
    %c0_i32_0 = arith.constant 0 : i32
    %c0_i32_1 = arith.constant 0 : i32
    return %c0_i32, %c0_i32_0 : i32, i32
  }
  func.func @transform_7(%arg0: i32) -> (i32, i32, i32) {
    %c0_i32 = arith.constant 0 : i32
    %c0_i32_0 = arith.constant 0 : i32
    %c0_i32_1 = arith.constant 0 : i32
    %c0_i32_2 = arith.constant 0 : i32
    return %c0_i32, %c0_i32_0, %c0_i32_1 : i32, i32, i32
  }
  func.func @transform_8(%arg0: i32) -> (i32, i32) {
    %c0_i32 = arith.constant 0 : i32
    %c0_i32_0 = arith.constant 0 : i32
    %c0_i32_1 = arith.constant 0 : i32
    return %c0_i32, %c0_i32_0 : i32, i32
  }
  func.func @transform_9(%arg0: i32) -> (i32, i32) {
    %c0_i32 = arith.constant 0 : i32
    %c0_i32_0 = arith.constant 0 : i32
    %c0_i32_1 = arith.constant 0 : i32
    return %c0_i32, %c0_i32_0 : i32, i32
  }
  func.func @transform_10(%arg0: i32) -> (i32, i32, i32) {
    %c0_i32 = arith.constant 0 : i32
    %c0_i32_0 = arith.constant 0 : i32
    %c0_i32_1 = arith.constant 0 : i32
    %c0_i32_2 = arith.constant 0 : i32
    return %c0_i32, %c0_i32_0, %c0_i32_1 : i32, i32, i32
  }
  func.func @transform_11(%arg0: i32) -> (i32, i32, i32) {
    %c0_i32 = arith.constant 0 : i32
    %c0_i32_0 = arith.constant 0 : i32
    %c0_i32_1 = arith.constant 0 : i32
    return %arg0, %c0_i32, %c0_i32_0 : i32, i32, i32
  }
}

</mosaic_0001>

<llo_original>
// kernel: tpu_custom_call.1
$region0: #{tpu_custom_call.1}
  #allocation0 [shape = 'u32[]', space=smem, size = 0x4, offset = 0x4, fixed_abs, tag = 'smem constant byte address 0x4 - core index']
  #allocation1 [shape = 'u32[144,128]{1,0:T(1,128)}', space=vmem, size = 0x12000, scoped, tag = 'internal scratch']
  %s0 = inlined_call_operand.hbm [shape: f32[1,8,512], index: 0, kind: input, shape index: {}]
  %s1 = inlined_call_operand.vmem [shape: f32[9,512], index: 1, kind: input, shape index: {}]
  %s2 = inlined_call_operand.vmem [shape: f32[8,1], index: 2, kind: input, shape index: {}]
  %s3 = inlined_call_operand.vmem [shape: f32[8,1], index: 3, kind: input, shape index: {}]
  %s4 = inlined_call_operand.vmem [shape: bf16[9,8,8], index: 4, kind: input, shape index: {}]
  %s5 = inlined_call_operand.vmem [shape: f32[16,1], index: 5, kind: input, shape index: {}]
  %s6 = inlined_call_operand.vmem [shape: f32[16,1], index: 6, kind: input, shape index: {}]
  %s7 = inlined_call_operand.vmem [shape: bf16[9,8,16], index: 7, kind: input, shape index: {}]
  %s8 = inlined_call_operand.vmem [shape: f32[24,1], index: 8, kind: input, shape index: {}]
  %s9 = inlined_call_operand.vmem [shape: f32[24,1], index: 9, kind: input, shape index: {}]
  %s10 = inlined_call_operand.vmem [shape: bf16[9,8,24], index: 10, kind: input, shape index: {}]
  %s11 = inlined_call_operand.hbm [shape: f32[1,32,512], index: 11, kind: output, shape index: {}]
  %s12 = sld [smem:[#allocation0]]
  $region58: #{tpu_custom_call.1} parent=0
    _
  %s14 = ssub.s32 1, %s12
  %s15 = scalar_select 0, %s14, %s12
  $region1: #{tpu_custom_call.1} parent=0
    #allocation2 [shape = 'u8[16384]{0}', space=vmem, size = 0x4000, scoped, tag = 'input window, operand 0, single buffered']
    #allocation3 [shape = 's32[1]{0}', space=sflag, size = 0x4, scoped, tag = 'scoped memory for tpu_custom_call.1']
    #allocation4 [shape = 's32[1]{0}', space=sflag, size = 0x4, scoped, tag = 'scoped memory for tpu_custom_call.1']
    #allocation5 [shape = 'u8[65536]{0}', space=vmem, size = 0x10000, scoped, tag = 'output window, operand 0, single buffered']
    %16 = vsyncpa [#allocation3], 0
    %17 = vsyncpa [#allocation4], 0
    // Predicated region
    $region2: #{tpu_custom_call.1} parent=1 // pred_check
      _
    $region3: #{tpu_custom_call.1} parent=1 // pred_check_branch
      %19 = sbr.rel (0) target = $region5
    $region4: #{tpu_custom_call.1} parent=1 // pred_region
      %s21 = ssub.s32 512, 512
      %22 = vsyncadd [#allocation3], %s21
      %s24 = sshll.u32 [#allocation2], 4
      %s25 = int_to_ptr.vmem [resolvable:$true] %s24
      %27 = dma.hbm_to_vmem [thread:$0]  %s0, 512, %s25, [#allocation3]
    $region5: #{tpu_custom_call.1} parent=1 // pred_fallthru
      _
    // Predicated region
    $region6: #{tpu_custom_call.1} parent=1 // pred_check
      _
    $region7: #{tpu_custom_call.1} parent=1 // pred_check_branch
      %29 = sbr.rel (0) target = $region9
    $region8: #{tpu_custom_call.1} parent=1 // pred_region
      _
    $region9: #{tpu_custom_call.1} parent=1 // pred_fallthru
      _
    // Predicated region
    $region10: #{tpu_custom_call.1} parent=1 // pred_check
      _
    $region11: #{tpu_custom_call.1} parent=1 // pred_check_branch
      %31 = sbr.rel (0) target = $region13
    $region12: #{tpu_custom_call.1} parent=1 // pred_region
      _
    $region13: #{tpu_custom_call.1} parent=1 // pred_fallthru
      _
    // Predicated region
    $region14: #{tpu_custom_call.1} parent=1 // pred_check
      _
    $region15: #{tpu_custom_call.1} parent=1 // pred_check_branch
      %33 = sbr.rel (0) target = $region17
    $region16: #{tpu_custom_call.1} parent=1 // pred_region
      _
    $region17: #{tpu_custom_call.1} parent=1 // pred_fallthru
      _
    // Predicated region
    $region18: #{tpu_custom_call.1} parent=1 // pred_check
      _
    $region19: #{tpu_custom_call.1} parent=1 // pred_check_branch
      %35 = sbr.rel (0) target = $region21
    $region20: #{tpu_custom_call.1} parent=1 // pred_region
      _
    $region21: #{tpu_custom_call.1} parent=1 // pred_fallthru
      _
    // Predicated region
    $region22: #{tpu_custom_call.1} parent=1 // pred_check
      _
    $region23: #{tpu_custom_call.1} parent=1 // pred_check_branch
      %37 = sbr.rel (0) target = $region25
    $region24: #{tpu_custom_call.1} parent=1 // pred_region
      _
    $region25: #{tpu_custom_call.1} parent=1 // pred_fallthru
      _
    // Predicated region
    $region26: #{tpu_custom_call.1} parent=1 // pred_check
      _
    $region27: #{tpu_custom_call.1} parent=1 // pred_check_branch
      %39 = sbr.rel (0) target = $region29
    $region28: #{tpu_custom_call.1} parent=1 // pred_region
      _
    $region29: #{tpu_custom_call.1} parent=1 // pred_fallthru
      _
    // Predicated region
    $region30: #{tpu_custom_call.1} parent=1 // pred_check
      _
    $region31: #{tpu_custom_call.1} parent=1 // pred_check_branch
      %41 = sbr.rel (0) target = $region33
    $region32: #{tpu_custom_call.1} parent=1 // pred_region
      _
    $region33: #{tpu_custom_call.1} parent=1 // pred_fallthru
      _
    // Predicated region
    $region34: #{tpu_custom_call.1} parent=1 // pred_check
      _
    $region35: #{tpu_custom_call.1} parent=1 // pred_check_branch
      %43 = sbr.rel (0) target = $region37
    $region36: #{tpu_custom_call.1} parent=1 // pred_region
      _
    $region37: #{tpu_custom_call.1} parent=1 // pred_fallthru
      _
    // Predicated region
    $region38: #{tpu_custom_call.1} parent=1 // pred_check
      _
    $region39: #{tpu_custom_call.1} parent=1 // pred_check_branch
      %45 = sbr.rel (0) target = $region41
    $region40: #{tpu_custom_call.1} parent=1 // pred_region
      _
    $region41: #{tpu_custom_call.1} parent=1 // pred_fallthru
      _
    // Predicated region
    $region42: #{tpu_custom_call.1} parent=1 // pred_check
      _
    $region43: #{tpu_custom_call.1} parent=1 // pred_check_branch
      %47 = sbr.rel (0) target = $region45
    $region44: #{tpu_custom_call.1} parent=1 // pred_region
      _
    $region45: #{tpu_custom_call.1} parent=1 // pred_fallthru
      _
    // Predicated region
    $region46: #{tpu_custom_call.1} parent=1 // pred_check
      _
    $region47: #{tpu_custom_call.1} parent=1 // pred_check_branch
      %49 = sbr.rel (0) target = $region49
    $region48: #{tpu_custom_call.1} parent=1 // pred_region
      %50 = dma.done [#allocation3], 512
    $region49: #{tpu_custom_call.1} parent=1 // pred_fallthru
      _
    %v52 = vld [vmem:[#allocation2] sm:$0xff]
    %v53 = vld [vmem:[#allocation2 + $0x8] sm:$0xff]
    %v54 = vld [vmem:[#allocation2 + $0x10] sm:$0xff]
    %v55 = vld [vmem:[#allocation2 + $0x18] sm:$0xff]
    %56 = vst [vmem:[#allocation5] sm:$0xff] %v52
    %57 = vst [vmem:[#allocation5 + $0x8] sm:$0xff] %v53
    %58 = vst [vmem:[#allocation5 + $0x10] sm:$0xff] %v54
    %59 = vst [vmem:[#allocation5 + $0x18] sm:$0xff] %v55
    %v60 = vld [vmem:[#allocation5] sm:$0xff]
    %v61 = vld [vmem:[#allocation5 + $0x8] sm:$0xff]
    %v62 = vld [vmem:[#allocation5 + $0x10] sm:$0xff]
    %v63 = vld [vmem:[#allocation5 + $0x18] sm:$0xff]
    %v64 = vld [vmem:[%s2] sm:$0xff]
    %66 = vset.pattern.permute.xlu0 0
    %67 = vperm.xlu0 %66, %v64
    %v68 = vpop.permute.xlu0 %67
    %v70 = vmul.f32 %v60, %v68
    %v71 = vmul.f32 %v61, %v68
    %v72 = vmul.f32 %v62, %v68
    %v73 = vmul.f32 %v63, %v68
    %v74 = vld [vmem:[%s3] sm:$0xff]
    %76 = vset.pattern.permute.xlu0 0
    %77 = vperm.xlu0 %76, %v74
    %v78 = vpop.permute.xlu0 %77
    %v80 = vadd.f32 %v70, %v78
    %v81 = vadd.f32 %v71, %v78
    %v82 = vadd.f32 %v72, %v78
    %v83 = vadd.f32 %v73, %v78
    %v84 = vmax.f32 %v80, 0.0
    %v85 = vmax.f32 %v81, 0.0
    %v86 = vmax.f32 %v82, 0.0
    %v87 = vmax.f32 %v83, 0.0
    %v88 = vld [vmem:[%s1] ss:$8 sm:$0xf]
    %v90 = vlaneseq
    %v91 = vshrl.u32 %v90, 7
    %v92 = vsub.s32 0, %v91
    %v93 = vrot.slane %v88, %v92
    %v94 = vlaneseq
    %v95 = vshrl.u32 %v94, 7
    %v96 = vsub.s32 1, %v95
    %v97 = vrot.slane %v88, %v96
    %v98 = vlaneseq
    %v99 = vshrl.u32 %v98, 7
    %v100 = vsub.s32 2, %v99
    %v101 = vrot.slane %v88, %v100
    %v102 = vlaneseq
    %v103 = vshrl.u32 %v102, 7
    %v104 = vsub.s32 3, %v103
    %v105 = vrot.slane %v88, %v104
    %106 = vrot.lane.b32.xlu0 %v93, 111
    %v107 = vpop.permute.xlu0 %106
    %108 = vrot.lane.b32.xlu0 %v97, 111
    %v109 = vpop.permute.xlu0 %108
    %110 = vrot.lane.b32.xlu0 %v101, 111
    %v111 = vpop.permute.xlu0 %110
    %112 = vrot.lane.b32.xlu0 %v105, 111
    %v113 = vpop.permute.xlu0 %112
    %vm114 = vcmask 908288
    %v115 = vsel %vm114, %v107, %v109
    %v116 = vsel %vm114, %v109, %v111
    %v117 = vsel %vm114, %v111, %v113
    %v123 = vmul.f32 %v107, 0.0
    %v124 = vmul.f32 %v84, %v115
    %v125 = vmul.f32 %v85, %v116
    %v126 = vmul.f32 %v86, %v117
    %v127 = vmul.f32 %v87, %v113
    %v128 = vld [vmem:[%s4] sm:$0xf]
    %v129 = vpack.c.bf16 %v123, %v123
    %v130 = vpack.c.bf16 %v124, %v124
    %v131 = vpack.c.bf16 %v125, %v125
    %v132 = vpack.c.bf16 %v126, %v126
    %v133 = vpack.c.bf16 %v127, %v127
    %s134 = scalar_lea.vmem %s1, 1
    %v135 = vld [vmem:[%s134] ss:$8 sm:$0xf]
    %v137 = vlaneseq
    %v138 = vshrl.u32 %v137, 7
    %v139 = vsub.s32 0, %v138
    %v140 = vrot.slane %v135, %v139
    %v141 = vlaneseq
    %v142 = vshrl.u32 %v141, 7
    %v143 = vsub.s32 1, %v142
    %v144 = vrot.slane %v135, %v143
    %v145 = vlaneseq
    %v146 = vshrl.u32 %v145, 7
    %v147 = vsub.s32 2, %v146
    %v148 = vrot.slane %v135, %v147
    %v149 = vlaneseq
    %v150 = vshrl.u32 %v149, 7
    %v151 = vsub.s32 3, %v150
    %v152 = vrot.slane %v135, %v151
    %153 = vrot.lane.b32.xlu0 %v140, 112
    %v154 = vpop.permute.xlu0 %153
    %155 = vrot.lane.b32.xlu0 %v144, 112
    %v156 = vpop.permute.xlu0 %155
    %157 = vrot.lane.b32.xlu0 %v148, 112
    %v158 = vpop.permute.xlu0 %157
    %159 = vrot.lane.b32.xlu0 %v152, 112
    %v160 = vpop.permute.xlu0 %159
    %vm161 = vcmask 916480
    %v162 = vsel %vm161, %v154, %v156
    %v163 = vsel %vm161, %v156, %v158
    %v164 = vsel %vm161, %v158, %v160
    %v170 = vmul.f32 %v154, 0.0
    %v171 = vmul.f32 %v84, %v162
    %v172 = vmul.f32 %v85, %v163
    %v173 = vmul.f32 %v86, %v164
    %v174 = vmul.f32 %v87, %v160
    %s175 = scalar_lea.vmem %s4, 4
    %v176 = vld [vmem:[%s175] sm:$0xf]
    %v177 = vpack.c.bf16 %v170, %v170
    %v178 = vpack.c.bf16 %v171, %v171
    %v179 = vpack.c.bf16 %v172, %v172
    %v180 = vpack.c.bf16 %v173, %v173
    %v181 = vpack.c.bf16 %v174, %v174
    %187 = vrot.lane.b32.xlu0 %v177, 16
    %v188 = vpop.permute.xlu0 %187
    %189 = vrot.lane.b32.xlu0 %v178, 16
    %v190 = vpop.permute.xlu0 %189
    %191 = vrot.lane.b32.xlu0 %v179, 16
    %v192 = vpop.permute.xlu0 %191
    %193 = vrot.lane.b32.xlu0 %v180, 16
    %v194 = vpop.permute.xlu0 %193
    %195 = vrot.lane.b32.xlu0 %v181, 16
    %v196 = vpop.permute.xlu0 %195
    %vm197 = vcmask 130048
    %v198 = vsel %vm197, %v188, %v190
    %v199 = vsel %vm197, %v190, %v192
    %v200 = vsel %vm197, %v192, %v194
    %v201 = vsel %vm197, %v194, %v196
    %vm202 = vcmask 64512
    %v204 = vsel %vm202, %v176, 0
    %vm206 = vcmask 1043456
    %v208 = vsel %vm206, %v198, 0
    %v211 = vsel %vm206, %v199, 0
    %v214 = vsel %vm206, %v200, 0
    %v217 = vsel %vm206, %v201, 0
    %219 = vmatprep.subr.bf16.mxu0 %v211
    %220 = vmatpush1.bf16.msra.mxu0 %v208
    %221 = vmatprep.subr.bf16.mxu0 0
    %222 = vmatpush1.bf16.msra.mxu0 0
    %223 = vmatprep.subr.bf16.mxu0 0
    %224 = vmatpush1.bf16.msra.mxu0 0
    %225 = vmatprep.subr.bf16.mxu0 0
    %226 = vmatpush1.bf16.msra.mxu0 0
    %227 = vmatprep.subr.bf16.mxu0 0
    %228 = vmatpush1.bf16.msra.mxu0 0
    %229 = vmatprep.subr.bf16.mxu0 0
    %230 = vmatpush1.bf16.msra.mxu0 0
    %231 = vmatprep.subr.bf16.mxu0 0
    %232 = vmatpush1.bf16.msra.mxu0 0
    %233 = vmatprep.subr.bf16.mxu0 0
    %234 = vmatpush1.bf16.msra.mxu0 0
    %235 = vmatprep.subr.bf16.mxu0 0
    %236 = vmatpush1.bf16.msra.mxu0 0
    %237 = vmatprep.subr.bf16.mxu0 0
    %238 = vmatpush1.bf16.msra.mxu0 0
    %239 = vmatprep.subr.bf16.mxu0 0
    %240 = vmatpush1.bf16.msra.mxu0 0
    %241 = vmatprep.subr.bf16.mxu0 0
    %242 = vmatpush1.bf16.msra.mxu0 0
    %243 = vmatprep.subr.bf16.mxu0 0
    %244 = vmatpush1.bf16.msra.mxu0 0
    %245 = vmatprep.subr.bf16.mxu0 0
    %246 = vmatpush1.bf16.msra.mxu0 0
    %247 = vmatprep.subr.bf16.mxu0 0
    %248 = vmatpush1.bf16.msra.mxu0 0
    %249 = vmatprep.subr.bf16.mxu0 0
    %250 = vmatpush1.bf16.msra.mxu0 0
    %251 = vmatprep.mubr.bf16.mxu0 0
    %252 = vmatmul.mubr.bf16.gmra.mrb[0].mxu0 %v204
    %v253 = vpop.f32.mrb[0].mxu0
    %v254 = vadd.f32 0.0, %v253
    %v255 = vpop.f32.mrb[0].mxu0
    %v256 = vadd.f32 0.0, %v255
    %v257 = vpop.f32.mrb[0].mxu0
    %v258 = vpop.f32.mrb[0].mxu0
    %259 = vdwg.mxu0
    %260 = vmatprep.subr.bf16.mxu0 %v217
    %261 = vmatpush1.bf16.msra.mxu0 %v214
    %262 = vmatprep.subr.bf16.mxu0 0
    %263 = vmatpush1.bf16.msra.mxu0 0
    %264 = vmatprep.subr.bf16.mxu0 0
    %265 = vmatpush1.bf16.msra.mxu0 0
    %266 = vmatprep.subr.bf16.mxu0 0
    %267 = vmatpush1.bf16.msra.mxu0 0
    %268 = vmatprep.subr.bf16.mxu0 0
    %269 = vmatpush1.bf16.msra.mxu0 0
    %270 = vmatprep.subr.bf16.mxu0 0
    %271 = vmatpush1.bf16.msra.mxu0 0
    %272 = vmatprep.subr.bf16.mxu0 0
    %273 = vmatpush1.bf16.msra.mxu0 0
    %274 = vmatprep.subr.bf16.mxu0 0
    %275 = vmatpush1.bf16.msra.mxu0 0
    %276 = vmatprep.subr.bf16.mxu0 0
    %277 = vmatpush1.bf16.msra.mxu0 0
    %278 = vmatprep.subr.bf16.mxu0 0
    %279 = vmatpush1.bf16.msra.mxu0 0
    %280 = vmatprep.subr.bf16.mxu0 0
    %281 = vmatpush1.bf16.msra.mxu0 0
    %282 = vmatprep.subr.bf16.mxu0 0
    %283 = vmatpush1.bf16.msra.mxu0 0
    %284 = vmatprep.subr.bf16.mxu0 0
    %285 = vmatpush1.bf16.msra.mxu0 0
    %286 = vmatprep.subr.bf16.mxu0 0
    %287 = vmatpush1.bf16.msra.mxu0 0
    %288 = vmatprep.subr.bf16.mxu0 0
    %289 = vmatpush1.bf16.msra.mxu0 0
    %290 = vmatprep.subr.bf16.mxu0 0
    %291 = vmatpush1.bf16.msra.mxu0 0
    %292 = vmatprep.mubr.bf16.mxu0 0
    %293 = vmatmul.mubr.bf16.gmra.mrb[0].mxu0 %v204
    %v294 = vpop.f32.mrb[0].mxu0
    %v295 = vadd.f32 0.0, %v294
    %v296 = vpop.f32.mrb[0].mxu0
    %v297 = vadd.f32 0.0, %v296
    %v298 = vpop.f32.mrb[0].mxu0
    %v299 = vpop.f32.mrb[0].mxu0
    %300 = vdwg.mxu0
    %306 = vrot.lane.b32.xlu0 %v129, 17
    %v307 = vpop.permute.xlu0 %306
    %308 = vrot.lane.b32.xlu0 %v130, 17
    %v309 = vpop.permute.xlu0 %308
    %310 = vrot.lane.b32.xlu0 %v131, 17
    %v311 = vpop.permute.xlu0 %310
    %312 = vrot.lane.b32.xlu0 %v132, 17
    %v313 = vpop.permute.xlu0 %312
    %314 = vrot.lane.b32.xlu0 %v133, 17
    %v315 = vpop.permute.xlu0 %314
    %vm316 = vcmask 138240
    %v317 = vsel %vm316, %v307, %v309
    %v318 = vsel %vm316, %v309, %v311
    %v319 = vsel %vm316, %v311, %v313
    %v320 = vsel %vm316, %v313, %v315
    %v322 = vsel %vm202, %v128, 0
    %v325 = vsel %vm206, %v317, 0
    %v328 = vsel %vm206, %v318, 0
    %v331 = vsel %vm206, %v319, 0
    %v334 = vsel %vm206, %v320, 0
    %336 = vmatprep.subr.bf16.mxu0 %v328
    %337 = vmatpush1.bf16.msra.mxu0 %v325
    %338 = vmatprep.subr.bf16.mxu0 0
    %339 = vmatpush1.bf16.msra.mxu0 0
    %340 = vmatprep.subr.bf16.mxu0 0
    %341 = vmatpush1.bf16.msra.mxu0 0
    %342 = vmatprep.subr.bf16.mxu0 0
    %343 = vmatpush1.bf16.msra.mxu0 0
    %344 = vmatprep.subr.bf16.mxu0 0
    %345 = vmatpush1.bf16.msra.mxu0 0
    %346 = vmatprep.subr.bf16.mxu0 0
    %347 = vmatpush1.bf16.msra.mxu0 0
    %348 = vmatprep.subr.bf16.mxu0 0
    %349 = vmatpush1.bf16.msra.mxu0 0
    %350 = vmatprep.subr.bf16.mxu0 0
    %351 = vmatpush1.bf16.msra.mxu0 0
    %352 = vmatprep.subr.bf16.mxu0 0
    %353 = vmatpush1.bf16.msra.mxu0 0
    %354 = vmatprep.subr.bf16.mxu0 0
    %355 = vmatpush1.bf16.msra.mxu0 0
    %356 = vmatprep.subr.bf16.mxu0 0
    %357 = vmatpush1.bf16.msra.mxu0 0
    %358 = vmatprep.subr.bf16.mxu0 0
    %359 = vmatpush1.bf16.msra.mxu0 0
    %360 = vmatprep.subr.bf16.mxu0 0
    %361 = vmatpush1.bf16.msra.mxu0 0
    %362 = vmatprep.subr.bf16.mxu0 0
    %363 = vmatpush1.bf16.msra.mxu0 0
    %364 = vmatprep.subr.bf16.mxu0 0
    %365 = vmatpush1.bf16.msra.mxu0 0
    %366 = vmatprep.subr.bf16.mxu0 0
    %367 = vmatpush1.bf16.msra.mxu0 0
    %368 = vmatprep.mubr.bf16.mxu0 0
    %369 = vmatmul.mubr.bf16.gmra.mrb[0].mxu0 %v322
    %v370 = vpop.f32.mrb[0].mxu0
    %v371 = vadd.f32 %v254, %v370
    %v372 = vpop.f32.mrb[0].mxu0
    %v373 = vadd.f32 %v256, %v372
    %v374 = vpop.f32.mrb[0].mxu0
    %v375 = vpop.f32.mrb[0].mxu0
    %376 = vdwg.mxu0
    %377 = vmatprep.subr.bf16.mxu0 %v334
    %378 = vmatpush1.bf16.msra.mxu0 %v331
    %379 = vmatprep.subr.bf16.mxu0 0
    %380 = vmatpush1.bf16.msra.mxu0 0
    %381 = vmatprep.subr.bf16.mxu0 0
    %382 = vmatpush1.bf16.msra.mxu0 0
    %383 = vmatprep.subr.bf16.mxu0 0
    %384 = vmatpush1.bf16.msra.mxu0 0
    %385 = vmatprep.subr.bf16.mxu0 0
    %386 = vmatpush1.bf16.msra.mxu0 0
    %387 = vmatprep.subr.bf16.mxu0 0
    %388 = vmatpush1.bf16.msra.mxu0 0
    %389 = vmatprep.subr.bf16.mxu0 0
    %390 = vmatpush1.bf16.msra.mxu0 0
    %391 = vmatprep.subr.bf16.mxu0 0
    %392 = vmatpush1.bf16.msra.mxu0 0
    %393 = vmatprep.subr.bf16.mxu0 0
    %394 = vmatpush1.bf16.msra.mxu0 0
    %395 = vmatprep.subr.bf16.mxu0 0
    %396 = vmatpush1.bf16.msra.mxu0 0
    %397 = vmatprep.subr.bf16.mxu0 0
    %398 = vmatpush1.bf16.msra.mxu0 0
    %399 = vmatprep.subr.bf16.mxu0 0
    %400 = vmatpush1.bf16.msra.mxu0 0
    %401 = vmatprep.subr.bf16.mxu0 0
    %402 = vmatpush1.bf16.msra.mxu0 0
    %403 = vmatprep.subr.bf16.mxu0 0
    %404 = vmatpush1.bf16.msra.mxu0 0
    %405 = vmatprep.subr.bf16.mxu0 0
    %406 = vmatpush1.bf16.msra.mxu0 0
    %407 = vmatprep.subr.bf16.mxu0 0
    %408 = vmatpush1.bf16.msra.mxu0 0
    %409 = vmatprep.mubr.bf16.mxu0 0
    %410 = vmatmul.mubr.bf16.gmra.mrb[0].mxu0 %v322
    %v411 = vpop.f32.mrb[0].mxu0
    %v412 = vadd.f32 %v295, %v411
    %v413 = vpop.f32.mrb[0].mxu0
    %v414 = vadd.f32 %v297, %v413
    %v415 = vpop.f32.mrb[0].mxu0
    %v416 = vpop.f32.mrb[0].mxu0
    %417 = vdwg.mxu0
    %s418 = scalar_lea.vmem %s1, 2
    %v419 = vld [vmem:[%s418] ss:$8 sm:$0xf]
    %v421 = vlaneseq
    %v422 = vshrl.u32 %v421, 7
    %v423 = vsub.s32 0, %v422
    %v424 = vrot.slane %v419, %v423
    %v425 = vlaneseq
    %v426 = vshrl.u32 %v425, 7
    %v427 = vsub.s32 1, %v426
    %v428 = vrot.slane %v419, %v427
    %v429 = vlaneseq
    %v430 = vshrl.u32 %v429, 7
    %v431 = vsub.s32 2, %v430
    %v432 = vrot.slane %v419, %v431
    %v433 = vlaneseq
    %v434 = vshrl.u32 %v433, 7
    %v435 = vsub.s32 3, %v434
    %v436 = vrot.slane %v419, %v435
    %437 = vrot.lane.b32.xlu0 %v424, 113
    %v438 = vpop.permute.xlu0 %437
    %439 = vrot.lane.b32.xlu0 %v428, 113
    %v440 = vpop.permute.xlu0 %439
    %441 = vrot.lane.b32.xlu0 %v432, 113
    %v442 = vpop.permute.xlu0 %441
    %443 = vrot.lane.b32.xlu0 %v436, 113
    %v444 = vpop.permute.xlu0 %443
    %vm445 = vcmask 924672
    %v446 = vsel %vm445, %v438, %v440
    %v447 = vsel %vm445, %v440, %v442
    %v448 = vsel %vm445, %v442, %v444
    %v454 = vmul.f32 %v438, 0.0
    %v455 = vmul.f32 %v84, %v446
    %v456 = vmul.f32 %v85, %v447
    %v457 = vmul.f32 %v86, %v448
    %v458 = vmul.f32 %v87, %v444
    %s459 = scalar_lea.vmem %s4, 8
    %v460 = vld [vmem:[%s459] sm:$0xf]
    %v461 = vpack.c.bf16 %v454, %v454
    %v462 = vpack.c.bf16 %v455, %v455
    %v463 = vpack.c.bf16 %v456, %v456
    %v464 = vpack.c.bf16 %v457, %v457
    %v465 = vpack.c.bf16 %v458, %v458
    %471 = vrot.lane.b32.xlu0 %v461, 15
    %v472 = vpop.permute.xlu0 %471
    %473 = vrot.lane.b32.xlu0 %v462, 15
    %v474 = vpop.permute.xlu0 %473
    %475 = vrot.lane.b32.xlu0 %v463, 15
    %v476 = vpop.permute.xlu0 %475
    %477 = vrot.lane.b32.xlu0 %v464, 15
    %v478 = vpop.permute.xlu0 %477
    %479 = vrot.lane.b32.xlu0 %v465, 15
    %v480 = vpop.permute.xlu0 %479
    %vm481 = vcmask 121856
    %v482 = vsel %vm481, %v472, %v474
    %v483 = vsel %vm481, %v474, %v476
    %v484 = vsel %vm481, %v476, %v478
    %v485 = vsel %vm481, %v478, %v480
    %v487 = vsel %vm202, %v460, 0
    %v490 = vsel %vm206, %v482, 0
    %v493 = vsel %vm206, %v483, 0
    %v496 = vsel %vm206, %v484, 0
    %v499 = vsel %vm206, %v485, 0
    %501 = vmatprep.subr.bf16.mxu0 %v493
    %502 = vmatpush1.bf16.msra.mxu0 %v490
    %503 = vmatprep.subr.bf16.mxu0 0
    %504 = vmatpush1.bf16.msra.mxu0 0
    %505 = vmatprep.subr.bf16.mxu0 0
    %506 = vmatpush1.bf16.msra.mxu0 0
    %507 = vmatprep.subr.bf16.mxu0 0
    %508 = vmatpush1.bf16.msra.mxu0 0
    %509 = vmatprep.subr.bf16.mxu0 0
    %510 = vmatpush1.bf16.msra.mxu0 0
    %511 = vmatprep.subr.bf16.mxu0 0
    %512 = vmatpush1.bf16.msra.mxu0 0
    %513 = vmatprep.subr.bf16.mxu0 0
    %514 = vmatpush1.bf16.msra.mxu0 0
    %515 = vmatprep.subr.bf16.mxu0 0
    %516 = vmatpush1.bf16.msra.mxu0 0
    %517 = vmatprep.subr.bf16.mxu0 0
    %518 = vmatpush1.bf16.msra.mxu0 0
    %519 = vmatprep.subr.bf16.mxu0 0
    %520 = vmatpush1.bf16.msra.mxu0 0
    %521 = vmatprep.subr.bf16.mxu0 0
    %522 = vmatpush1.bf16.msra.mxu0 0
    %523 = vmatprep.subr.bf16.mxu0 0
    %524 = vmatpush1.bf16.msra.mxu0 0
    %525 = vmatprep.subr.bf16.mxu0 0
    %526 = vmatpush1.bf16.msra.mxu0 0
    %527 = vmatprep.subr.bf16.mxu0 0
    %528 = vmatpush1.bf16.msra.mxu0 0
    %529 = vmatprep.subr.bf16.mxu0 0
    %530 = vmatpush1.bf16.msra.mxu0 0
    %531 = vmatprep.subr.bf16.mxu0 0
    %532 = vmatpush1.bf16.msra.mxu0 0
    %533 = vmatprep.mubr.bf16.mxu0 0
    %534 = vmatmul.mubr.bf16.gmra.mrb[0].mxu0 %v487
    %v535 = vpop.f32.mrb[0].mxu0
    %v536 = vadd.f32 0.0, %v535
    %v537 = vpop.f32.mrb[0].mxu0
    %v538 = vadd.f32 0.0, %v537
    %v539 = vpop.f32.mrb[0].mxu0
    %v540 = vpop.f32.mrb[0].mxu0
    %541 = vdwg.mxu0
    %542 = vmatprep.subr.bf16.mxu0 %v499
    %543 = vmatpush1.bf16.msra.mxu0 %v496
    %544 = vmatprep.subr.bf16.mxu0 0
    %545 = vmatpush1.bf16.msra.mxu0 0
    %546 = vmatprep.subr.bf16.mxu0 0
    %547 = vmatpush1.bf16.msra.mxu0 0
    %548 = vmatprep.subr.bf16.mxu0 0
    %549 = vmatpush1.bf16.msra.mxu0 0
    %550 = vmatprep.subr.bf16.mxu0 0
    %551 = vmatpush1.bf16.msra.mxu0 0
    %552 = vmatprep.subr.bf16.mxu0 0
    %553 = vmatpush1.bf16.msra.mxu0 0
    %554 = vmatprep.subr.bf16.mxu0 0
    %555 = vmatpush1.bf16.msra.mxu0 0
    %556 = vmatprep.subr.bf16.mxu0 0
    %557 = vmatpush1.bf16.msra.mxu0 0
    %558 = vmatprep.subr.bf16.mxu0 0
    %559 = vmatpush1.bf16.msra.mxu0 0
    %560 = vmatprep.subr.bf16.mxu0 0
    %561 = vmatpush1.bf16.msra.mxu0 0
    %562 = vmatprep.subr.bf16.mxu0 0
    %563 = vmatpush1.bf16.msra.mxu0 0
    %564 = vmatprep.subr.bf16.mxu0 0
    %565 = vmatpush1.bf16.msra.mxu0 0
    %566 = vmatprep.subr.bf16.mxu0 0
    %567 = vmatpush1.bf16.msra.mxu0 0
    %568 = vmatprep.subr.bf16.mxu0 0
    %569 = vmatpush1.bf16.msra.mxu0 0
    %570 = vmatprep.subr.bf16.mxu0 0
    %571 = vmatpush1.bf16.msra.mxu0 0
    %572 = vmatprep.subr.bf16.mxu0 0
    %573 = vmatpush1.bf16.msra.mxu0 0
    %574 = vmatprep.mubr.bf16.mxu0 0
    %575 = vmatmul.mubr.bf16.gmra.mrb[0].mxu0 %v487
    %v576 = vpop.f32.mrb[0].mxu0
    %v577 = vadd.f32 0.0, %v576
    %v578 = vpop.f32.mrb[0].mxu0
    %v579 = vadd.f32 0.0, %v578
    %v580 = vpop.f32.mrb[0].mxu0
    %v581 = vpop.f32.mrb[0].mxu0
    %582 = vdwg.mxu0
    %v583 = vadd.f32 %v371, %v536
    %v584 = vadd.f32 %v373, %v538
    %v585 = vadd.f32 %v412, %v577
    %v586 = vadd.f32 %v414, %v579
    %s587 = scalar_lea.vmem %s1, 3
    %v588 = vld [vmem:[%s587] ss:$8 sm:$0xf]
    %v590 = vlaneseq
    %v591 = vshrl.u32 %v590, 7
    %v592 = vsub.s32 0, %v591
    %v593 = vrot.slane %v588, %v592
    %v594 = vlaneseq
    %v595 = vshrl.u32 %v594, 7
    %v596 = vsub.s32 1, %v595
    %v597 = vrot.slane %v588, %v596
    %v598 = vlaneseq
    %v599 = vshrl.u32 %v598, 7
    %v600 = vsub.s32 2, %v599
    %v601 = vrot.slane %v588, %v600
    %v602 = vlaneseq
    %v603 = vshrl.u32 %v602, 7
    %v604 = vsub.s32 3, %v603
    %v605 = vrot.slane %v588, %v604
    %606 = vrot.lane.b32.xlu0 %v593, 127
    %v607 = vpop.permute.xlu0 %606
    %608 = vrot.lane.b32.xlu0 %v597, 127
    %v609 = vpop.permute.xlu0 %608
    %610 = vrot.lane.b32.xlu0 %v601, 127
    %v611 = vpop.permute.xlu0 %610
    %612 = vrot.lane.b32.xlu0 %v605, 127
    %v613 = vpop.permute.xlu0 %612
    %vm614 = vcmask 1039360
    %v615 = vsel %vm614, %v607, %v609
    %v616 = vsel %vm614, %v609, %v611
    %v617 = vsel %vm614, %v611, %v613
    %v623 = vmul.f32 %v607, 0.0
    %v624 = vmul.f32 %v84, %v615
    %v625 = vmul.f32 %v85, %v616
    %v626 = vmul.f32 %v86, %v617
    %v627 = vmul.f32 %v87, %v613
    %s628 = scalar_lea.vmem %s4, 12
    %v629 = vld [vmem:[%s628] sm:$0xf]
    %v630 = vpack.c.bf16 %v623, %v623
    %v631 = vpack.c.bf16 %v624, %v624
    %v632 = vpack.c.bf16 %v625, %v625
    %v633 = vpack.c.bf16 %v626, %v626
    %v634 = vpack.c.bf16 %v627, %v627
    %640 = vrot.lane.b32.xlu0 %v630, 1
    %v641 = vpop.permute.xlu0 %640
    %642 = vrot.lane.b32.xlu0 %v631, 1
    %v643 = vpop.permute.xlu0 %642
    %644 = vrot.lane.b32.xlu0 %v632, 1
    %v645 = vpop.permute.xlu0 %644
    %646 = vrot.lane.b32.xlu0 %v633, 1
    %v647 = vpop.permute.xlu0 %646
    %648 = vrot.lane.b32.xlu0 %v634, 1
    %v649 = vpop.permute.xlu0 %648
    %vm650 = vcmask 7168
    %v651 = vsel %vm650, %v641, %v643
    %v652 = vsel %vm650, %v643, %v645
    %v653 = vsel %vm650, %v645, %v647
    %v654 = vsel %vm650, %v647, %v649
    %v656 = vsel %vm202, %v629, 0
    %v659 = vsel %vm206, %v651, 0
    %v662 = vsel %vm206, %v652, 0
    %v665 = vsel %vm206, %v653, 0
    %v668 = vsel %vm206, %v654, 0
    %670 = vmatprep.subr.bf16.mxu0 %v662
    %671 = vmatpush1.bf16.msra.mxu0 %v659
    %672 = vmatprep.subr.bf16.mxu0 0
    %673 = vmatpush1.bf16.msra.mxu0 0
    %674 = vmatprep.subr.bf16.mxu0 0
    %675 = vmatpush1.bf16.msra.mxu0 0
    %676 = vmatprep.subr.bf16.mxu0 0
    %677 = vmatpush1.bf16.msra.mxu0 0
    %678 = vmatprep.subr.bf16.mxu0 0
    %679 = vmatpush1.bf16.msra.mxu0 0
    %680 = vmatprep.subr.bf16.mxu0 0
    %681 = vmatpush1.bf16.msra.mxu0 0
    %682 = vmatprep.subr.bf16.mxu0 0
    %683 = vmatpush1.bf16.msra.mxu0 0
    %684 = vmatprep.subr.bf16.mxu0 0
    %685 = vmatpush1.bf16.msra.mxu0 0
    %686 = vmatprep.subr.bf16.mxu0 0
    %687 = vmatpush1.bf16.msra.mxu0 0
    %688 = vmatprep.subr.bf16.mxu0 0
    %689 = vmatpush1.bf16.msra.mxu0 0
    %690 = vmatprep.subr.bf16.mxu0 0
    %691 = vmatpush1.bf16.msra.mxu0 0
    %692 = vmatprep.subr.bf16.mxu0 0
    %693 = vmatpush1.bf16.msra.mxu0 0
    %694 = vmatprep.subr.bf16.mxu0 0
    %695 = vmatpush1.bf16.msra.mxu0 0
    %696 = vmatprep.subr.bf16.mxu0 0
    %697 = vmatpush1.bf16.msra.mxu0 0
    %698 = vmatprep.subr.bf16.mxu0 0
    %699 = vmatpush1.bf16.msra.mxu0 0
    %700 = vmatprep.subr.bf16.mxu0 0
    %701 = vmatpush1.bf16.msra.mxu0 0
    %702 = vmatprep.mubr.bf16.mxu0 0
    %703 = vmatmul.mubr.bf16.gmra.mrb[0].mxu0 %v656
    %v704 = vpop.f32.mrb[0].mxu0
    %v705 = vadd.f32 0.0, %v704
    %v706 = vpop.f32.mrb[0].mxu0
    %v707 = vadd.f32 0.0, %v706
    %v708 = vpop.f32.mrb[0].mxu0
    %v709 = vpop.f32.mrb[0].mxu0
    %710 = vdwg.mxu0
    %711 = vmatprep.subr.bf16.mxu0 %v668
    %712 = vmatpush1.bf16.msra.mxu0 %v665
    %713 = vmatprep.subr.bf16.mxu0 0
    %714 = vmatpush1.bf16.msra.mxu0 0
    %715 = vmatprep.subr.bf16.mxu0 0
    %716 = vmatpush1.bf16.msra.mxu0 0
    %717 = vmatprep.subr.bf16.mxu0 0
    %718 = vmatpush1.bf16.msra.mxu0 0
    %719 = vmatprep.subr.bf16.mxu0 0
    %720 = vmatpush1.bf16.msra.mxu0 0
    %721 = vmatprep.subr.bf16.mxu0 0
    %722 = vmatpush1.bf16.msra.mxu0 0
    %723 = vmatprep.subr.bf16.mxu0 0
    %724 = vmatpush1.bf16.msra.mxu0 0
    %725 = vmatprep.subr.bf16.mxu0 0
    %726 = vmatpush1.bf16.msra.mxu0 0
    %727 = vmatprep.subr.bf16.mxu0 0
    %728 = vmatpush1.bf16.msra.mxu0 0
    %729 = vmatprep.subr.bf16.mxu0 0
    %730 = vmatpush1.bf16.msra.mxu0 0
    %731 = vmatprep.subr.bf16.mxu0 0
    %732 = vmatpush1.bf16.msra.mxu0 0
    %733 = vmatprep.subr.bf16.mxu0 0
    %734 = vmatpush1.bf16.msra.mxu0 0
    %735 = vmatprep.subr.bf16.mxu0 0
    %736 = vmatpush1.bf16.msra.mxu0 0
    %737 = vmatprep.subr.bf16.mxu0 0
    %738 = vmatpush1.bf16.msra.mxu0 0
    %739 = vmatprep.subr.bf16.mxu0 0
    %740 = vmatpush1.bf16.msra.mxu0 0
    %741 = vmatprep.subr.bf16.mxu0 0
    %742 = vmatpush1.bf16.msra.mxu0 0
    %743 = vmatprep.mubr.bf16.mxu0 0
    %744 = vmatmul.mubr.bf16.gmra.mrb[0].mxu0 %v656
    %v745 = vpop.f32.mrb[0].mxu0
    %v746 = vadd.f32 0.0, %v745
    %v747 = vpop.f32.mrb[0].mxu0
    %v748 = vadd.f32 0.0, %v747
    %v749 = vpop.f32.mrb[0].mxu0
    %v750 = vpop.f32.mrb[0].mxu0
    %751 = vdwg.mxu0
    %v752 = vadd.f32 %v583, %v705
    %v753 = vadd.f32 %v584, %v707
    %v754 = vadd.f32 %v585, %v746
    %v755 = vadd.f32 %v586, %v748
    %s756 = scalar_lea.vmem %s4, 16
    %v757 = vld [vmem:[%s756] sm:$0xf]
    %v758 = vpack.c.bf16 %v84, %v84
    %v759 = vpack.c.bf16 %v85, %v85
    %v760 = vpack.c.bf16 %v86, %v86
    %v761 = vpack.c.bf16 %v87, %v87
    %v763 = vsel %vm202, %v757, 0
    %v766 = vsel %vm206, %v758, 0
    %v769 = vsel %vm206, %v759, 0
    %v772 = vsel %vm206, %v760, 0
    %v775 = vsel %vm206, %v761, 0
    %777 = vmatprep.subr.bf16.mxu0 %v769
    %778 = vmatpush1.bf16.msra.mxu0 %v766
    %779 = vmatprep.subr.bf16.mxu0 0
    %780 = vmatpush1.bf16.msra.mxu0 0
    %781 = vmatprep.subr.bf16.mxu0 0
    %782 = vmatpush1.bf16.msra.mxu0 0
    %783 = vmatprep.subr.bf16.mxu0 0
    %784 = vmatpush1.bf16.msra.mxu0 0
    %785 = vmatprep.subr.bf16.mxu0 0
    %786 = vmatpush1.bf16.msra.mxu0 0
    %787 = vmatprep.subr.bf16.mxu0 0
    %788 = vmatpush1.bf16.msra.mxu0 0
    %789 = vmatprep.subr.bf16.mxu0 0
    %790 = vmatpush1.bf16.msra.mxu0 0
    %791 = vmatprep.subr.bf16.mxu0 0
    %792 = vmatpush1.bf16.msra.mxu0 0
    %793 = vmatprep.subr.bf16.mxu0 0
    %794 = vmatpush1.bf16.msra.mxu0 0
    %795 = vmatprep.subr.bf16.mxu0 0
    %796 = vmatpush1.bf16.msra.mxu0 0
    %797 = vmatprep.subr.bf16.mxu0 0
    %798 = vmatpush1.bf16.msra.mxu0 0
    %799 = vmatprep.subr.bf16.mxu0 0
    %800 = vmatpush1.bf16.msra.mxu0 0
    %801 = vmatprep.subr.bf16.mxu0 0
    %802 = vmatpush1.bf16.msra.mxu0 0
    %803 = vmatprep.subr.bf16.mxu0 0
    %804 = vmatpush1.bf16.msra.mxu0 0
    %805 = vmatprep.subr.bf16.mxu0 0
    %806 = vmatpush1.bf16.msra.mxu0 0
    %807 = vmatprep.subr.bf16.mxu0 0
    %808 = vmatpush1.bf16.msra.mxu0 0
    %809 = vmatprep.mubr.bf16.mxu0 0
    %810 = vmatmul.mubr.bf16.gmra.mrb[0].mxu0 %v763
    %v811 = vpop.f32.mrb[0].mxu0
    %v812 = vadd.f32 0.0, %v811
    %v813 = vpop.f32.mrb[0].mxu0
    %v814 = vadd.f32 0.0, %v813
    %v815 = vpop.f32.mrb[0].mxu0
    %v816 = vpop.f32.mrb[0].mxu0
    %817 = vdwg.mxu0
    %818 = vmatprep.subr.bf16.mxu0 %v775
    %819 = vmatpush1.bf16.msra.mxu0 %v772
    %820 = vmatprep.subr.bf16.mxu0 0
    %821 = vmatpush1.bf16.msra.mxu0 0
    %822 = vmatprep.subr.bf16.mxu0 0
    %823 = vmatpush1.bf16.msra.mxu0 0
    %824 = vmatprep.subr.bf16.mxu0 0
    %825 = vmatpush1.bf16.msra.mxu0 0
    %826 = vmatprep.subr.bf16.mxu0 0
    %827 = vmatpush1.bf16.msra.mxu0 0
    %828 = vmatprep.subr.bf16.mxu0 0
    %829 = vmatpush1.bf16.msra.mxu0 0
    %830 = vmatprep.subr.bf16.mxu0 0
    %831 = vmatpush1.bf16.msra.mxu0 0
    %832 = vmatprep.subr.bf16.mxu0 0
    %833 = vmatpush1.bf16.msra.mxu0 0
    %834 = vmatprep.subr.bf16.mxu0 0
    %835 = vmatpush1.bf16.msra.mxu0 0
    %836 = vmatprep.subr.bf16.mxu0 0
    %837 = vmatpush1.bf16.msra.mxu0 0
    %838 = vmatprep.subr.bf16.mxu0 0
    %839 = vmatpush1.bf16.msra.mxu0 0
    %840 = vmatprep.subr.bf16.mxu0 0
    %841 = vmatpush1.bf16.msra.mxu0 0
    %842 = vmatprep.subr.bf16.mxu0 0
    %843 = vmatpush1.bf16.msra.mxu0 0
    %844 = vmatprep.subr.bf16.mxu0 0
    %845 = vmatpush1.bf16.msra.mxu0 0
    %846 = vmatprep.subr.bf16.mxu0 0
    %847 = vmatpush1.bf16.msra.mxu0 0
    %848 = vmatprep.subr.bf16.mxu0 0
    %849 = vmatpush1.bf16.msra.mxu0 0
    %850 = vmatprep.mubr.bf16.mxu0 0
    %851 = vmatmul.mubr.bf16.gmra.mrb[0].mxu0 %v763
    %v852 = vpop.f32.mrb[0].mxu0
    %v853 = vadd.f32 0.0, %v852
    %v854 = vpop.f32.mrb[0].mxu0
    %v855 = vadd.f32 0.0, %v854
    %v856 = vpop.f32.mrb[0].mxu0
    %v857 = vpop.f32.mrb[0].mxu0
    %858 = vdwg.mxu0
    %v859 = vadd.f32 %v752, %v812
    %v860 = vadd.f32 %v753, %v814
    %v861 = vadd.f32 %v754, %v853
    %v862 = vadd.f32 %v755, %v855
    %s863 = scalar_lea.vmem %s1, 5
    %v864 = vld [vmem:[%s863] ss:$8 sm:$0xf]
    %v866 = vlaneseq
    %v867 = vshrl.u32 %v866, 7
    %v868 = vsub.s32 0, %v867
    %v869 = vrot.slane %v864, %v868
    %v870 = vlaneseq
    %v871 = vshrl.u32 %v870, 7
    %v872 = vsub.s32 1, %v871
    %v873 = vrot.slane %v864, %v872
    %v874 = vlaneseq
    %v875 = vshrl.u32 %v874, 7
    %v876 = vsub.s32 2, %v875
    %v877 = vrot.slane %v864, %v876
    %v878 = vlaneseq
    %v879 = vshrl.u32 %v878, 7
    %v880 = vsub.s32 3, %v879
    %v881 = vrot.slane %v864, %v880
    %882 = vrot.lane.b32.xlu0 %v869, 1
    %v883 = vpop.permute.xlu0 %882
    %884 = vrot.lane.b32.xlu0 %v873, 1
    %v885 = vpop.permute.xlu0 %884
    %886 = vrot.lane.b32.xlu0 %v877, 1
    %v887 = vpop.permute.xlu0 %886
    %888 = vrot.lane.b32.xlu0 %v881, 1
    %v889 = vpop.permute.xlu0 %888
    %vm890 = vcmask 7168
    %v891 = vsel %vm890, %v883, %v885
    %v892 = vsel %vm890, %v885, %v887
    %v893 = vsel %vm890, %v887, %v889
    %v899 = vmul.f32 %v84, %v883
    %v900 = vmul.f32 %v85, %v891
    %v901 = vmul.f32 %v86, %v892
    %v902 = vmul.f32 %v87, %v893
    %v903 = vmul.f32 %v889, 0.0
    %s904 = scalar_lea.vmem %s4, 20
    %v905 = vld [vmem:[%s904] sm:$0xf]
    %v906 = vpack.c.bf16 %v899, %v899
    %v907 = vpack.c.bf16 %v900, %v900
    %v908 = vpack.c.bf16 %v901, %v901
    %v909 = vpack.c.bf16 %v902, %v902
    %v910 = vpack.c.bf16 %v903, %v903
    %916 = vrot.lane.b32.xlu0 %v906, 127
    %v917 = vpop.permute.xlu0 %916
    %918 = vrot.lane.b32.xlu0 %v907, 127
    %v919 = vpop.permute.xlu0 %918
    %920 = vrot.lane.b32.xlu0 %v908, 127
    %v921 = vpop.permute.xlu0 %920
    %922 = vrot.lane.b32.xlu0 %v909, 127
    %v923 = vpop.permute.xlu0 %922
    %924 = vrot.lane.b32.xlu0 %v910, 127
    %v925 = vpop.permute.xlu0 %924
    %vm926 = vcmask 1039360
    %v927 = vsel %vm926, %v917, %v919
    %v928 = vsel %vm926, %v919, %v921
    %v929 = vsel %vm926, %v921, %v923
    %v930 = vsel %vm926, %v923, %v925
    %v932 = vsel %vm202, %v905, 0
    %v935 = vsel %vm206, %v927, 0
    %v938 = vsel %vm206, %v928, 0
    %v941 = vsel %vm206, %v929, 0
    %v944 = vsel %vm206, %v930, 0
    %946 = vmatprep.subr.bf16.mxu0 %v938
    %947 = vmatpush1.bf16.msra.mxu0 %v935
    %948 = vmatprep.subr.bf16.mxu0 0
    %949 = vmatpush1.bf16.msra.mxu0 0
    %950 = vmatprep.subr.bf16.mxu0 0
    %951 = vmatpush1.bf16.msra.mxu0 0
    %952 = vmatprep.subr.bf16.mxu0 0
    %953 = vmatpush1.bf16.msra.mxu0 0
    %954 = vmatprep.subr.bf16.mxu0 0
    %955 = vmatpush1.bf16.msra.mxu0 0
    %956 = vmatprep.subr.bf16.mxu0 0
    %957 = vmatpush1.bf16.msra.mxu0 0
    %958 = vmatprep.subr.bf16.mxu0 0
    %959 = vmatpush1.bf16.msra.mxu0 0
    %960 = vmatprep.subr.bf16.mxu0 0
    %961 = vmatpush1.bf16.msra.mxu0 0
    %962 = vmatprep.subr.bf16.mxu0 0
    %963 = vmatpush1.bf16.msra.mxu0 0
    %964 = vmatprep.subr.bf16.mxu0 0
    %965 = vmatpush1.bf16.msra.mxu0 0
    %966 = vmatprep.subr.bf16.mxu0 0
    %967 = vmatpush1.bf16.msra.mxu0 0
    %968 = vmatprep.subr.bf16.mxu0 0
    %969 = vmatpush1.bf16.msra.mxu0 0
    %970 = vmatprep.subr.bf16.mxu0 0
    %971 = vmatpush1.bf16.msra.mxu0 0
    %972 = vmatprep.subr.bf16.mxu0 0
    %973 = vmatpush1.bf16.msra.mxu0 0
    %974 = vmatprep.subr.bf16.mxu0 0
    %975 = vmatpush1.bf16.msra.mxu0 0
    %976 = vmatprep.subr.bf16.mxu0 0
    %977 = vmatpush1.bf16.msra.mxu0 0
    %978 = vmatprep.mubr.bf16.mxu0 0
    %979 = vmatmul.mubr.bf16.gmra.mrb[0].mxu0 %v932
    %v980 = vpop.f32.mrb[0].mxu0
    %v981 = vadd.f32 0.0, %v980
    %v982 = vpop.f32.mrb[0].mxu0
    %v983 = vadd.f32 0.0, %v982
    %v984 = vpop.f32.mrb[0].mxu0
    %v985 = vpop.f32.mrb[0].mxu0
    %986 = vdwg.mxu0
    %987 = vmatprep.subr.bf16.mxu0 %v944
    %988 = vmatpush1.bf16.msra.mxu0 %v941
    %989 = vmatprep.subr.bf16.mxu0 0
    %990 = vmatpush1.bf16.msra.mxu0 0
    %991 = vmatprep.subr.bf16.mxu0 0
    %992 = vmatpush1.bf16.msra.mxu0 0
    %993 = vmatprep.subr.bf16.mxu0 0
    %994 = vmatpush1.bf16.msra.mxu0 0
    %995 = vmatprep.subr.bf16.mxu0 0
    %996 = vmatpush1.bf16.msra.mxu0 0
    %997 = vmatprep.subr.bf16.mxu0 0
    %998 = vmatpush1.bf16.msra.mxu0 0
    %999 = vmatprep.subr.bf16.mxu0 0
    %1000 = vmatpush1.bf16.msra.mxu0 0
    %1001 = vmatprep.subr.bf16.mxu0 0
    %1002 = vmatpush1.bf16.msra.mxu0 0
    %1003 = vmatprep.subr.bf16.mxu0 0
    %1004 = vmatpush1.bf16.msra.mxu0 0
    %1005 = vmatprep.subr.bf16.mxu0 0
    %1006 = vmatpush1.bf16.msra.mxu0 0
    %1007 = vmatprep.subr.bf16.mxu0 0
    %1008 = vmatpush1.bf16.msra.mxu0 0
    %1009 = vmatprep.subr.bf16.mxu0 0
    %1010 = vmatpush1.bf16.msra.mxu0 0
    %1011 = vmatprep.subr.bf16.mxu0 0
    %1012 = vmatpush1.bf16.msra.mxu0 0
    %1013 = vmatprep.subr.bf16.mxu0 0
    %1014 = vmatpush1.bf16.msra.mxu0 0
    %1015 = vmatprep.subr.bf16.mxu0 0
    %1016 = vmatpush1.bf16.msra.mxu0 0
    %1017 = vmatprep.subr.bf16.mxu0 0
    %1018 = vmatpush1.bf16.msra.mxu0 0
    %1019 = vmatprep.mubr.bf16.mxu0 0
    %1020 = vmatmul.mubr.bf16.gmra.mrb[0].mxu0 %v932
    %v1021 = vpop.f32.mrb[0].mxu0
    %v1022 = vadd.f32 0.0, %v1021
    %v1023 = vpop.f32.mrb[0].mxu0
    %v1024 = vadd.f32 0.0, %v1023
    %v1025 = vpop.f32.mrb[0].mxu0
    %v1026 = vpop.f32.mrb[0].mxu0
    %1027 = vdwg.mxu0
    %v1028 = vadd.f32 %v859, %v981
    %v1029 = vadd.f32 %v860, %v983
    %v1030 = vadd.f32 %v861, %v1022
    %v1031 = vadd.f32 %v862, %v1024
    %s1032 = scalar_lea.vmem %s1, 6
    %v1033 = vld [vmem:[%s1032] ss:$8 sm:$0xf]
    %v1035 = vlaneseq
    %v1036 = vshrl.u32 %v1035, 7
    %v1037 = vsub.s32 0, %v1036
    %v1038 = vrot.slane %v1033, %v1037
    %v1039 = vlaneseq
    %v1040 = vshrl.u32 %v1039, 7
    %v1041 = vsub.s32 1, %v1040
    %v1042 = vrot.slane %v1033, %v1041
    %v1043 = vlaneseq
    %v1044 = vshrl.u32 %v1043, 7
    %v1045 = vsub.s32 2, %v1044
    %v1046 = vrot.slane %v1033, %v1045
    %v1047 = vlaneseq
    %v1048 = vshrl.u32 %v1047, 7
    %v1049 = vsub.s32 3, %v1048
    %v1050 = vrot.slane %v1033, %v1049
    %1051 = vrot.lane.b32.xlu0 %v1038, 15
    %v1052 = vpop.permute.xlu0 %1051
    %1053 = vrot.lane.b32.xlu0 %v1042, 15
    %v1054 = vpop.permute.xlu0 %1053
    %1055 = vrot.lane.b32.xlu0 %v1046, 15
    %v1056 = vpop.permute.xlu0 %1055
    %1057 = vrot.lane.b32.xlu0 %v1050, 15
    %v1058 = vpop.permute.xlu0 %1057
    %vm1059 = vcmask 121856
    %v1060 = vsel %vm1059, %v1052, %v1054
    %v1061 = vsel %vm1059, %v1054, %v1056
    %v1062 = vsel %vm1059, %v1056, %v1058
    %v1068 = vmul.f32 %v84, %v1052
    %v1069 = vmul.f32 %v85, %v1060
    %v1070 = vmul.f32 %v86, %v1061
    %v1071 = vmul.f32 %v87, %v1062
    %v1072 = vmul.f32 %v1058, 0.0
    %s1073 = scalar_lea.vmem %s4, 24
    %v1074 = vld [vmem:[%s1073] sm:$0xf]
    %v1075 = vpack.c.bf16 %v1068, %v1068
    %v1076 = vpack.c.bf16 %v1069, %v1069
    %v1077 = vpack.c.bf16 %v1070, %v1070
    %v1078 = vpack.c.bf16 %v1071, %v1071
    %v1079 = vpack.c.bf16 %v1072, %v1072
    %1085 = vrot.lane.b32.xlu0 %v1075, 113
    %v1086 = vpop.permute.xlu0 %1085
    %1087 = vrot.lane.b32.xlu0 %v1076, 113
    %v1088 = vpop.permute.xlu0 %1087
    %1089 = vrot.lane.b32.xlu0 %v1077, 113
    %v1090 = vpop.permute.xlu0 %1089
    %1091 = vrot.lane.b32.xlu0 %v1078, 113
    %v1092 = vpop.permute.xlu0 %1091
    %1093 = vrot.lane.b32.xlu0 %v1079, 113
    %v1094 = vpop.permute.xlu0 %1093
    %vm1095 = vcmask 924672
    %v1096 = vsel %vm1095, %v1086, %v1088
    %v1097 = vsel %vm1095, %v1088, %v1090
    %v1098 = vsel %vm1095, %v1090, %v1092
    %v1099 = vsel %vm1095, %v1092, %v1094
    %v1101 = vsel %vm202, %v1074, 0
    %v1104 = vsel %vm206, %v1096, 0
    %v1107 = vsel %vm206, %v1097, 0
    %v1110 = vsel %vm206, %v1098, 0
    %v1113 = vsel %vm206, %v1099, 0
    %1115 = vmatprep.subr.bf16.mxu0 %v1107
    %1116 = vmatpush1.bf16.msra.mxu0 %v1104
    %1117 = vmatprep.subr.bf16.mxu0 0
    %1118 = vmatpush1.bf16.msra.mxu0 0
    %1119 = vmatprep.subr.bf16.mxu0 0
    %1120 = vmatpush1.bf16.msra.mxu0 0
    %1121 = vmatprep.subr.bf16.mxu0 0
    %1122 = vmatpush1.bf16.msra.mxu0 0
    %1123 = vmatprep.subr.bf16.mxu0 0
    %1124 = vmatpush1.bf16.msra.mxu0 0
    %1125 = vmatprep.subr.bf16.mxu0 0
    %1126 = vmatpush1.bf16.msra.mxu0 0
    %1127 = vmatprep.subr.bf16.mxu0 0
    %1128 = vmatpush1.bf16.msra.mxu0 0
    %1129 = vmatprep.subr.bf16.mxu0 0
    %1130 = vmatpush1.bf16.msra.mxu0 0
    %1131 = vmatprep.subr.bf16.mxu0 0
    %1132 = vmatpush1.bf16.msra.mxu0 0
    %1133 = vmatprep.subr.bf16.mxu0 0
    %1134 = vmatpush1.bf16.msra.mxu0 0
    %1135 = vmatprep.subr.bf16.mxu0 0
    %1136 = vmatpush1.bf16.msra.mxu0 0
    %1137 = vmatprep.subr.bf16.mxu0 0
    %1138 = vmatpush1.bf16.msra.mxu0 0
    %1139 = vmatprep.subr.bf16.mxu0 0
    %1140 = vmatpush1.bf16.msra.mxu0 0
    %1141 = vmatprep.subr.bf16.mxu0 0
    %1142 = vmatpush1.bf16.msra.mxu0 0
    %1143 = vmatprep.subr.bf16.mxu0 0
    %1144 = vmatpush1.bf16.msra.mxu0 0
    %1145 = vmatprep.subr.bf16.mxu0 0
    %1146 = vmatpush1.bf16.msra.mxu0 0
    %1147 = vmatprep.mubr.bf16.mxu0 0
    %1148 = vmatmul.mubr.bf16.gmra.mrb[0].mxu0 %v1101
    %v1149 = vpop.f32.mrb[0].mxu0
    %v1150 = vadd.f32 0.0, %v1149
    %v1151 = vpop.f32.mrb[0].mxu0
    %v1152 = vadd.f32 0.0, %v1151
    %v1153 = vpop.f32.mrb[0].mxu0
    %v1154 = vpop.f32.mrb[0].mxu0
    %1155 = vdwg.mxu0
    %1156 = vmatprep.subr.bf16.mxu0 %v1113
    %1157 = vmatpush1.bf16.msra.mxu0 %v1110
    %1158 = vmatprep.subr.bf16.mxu0 0
    %1159 = vmatpush1.bf16.msra.mxu0 0
    %1160 = vmatprep.subr.bf16.mxu0 0
    %1161 = vmatpush1.bf16.msra.mxu0 0
    %1162 = vmatprep.subr.bf16.mxu0 0
    %1163 = vmatpush1.bf16.msra.mxu0 0
    %1164 = vmatprep.subr.bf16.mxu0 0
    %1165 = vmatpush1.bf16.msra.mxu0 0
    %1166 = vmatprep.subr.bf16.mxu0 0
    %1167 = vmatpush1.bf16.msra.mxu0 0
    %1168 = vmatprep.subr.bf16.mxu0 0
    %1169 = vmatpush1.bf16.msra.mxu0 0
    %1170 = vmatprep.subr.bf16.mxu0 0
    %1171 = vmatpush1.bf16.msra.mxu0 0
    %1172 = vmatprep.subr.bf16.mxu0 0
    %1173 = vmatpush1.bf16.msra.mxu0 0
    %1174 = vmatprep.subr.bf16.mxu0 0
    %1175 = vmatpush1.bf16.msra.mxu0 0
    %1176 = vmatprep.subr.bf16.mxu0 0
    %1177 = vmatpush1.bf16.msra.mxu0 0
    %1178 = vmatprep.subr.bf16.mxu0 0
    %1179 = vmatpush1.bf16.msra.mxu0 0
    %1180 = vmatprep.subr.bf16.mxu0 0
    %1181 = vmatpush1.bf16.msra.mxu0 0
    %1182 = vmatprep.subr.bf16.mxu0 0
    %1183 = vmatpush1.bf16.msra.mxu0 0
    %1184 = vmatprep.subr.bf16.mxu0 0
    %1185 = vmatpush1.bf16.msra.mxu0 0
    %1186 = vmatprep.subr.bf16.mxu0 0
    %1187 = vmatpush1.bf16.msra.mxu0 0
    %1188 = vmatprep.mubr.bf16.mxu0 0
    %1189 = vmatmul.mubr.bf16.gmra.mrb[0].mxu0 %v1101
    %v1190 = vpop.f32.mrb[0].mxu0
    %v1191 = vadd.f32 0.0, %v1190
    %v1192 = vpop.f32.mrb[0].mxu0
    %v1193 = vadd.f32 0.0, %v1192
    %v1194 = vpop.f32.mrb[0].mxu0
    %v1195 = vpop.f32.mrb[0].mxu0
    %1196 = vdwg.mxu0
    %v1197 = vadd.f32 %v1028, %v1150
    %v1198 = vadd.f32 %v1029, %v1152
    %v1199 = vadd.f32 %v1030, %v1191
    %v1200 = vadd.f32 %v1031, %v1193
    %s1201 = scalar_lea.vmem %s1, 7
    %v1202 = vld [vmem:[%s1201] ss:$8 sm:$0xf]
    %v1204 = vlaneseq
    %v1205 = vshrl.u32 %v1204, 7
    %v1206 = vsub.s32 0, %v1205
    %v1207 = vrot.slane %v1202, %v1206
    %v1208 = vlaneseq
    %v1209 = vshrl.u32 %v1208, 7
    %v1210 = vsub.s32 1, %v1209
    %v1211 = vrot.slane %v1202, %v1210
    %v1212 = vlaneseq
    %v1213 = vshrl.u32 %v1212, 7
    %v1214 = vsub.s32 2, %v1213
    %v1215 = vrot.slane %v1202, %v1214
    %v1216 = vlaneseq
    %v1217 = vshrl.u32 %v1216, 7
    %v1218 = vsub.s32 3, %v1217
    %v1219 = vrot.slane %v1202, %v1218
    %1220 = vrot.lane.b32.xlu0 %v1207, 16
    %v1221 = vpop.permute.xlu0 %1220
    %1222 = vrot.lane.b32.xlu0 %v1211, 16
    %v1223 = vpop.permute.xlu0 %1222
    %1224 = vrot.lane.b32.xlu0 %v1215, 16
    %v1225 = vpop.permute.xlu0 %1224
    %1226 = vrot.lane.b32.xlu0 %v1219, 16
    %v1227 = vpop.permute.xlu0 %1226
    %vm1228 = vcmask 130048
    %v1229 = vsel %vm1228, %v1221, %v1223
    %v1230 = vsel %vm1228, %v1223, %v1225
    %v1231 = vsel %vm1228, %v1225, %v1227
    %v1237 = vmul.f32 %v84, %v1221
    %v1238 = vmul.f32 %v85, %v1229
    %v1239 = vmul.f32 %v86, %v1230
    %v1240 = vmul.f32 %v87, %v1231
    %v1241 = vmul.f32 %v1227, 0.0
    %s1242 = scalar_lea.vmem %s4, 28
    %v1243 = vld [vmem:[%s1242] sm:$0xf]
    %v1244 = vpack.c.bf16 %v1237, %v1237
    %v1245 = vpack.c.bf16 %v1238, %v1238
    %v1246 = vpack.c.bf16 %v1239, %v1239
    %v1247 = vpack.c.bf16 %v1240, %v1240
    %v1248 = vpack.c.bf16 %v1241, %v1241
    %1254 = vrot.lane.b32.xlu0 %v1244, 112
    %v1255 = vpop.permute.xlu0 %1254
    %1256 = vrot.lane.b32.xlu0 %v1245, 112
    %v1257 = vpop.permute.xlu0 %1256
    %1258 = vrot.lane.b32.xlu0 %v1246, 112
    %v1259 = vpop.permute.xlu0 %1258
    %1260 = vrot.lane.b32.xlu0 %v1247, 112
    %v1261 = vpop.permute.xlu0 %1260
    %1262 = vrot.lane.b32.xlu0 %v1248, 112
    %v1263 = vpop.permute.xlu0 %1262
    %vm1264 = vcmask 916480
    %v1265 = vsel %vm1264, %v1255, %v1257
    %v1266 = vsel %vm1264, %v1257, %v1259
    %v1267 = vsel %vm1264, %v1259, %v1261
    %v1268 = vsel %vm1264, %v1261, %v1263
    %v1270 = vsel %vm202, %v1243, 0
    %v1273 = vsel %vm206, %v1265, 0
    %v1276 = vsel %vm206, %v1266, 0
    %v1279 = vsel %vm206, %v1267, 0
    %v1282 = vsel %vm206, %v1268, 0
    %1284 = vmatprep.subr.bf16.mxu0 %v1276
    %1285 = vmatpush1.bf16.msra.mxu0 %v1273
    %1286 = vmatprep.subr.bf16.mxu0 0
    %1287 = vmatpush1.bf16.msra.mxu0 0
    %1288 = vmatprep.subr.bf16.mxu0 0
    %1289 = vmatpush1.bf16.msra.mxu0 0
    %1290 = vmatprep.subr.bf16.mxu0 0
    %1291 = vmatpush1.bf16.msra.mxu0 0
    %1292 = vmatprep.subr.bf16.mxu0 0
    %1293 = vmatpush1.bf16.msra.mxu0 0
    %1294 = vmatprep.subr.bf16.mxu0 0
    %1295 = vmatpush1.bf16.msra.mxu0 0
    %1296 = vmatprep.subr.bf16.mxu0 0
    %1297 = vmatpush1.bf16.msra.mxu0 0
    %1298 = vmatprep.subr.bf16.mxu0 0
    %1299 = vmatpush1.bf16.msra.mxu0 0
    %1300 = vmatprep.subr.bf16.mxu0 0
    %1301 = vmatpush1.bf16.msra.mxu0 0
    %1302 = vmatprep.subr.bf16.mxu0 0
    %1303 = vmatpush1.bf16.msra.mxu0 0
    %1304 = vmatprep.subr.bf16.mxu0 0
    %1305 = vmatpush1.bf16.msra.mxu0 0
    %1306 = vmatprep.subr.bf16.mxu0 0
    %1307 = vmatpush1.bf16.msra.mxu0 0
    %1308 = vmatprep.subr.bf16.mxu0 0
    %1309 = vmatpush1.bf16.msra.mxu0 0
    %1310 = vmatprep.subr.bf16.mxu0 0
    %1311 = vmatpush1.bf16.msra.mxu0 0
    %1312 = vmatprep.subr.bf16.mxu0 0
    %1313 = vmatpush1.bf16.msra.mxu0 0
    %1314 = vmatprep.subr.bf16.mxu0 0
    %1315 = vmatpush1.bf16.msra.mxu0 0
    %1316 = vmatprep.mubr.bf16.mxu0 0
    %1317 = vmatmul.mubr.bf16.gmra.mrb[0].mxu0 %v1270
    %v1318 = vpop.f32.mrb[0].mxu0
    %v1319 = vadd.f32 0.0, %v1318
    %v1320 = vpop.f32.mrb[0].mxu0
    %v1321 = vadd.f32 0.0, %v1320
    %v1322 = vpop.f32.mrb[0].mxu0
    %v1323 = vpop.f32.mrb[0].mxu0
    %1324 = vdwg.mxu0
    %1325 = vmatprep.subr.bf16.mxu0 %v1282
    %1326 = vmatpush1.bf16.msra.mxu0 %v1279
    %1327 = vmatprep.subr.bf16.mxu0 0
    %1328 = vmatpush1.bf16.msra.mxu0 0
    %1329 = vmatprep.subr.bf16.mxu0 0
    %1330 = vmatpush1.bf16.msra.mxu0 0
    %1331 = vmatprep.subr.bf16.mxu0 0
    %1332 = vmatpush1.bf16.msra.mxu0 0
    %1333 = vmatprep.subr.bf16.mxu0 0
    %1334 = vmatpush1.bf16.msra.mxu0 0
    %1335 = vmatprep.subr.bf16.mxu0 0
    %1336 = vmatpush1.bf16.msra.mxu0 0
    %1337 = vmatprep.subr.bf16.mxu0 0
    %1338 = vmatpush1.bf16.msra.mxu0 0
    %1339 = vmatprep.subr.bf16.mxu0 0
    %1340 = vmatpush1.bf16.msra.mxu0 0
    %1341 = vmatprep.subr.bf16.mxu0 0
    %1342 = vmatpush1.bf16.msra.mxu0 0
    %1343 = vmatprep.subr.bf16.mxu0 0
    %1344 = vmatpush1.bf16.msra.mxu0 0
    %1345 = vmatprep.subr.bf16.mxu0 0
    %1346 = vmatpush1.bf16.msra.mxu0 0
    %1347 = vmatprep.subr.bf16.mxu0 0
    %1348 = vmatpush1.bf16.msra.mxu0 0
    %1349 = vmatprep.subr.bf16.mxu0 0
    %1350 = vmatpush1.bf16.msra.mxu0 0
    %1351 = vmatprep.subr.bf16.mxu0 0
    %1352 = vmatpush1.bf16.msra.mxu0 0
    %1353 = vmatprep.subr.bf16.mxu0 0
    %1354 = vmatpush1.bf16.msra.mxu0 0
    %1355 = vmatprep.subr.bf16.mxu0 0
    %1356 = vmatpush1.bf16.msra.mxu0 0
    %1357 = vmatprep.mubr.bf16.mxu0 0
    %1358 = vmatmul.mubr.bf16.gmra.mrb[0].mxu0 %v1270
    %v1359 = vpop.f32.mrb[0].mxu0
    %v1360 = vadd.f32 0.0, %v1359
    %v1361 = vpop.f32.mrb[0].mxu0
    %v1362 = vadd.f32 0.0, %v1361
    %v1363 = vpop.f32.mrb[0].mxu0
    %v1364 = vpop.f32.mrb[0].mxu0
    %1365 = vdwg.mxu0
    %v1366 = vadd.f32 %v1197, %v1319
    %v1367 = vadd.f32 %v1198, %v1321
    %v1368 = vadd.f32 %v1199, %v1360
    %v1369 = vadd.f32 %v1200, %v1362
    %s1370 = scalar_lea.vmem %s1, 32
    %v1371 = vld [vmem:[%s1370] ss:$8 sm:$0xf]
    %v1373 = vlaneseq
    %v1374 = vshrl.u32 %v1373, 7
    %v1375 = vsub.s32 0, %v1374
    %v1376 = vrot.slane %v1371, %v1375
    %v1377 = vlaneseq
    %v1378 = vshrl.u32 %v1377, 7
    %v1379 = vsub.s32 1, %v1378
    %v1380 = vrot.slane %v1371, %v1379
    %v1381 = vlaneseq
    %v1382 = vshrl.u32 %v1381, 7
    %v1383 = vsub.s32 2, %v1382
    %v1384 = vrot.slane %v1371, %v1383
    %v1385 = vlaneseq
    %v1386 = vshrl.u32 %v1385, 7
    %v1387 = vsub.s32 3, %v1386
    %v1388 = vrot.slane %v1371, %v1387
    %1389 = vrot.lane.b32.xlu0 %v1376, 17
    %v1390 = vpop.permute.xlu0 %1389
    %1391 = vrot.lane.b32.xlu0 %v1380, 17
    %v1392 = vpop.permute.xlu0 %1391
    %1393 = vrot.lane.b32.xlu0 %v1384, 17
    %v1394 = vpop.permute.xlu0 %1393
    %1395 = vrot.lane.b32.xlu0 %v1388, 17
    %v1396 = vpop.permute.xlu0 %1395
    %vm1397 = vcmask 138240
    %v1398 = vsel %vm1397, %v1390, %v1392
    %v1399 = vsel %vm1397, %v1392, %v1394
    %v1400 = vsel %vm1397, %v1394, %v1396
    %v1406 = vmul.f32 %v84, %v1390
    %v1407 = vmul.f32 %v85, %v1398
    %v1408 = vmul.f32 %v86, %v1399
    %v1409 = vmul.f32 %v87, %v1400
    %v1410 = vmul.f32 %v1396, 0.0
    %s1411 = scalar_lea.vmem %s4, 32
    %v1412 = vld [vmem:[%s1411] sm:$0xf]
    %v1413 = vpack.c.bf16 %v1406, %v1406
    %v1414 = vpack.c.bf16 %v1407, %v1407
    %v1415 = vpack.c.bf16 %v1408, %v1408
    %v1416 = vpack.c.bf16 %v1409, %v1409
    %v1417 = vpack.c.bf16 %v1410, %v1410
    %1423 = vrot.lane.b32.xlu0 %v1413, 111
    %v1424 = vpop.permute.xlu0 %1423
    %1425 = vrot.lane.b32.xlu0 %v1414, 111
    %v1426 = vpop.permute.xlu0 %1425
    %1427 = vrot.lane.b32.xlu0 %v1415, 111
    %v1428 = vpop.permute.xlu0 %1427
    %1429 = vrot.lane.b32.xlu0 %v1416, 111
    %v1430 = vpop.permute.xlu0 %1429
    %1431 = vrot.lane.b32.xlu0 %v1417, 111
    %v1432 = vpop.permute.xlu0 %1431
    %vm1433 = vcmask 908288
    %v1434 = vsel %vm1433, %v1424, %v1426
    %v1435 = vsel %vm1433, %v1426, %v1428
    %v1436 = vsel %vm1433, %v1428, %v1430
    %v1437 = vsel %vm1433, %v1430, %v1432
    %v1439 = vsel %vm202, %v1412, 0
    %v1442 = vsel %vm206, %v1434, 0
    %v1445 = vsel %vm206, %v1435, 0
    %v1448 = vsel %vm206, %v1436, 0
    %v1451 = vsel %vm206, %v1437, 0
    %1453 = vmatprep.subr.bf16.mxu0 %v1445
    %1454 = vmatpush1.bf16.msra.mxu0 %v1442
    %1455 = vmatprep.subr.bf16.mxu0 0
    %1456 = vmatpush1.bf16.msra.mxu0 0
    %1457 = vmatprep.subr.bf16.mxu0 0
    %1458 = vmatpush1.bf16.msra.mxu0 0
    %1459 = vmatprep.subr.bf16.mxu0 0
    %1460 = vmatpush1.bf16.msra.mxu0 0
    %1461 = vmatprep.subr.bf16.mxu0 0
    %1462 = vmatpush1.bf16.msra.mxu0 0
    %1463 = vmatprep.subr.bf16.mxu0 0
    %1464 = vmatpush1.bf16.msra.mxu0 0
    %1465 = vmatprep.subr.bf16.mxu0 0
    %1466 = vmatpush1.bf16.msra.mxu0 0
    %1467 = vmatprep.subr.bf16.mxu0 0
    %1468 = vmatpush1.bf16.msra.mxu0 0
    %1469 = vmatprep.subr.bf16.mxu0 0
    %1470 = vmatpush1.bf16.msra.mxu0 0
    %1471 = vmatprep.subr.bf16.mxu0 0
    %1472 = vmatpush1.bf16.msra.mxu0 0
    %1473 = vmatprep.subr.bf16.mxu0 0
    %1474 = vmatpush1.bf16.msra.mxu0 0
    %1475 = vmatprep.subr.bf16.mxu0 0
    %1476 = vmatpush1.bf16.msra.mxu0 0
    %1477 = vmatprep.subr.bf16.mxu0 0
    %1478 = vmatpush1.bf16.msra.mxu0 0
    %1479 = vmatprep.subr.bf16.mxu0 0
    %1480 = vmatpush1.bf16.msra.mxu0 0
    %1481 = vmatprep.subr.bf16.mxu0 0
    %1482 = vmatpush1.bf16.msra.mxu0 0
    %1483 = vmatprep.subr.bf16.mxu0 0
    %1484 = vmatpush1.bf16.msra.mxu0 0
    %1485 = vmatprep.mubr.bf16.mxu0 0
    %1486 = vmatmul.mubr.bf16.gmra.mrb[0].mxu0 %v1439
    %v1487 = vpop.f32.mrb[0].mxu0
    %v1488 = vadd.f32 0.0, %v1487
    %v1489 = vpop.f32.mrb[0].mxu0
    %v1490 = vadd.f32 0.0, %v1489
    %v1491 = vpop.f32.mrb[0].mxu0
    %v1492 = vpop.f32.mrb[0].mxu0
    %1493 = vdwg.mxu0
    %1494 = vmatprep.subr.bf16.mxu0 %v1451
    %1495 = vmatpush1.bf16.msra.mxu0 %v1448
    %1496 = vmatprep.subr.bf16.mxu0 0
    %1497 = vmatpush1.bf16.msra.mxu0 0
    %1498 = vmatprep.subr.bf16.mxu0 0
    %1499 = vmatpush1.bf16.msra.mxu0 0
    %1500 = vmatprep.subr.bf16.mxu0 0
    %1501 = vmatpush1.bf16.msra.mxu0 0
    %1502 = vmatprep.subr.bf16.mxu0 0
    %1503 = vmatpush1.bf16.msra.mxu0 0
    %1504 = vmatprep.subr.bf16.mxu0 0
    %1505 = vmatpush1.bf16.msra.mxu0 0
    %1506 = vmatprep.subr.bf16.mxu0 0
    %1507 = vmatpush1.bf16.msra.mxu0 0
    %1508 = vmatprep.subr.bf16.mxu0 0
    %1509 = vmatpush1.bf16.msra.mxu0 0
    %1510 = vmatprep.subr.bf16.mxu0 0
    %1511 = vmatpush1.bf16.msra.mxu0 0
    %1512 = vmatprep.subr.bf16.mxu0 0
    %1513 = vmatpush1.bf16.msra.mxu0 0
    %1514 = vmatprep.subr.bf16.mxu0 0
    %1515 = vmatpush1.bf16.msra.mxu0 0
    %1516 = vmatprep.subr.bf16.mxu0 0
    %1517 = vmatpush1.bf16.msra.mxu0 0
    %1518 = vmatprep.subr.bf16.mxu0 0
    %1519 = vmatpush1.bf16.msra.mxu0 0
    %1520 = vmatprep.subr.bf16.mxu0 0
    %1521 = vmatpush1.bf16.msra.mxu0 0
    %1522 = vmatprep.subr.bf16.mxu0 0
    %1523 = vmatpush1.bf16.msra.mxu0 0
    %1524 = vmatprep.subr.bf16.mxu0 0
    %1525 = vmatpush1.bf16.msra.mxu0 0
    %1526 = vmatprep.mubr.bf16.mxu0 0
    %1527 = vmatmul.mubr.bf16.gmra.mrb[0].mxu0 %v1439
    %v1528 = vpop.f32.mrb[0].mxu0
    %v1529 = vadd.f32 0.0, %v1528
    %v1530 = vpop.f32.mrb[0].mxu0
    %v1531 = vadd.f32 0.0, %v1530
    %v1532 = vpop.f32.mrb[0].mxu0
    %v1533 = vpop.f32.mrb[0].mxu0
    %1534 = vdwg.mxu0
    %v1535 = vadd.f32 %v1366, %v1488
    %v1536 = vadd.f32 %v1367, %v1490
    %v1537 = vadd.f32 %v1368, %v1529
    %v1538 = vadd.f32 %v1369, %v1531
    %1539 = vst [vmem:[#allocation5 + $0x20] sm:$0xff] %v1535
    %1540 = vst [vmem:[#allocation5 + $0x28] sm:$0xff] %v1536
    %1541 = vst [vmem:[#allocation5 + $0x30] sm:$0xff] %v1537
    %1542 = vst [vmem:[#allocation5 + $0x38] sm:$0xff] %v1538
    %v1543 = vld [vmem:[#allocation5] sm:$0xff]
    %v1544 = vld [vmem:[#allocation5 + $0x8] sm:$0xff]
    %v1545 = vld [vmem:[#allocation5 + $0x10] sm:$0xff]
    %v1546 = vld [vmem:[#allocation5 + $0x18] sm:$0xff]
    %v1547 = vld [vmem:[#allocation5 + $0x20] sm:$0xff]
    %v1548 = vld [vmem:[#allocation5 + $0x28] sm:$0xff]
    %v1549 = vld [vmem:[#allocation5 + $0x30] sm:$0xff]
    %v1550 = vld [vmem:[#allocation5 + $0x38] sm:$0xff]
    %v1551 = vld [vmem:[%s5] sm:$0xff]
    %v1552 = vld [vmem:[%s5 + $0x8] sm:$0xff]
    %1554 = vset.pattern.permute.xlu0 0
    %1555 = vperm.xlu0 %1554, %v1551
    %v1556 = vpop.permute.xlu0 %1555
    %1559 = vset.pattern.permute.xlu0 0
    %1560 = vperm.xlu0 %1559, %v1552
    %v1561 = vpop.permute.xlu0 %1560
    %v1563 = vmul.f32 %v1543, %v1556
    %v1564 = vmul.f32 %v1544, %v1556
    %v1565 = vmul.f32 %v1545, %v1556
    %v1566 = vmul.f32 %v1546, %v1556
    %v1567 = vmul.f32 %v1547, %v1561
    %v1568 = vmul.f32 %v1548, %v1561
    %v1569 = vmul.f32 %v1549, %v1561
    %v1570 = vmul.f32 %v1550, %v1561
    %v1571 = vld [vmem:[%s6] sm:$0xff]
    %v1572 = vld [vmem:[%s6 + $0x8] sm:$0xff]
    %1574 = vset.pattern.permute.xlu0 0
    %1575 = vperm.xlu0 %1574, %v1571
    %v1576 = vpop.permute.xlu0 %1575
    %1579 = vset.pattern.permute.xlu0 0
    %1580 = vperm.xlu0 %1579, %v1572
    %v1581 = vpop.permute.xlu0 %1580
    %v1583 = vadd.f32 %v1563, %v1576
    %v1584 = vadd.f32 %v1564, %v1576
    %v1585 = vadd.f32 %v1565, %v1576
    %v1586 = vadd.f32 %v1566, %v1576
    %v1587 = vadd.f32 %v1567, %v1581
    %v1588 = vadd.f32 %v1568, %v1581
    %v1589 = vadd.f32 %v1569, %v1581
    %v1590 = vadd.f32 %v1570, %v1581
    %v1591 = vmax.f32 %v1583, 0.0
    %v1592 = vmax.f32 %v1584, 0.0
    %v1593 = vmax.f32 %v1585, 0.0
    %v1594 = vmax.f32 %v1586, 0.0
    %v1595 = vmax.f32 %v1587, 0.0
    %v1596 = vmax.f32 %v1588, 0.0
    %v1597 = vmax.f32 %v1589, 0.0
    %v1598 = vmax.f32 %v1590, 0.0
    %v1599 = vld [vmem:[%s1] ss:$8 sm:$0xf]
    %v1601 = vlaneseq
    %v1602 = vshrl.u32 %v1601, 7
    %v1603 = vsub.s32 0, %v1602
    %v1604 = vrot.slane %v1599, %v1603
    %v1605 = vlaneseq
    %v1606 = vshrl.u32 %v1605, 7
    %v1607 = vsub.s32 1, %v1606
    %v1608 = vrot.slane %v1599, %v1607
    %v1609 = vlaneseq
    %v1610 = vshrl.u32 %v1609, 7
    %v1611 = vsub.s32 2, %v1610
    %v1612 = vrot.slane %v1599, %v1611
    %v1613 = vlaneseq
    %v1614 = vshrl.u32 %v1613, 7
    %v1615 = vsub.s32 3, %v1614
    %v1616 = vrot.slane %v1599, %v1615
    %1617 = vrot.lane.b32.xlu0 %v1604, 111
    %v1618 = vpop.permute.xlu0 %1617
    %1619 = vrot.lane.b32.xlu0 %v1608, 111
    %v1620 = vpop.permute.xlu0 %1619
    %1621 = vrot.lane.b32.xlu0 %v1612, 111
    %v1622 = vpop.permute.xlu0 %1621
    %1623 = vrot.lane.b32.xlu0 %v1616, 111
    %v1624 = vpop.permute.xlu0 %1623
    %v1625 = vsel %vm114, %v1618, %v1620
    %v1626 = vsel %vm114, %v1620, %v1622
    %v1627 = vsel %vm114, %v1622, %v1624
    %v1633 = vmul.f32 %v1618, 0.0
    %v1634 = vmul.f32 %v1591, %v1625
    %v1635 = vmul.f32 %v1592, %v1626
    %v1636 = vmul.f32 %v1593, %v1627
    %v1637 = vmul.f32 %v1594, %v1624
    %v1638 = vmul.f32 %v1595, %v1625
    %v1639 = vmul.f32 %v1596, %v1626
    %v1640 = vmul.f32 %v1597, %v1627
    %v1641 = vmul.f32 %v1598, %v1624
    %v1642 = vld [vmem:[%s7] sm:$0xf]
    %v1643 = vpack.c.bf16 %v1633, %v1633
    %v1644 = vpack.c.bf16 %v1638, %v1634
    %v1645 = vpack.c.bf16 %v1639, %v1635
    %v1646 = vpack.c.bf16 %v1640, %v1636
    %v1647 = vpack.c.bf16 %v1641, %v1637
    %v1648 = vld [vmem:[%s134] ss:$8 sm:$0xf]
    %v1650 = vlaneseq
    %v1651 = vshrl.u32 %v1650, 7
    %v1652 = vsub.s32 0, %v1651
    %v1653 = vrot.slane %v1648, %v1652
    %v1654 = vlaneseq
    %v1655 = vshrl.u32 %v1654, 7
    %v1656 = vsub.s32 1, %v1655
    %v1657 = vrot.slane %v1648, %v1656
    %v1658 = vlaneseq
    %v1659 = vshrl.u32 %v1658, 7
    %v1660 = vsub.s32 2, %v1659
    %v1661 = vrot.slane %v1648, %v1660
    %v1662 = vlaneseq
    %v1663 = vshrl.u32 %v1662, 7
    %v1664 = vsub.s32 3, %v1663
    %v1665 = vrot.slane %v1648, %v1664
    %1666 = vrot.lane.b32.xlu0 %v1653, 112
    %v1667 = vpop.permute.xlu0 %1666
    %1668 = vrot.lane.b32.xlu0 %v1657, 112
    %v1669 = vpop.permute.xlu0 %1668
    %1670 = vrot.lane.b32.xlu0 %v1661, 112
    %v1671 = vpop.permute.xlu0 %1670
    %1672 = vrot.lane.b32.xlu0 %v1665, 112
    %v1673 = vpop.permute.xlu0 %1672
    %v1674 = vsel %vm161, %v1667, %v1669
    %v1675 = vsel %vm161, %v1669, %v1671
    %v1676 = vsel %vm161, %v1671, %v1673
    %v1682 = vmul.f32 %v1667, 0.0
    %v1683 = vmul.f32 %v1591, %v1674
    %v1684 = vmul.f32 %v1592, %v1675
    %v1685 = vmul.f32 %v1593, %v1676
    %v1686 = vmul.f32 %v1594, %v1673
    %v1687 = vmul.f32 %v1595, %v1674
    %v1688 = vmul.f32 %v1596, %v1675
    %v1689 = vmul.f32 %v1597, %v1676
    %v1690 = vmul.f32 %v1598, %v1673
    %s1691 = scalar_lea.vmem %s7, 4
    %v1692 = vld [vmem:[%s1691] sm:$0xf]
    %v1693 = vpack.c.bf16 %v1682, %v1682
    %v1694 = vpack.c.bf16 %v1687, %v1683
    %v1695 = vpack.c.bf16 %v1688, %v1684
    %v1696 = vpack.c.bf16 %v1689, %v1685
    %v1697 = vpack.c.bf16 %v1690, %v1686
    %1703 = vrot.lane.b32.xlu0 %v1693, 16
    %v1704 = vpop.permute.xlu0 %1703
    %1705 = vrot.lane.b32.xlu0 %v1694, 16
    %v1706 = vpop.permute.xlu0 %1705
    %1707 = vrot.lane.b32.xlu0 %v1695, 16
    %v1708 = vpop.permute.xlu0 %1707
    %1709 = vrot.lane.b32.xlu0 %v1696, 16
    %v1710 = vpop.permute.xlu0 %1709
    %1711 = vrot.lane.b32.xlu0 %v1697, 16
    %v1712 = vpop.permute.xlu0 %1711
    %v1713 = vsel %vm197, %v1704, %v1706
    %v1714 = vsel %vm197, %v1706, %v1708
    %v1715 = vsel %vm197, %v1708, %v1710
    %v1716 = vsel %vm197, %v1710, %v1712
    %v1722 = vsel %vm1228, %v1692, 0
    %1724 = vmatprep.subr.bf16.mxu0 %v1714
    %1725 = vmatpush1.bf16.msra.mxu0 %v1713
    %1726 = vmatprep.subr.bf16.mxu0 0
    %1727 = vmatpush1.bf16.msra.mxu0 0
    %1728 = vmatprep.subr.bf16.mxu0 0
    %1729 = vmatpush1.bf16.msra.mxu0 0
    %1730 = vmatprep.subr.bf16.mxu0 0
    %1731 = vmatpush1.bf16.msra.mxu0 0
    %1732 = vmatprep.subr.bf16.mxu0 0
    %1733 = vmatpush1.bf16.msra.mxu0 0
    %1734 = vmatprep.subr.bf16.mxu0 0
    %1735 = vmatpush1.bf16.msra.mxu0 0
    %1736 = vmatprep.subr.bf16.mxu0 0
    %1737 = vmatpush1.bf16.msra.mxu0 0
    %1738 = vmatprep.subr.bf16.mxu0 0
    %1739 = vmatpush1.bf16.msra.mxu0 0
    %1740 = vmatprep.subr.bf16.mxu0 0
    %1741 = vmatpush1.bf16.msra.mxu0 0
    %1742 = vmatprep.subr.bf16.mxu0 0
    %1743 = vmatpush1.bf16.msra.mxu0 0
    %1744 = vmatprep.subr.bf16.mxu0 0
    %1745 = vmatpush1.bf16.msra.mxu0 0
    %1746 = vmatprep.subr.bf16.mxu0 0
    %1747 = vmatpush1.bf16.msra.mxu0 0
    %1748 = vmatprep.subr.bf16.mxu0 0
    %1749 = vmatpush1.bf16.msra.mxu0 0
    %1750 = vmatprep.subr.bf16.mxu0 0
    %1751 = vmatpush1.bf16.msra.mxu0 0
    %1752 = vmatprep.subr.bf16.mxu0 0
    %1753 = vmatpush1.bf16.msra.mxu0 0
    %1754 = vmatprep.subr.bf16.mxu0 0
    %1755 = vmatpush1.bf16.msra.mxu0 0
    %1756 = vmatprep.mubr.bf16.mxu0 0
    %1757 = vmatmul.mubr.bf16.gmra.mrb[0].mxu0 %v1722
    %v1758 = vpop.f32.mrb[0].mxu0
    %v1759 = vadd.f32 0.0, %v1758
    %v1760 = vpop.f32.mrb[0].mxu0
    %v1761 = vadd.f32 0.0, %v1760
    %v1762 = vpop.f32.mrb[0].mxu0
    %v1763 = vpop.f32.mrb[0].mxu0
    %1764 = vdwg.mxu0
    %1765 = vmatprep.subr.bf16.mxu0 %v1716
    %1766 = vmatpush1.bf16.msra.mxu0 %v1715
    %1767 = vmatprep.subr.bf16.mxu0 0
    %1768 = vmatpush1.bf16.msra.mxu0 0
    %1769 = vmatprep.subr.bf16.mxu0 0
    %1770 = vmatpush1.bf16.msra.mxu0 0
    %1771 = vmatprep.subr.bf16.mxu0 0
    %1772 = vmatpush1.bf16.msra.mxu0 0
    %1773 = vmatprep.subr.bf16.mxu0 0
    %1774 = vmatpush1.bf16.msra.mxu0 0
    %1775 = vmatprep.subr.bf16.mxu0 0
    %1776 = vmatpush1.bf16.msra.mxu0 0
    %1777 = vmatprep.subr.bf16.mxu0 0
    %1778 = vmatpush1.bf16.msra.mxu0 0
    %1779 = vmatprep.subr.bf16.mxu0 0
    %1780 = vmatpush1.bf16.msra.mxu0 0
    %1781 = vmatprep.subr.bf16.mxu0 0
    %1782 = vmatpush1.bf16.msra.mxu0 0
    %1783 = vmatprep.subr.bf16.mxu0 0
    %1784 = vmatpush1.bf16.msra.mxu0 0
    %1785 = vmatprep.subr.bf16.mxu0 0
    %1786 = vmatpush1.bf16.msra.mxu0 0
    %1787 = vmatprep.subr.bf16.mxu0 0
    %1788 = vmatpush1.bf16.msra.mxu0 0
    %1789 = vmatprep.subr.bf16.mxu0 0
    %1790 = vmatpush1.bf16.msra.mxu0 0
    %1791 = vmatprep.subr.bf16.mxu0 0
    %1792 = vmatpush1.bf16.msra.mxu0 0
    %1793 = vmatprep.subr.bf16.mxu0 0
    %1794 = vmatpush1.bf16.msra.mxu0 0
    %1795 = vmatprep.subr.bf16.mxu0 0
    %1796 = vmatpush1.bf16.msra.mxu0 0
    %1797 = vmatprep.mubr.bf16.mxu0 0
    %1798 = vmatmul.mubr.bf16.gmra.mrb[0].mxu0 %v1722
    %v1799 = vpop.f32.mrb[0].mxu0
    %v1800 = vadd.f32 0.0, %v1799
    %v1801 = vpop.f32.mrb[0].mxu0
    %v1802 = vadd.f32 0.0, %v1801
    %v1803 = vpop.f32.mrb[0].mxu0
    %v1804 = vpop.f32.mrb[0].mxu0
    %1805 = vdwg.mxu0
    %1811 = vrot.lane.b32.xlu0 %v1643, 17
    %v1812 = vpop.permute.xlu0 %1811
    %1813 = vrot.lane.b32.xlu0 %v1644, 17
    %v1814 = vpop.permute.xlu0 %1813
    %1815 = vrot.lane.b32.xlu0 %v1645, 17
    %v1816 = vpop.permute.xlu0 %1815
    %1817 = vrot.lane.b32.xlu0 %v1646, 17
    %v1818 = vpop.permute.xlu0 %1817
    %1819 = vrot.lane.b32.xlu0 %v1647, 17
    %v1820 = vpop.permute.xlu0 %1819
    %v1821 = vsel %vm316, %v1812, %v1814
    %v1822 = vsel %vm316, %v1814, %v1816
    %v1823 = vsel %vm316, %v1816, %v1818
    %v1824 = vsel %vm316, %v1818, %v1820
    %v1830 = vsel %vm1228, %v1642, 0
    %1832 = vmatprep.subr.bf16.mxu0 %v1822
    %1833 = vmatpush1.bf16.msra.mxu0 %v1821
    %1834 = vmatprep.subr.bf16.mxu0 0
    %1835 = vmatpush1.bf16.msra.mxu0 0
    %1836 = vmatprep.subr.bf16.mxu0 0
    %1837 = vmatpush1.bf16.msra.mxu0 0
    %1838 = vmatprep.subr.bf16.mxu0 0
    %1839 = vmatpush1.bf16.msra.mxu0 0
    %1840 = vmatprep.subr.bf16.mxu0 0
    %1841 = vmatpush1.bf16.msra.mxu0 0
    %1842 = vmatprep.subr.bf16.mxu0 0
    %1843 = vmatpush1.bf16.msra.mxu0 0
    %1844 = vmatprep.subr.bf16.mxu0 0
    %1845 = vmatpush1.bf16.msra.mxu0 0
    %1846 = vmatprep.subr.bf16.mxu0 0
    %1847 = vmatpush1.bf16.msra.mxu0 0
    %1848 = vmatprep.subr.bf16.mxu0 0
    %1849 = vmatpush1.bf16.msra.mxu0 0
    %1850 = vmatprep.subr.bf16.mxu0 0
    %1851 = vmatpush1.bf16.msra.mxu0 0
    %1852 = vmatprep.subr.bf16.mxu0 0
    %1853 = vmatpush1.bf16.msra.mxu0 0
    %1854 = vmatprep.subr.bf16.mxu0 0
    %1855 = vmatpush1.bf16.msra.mxu0 0
    %1856 = vmatprep.subr.bf16.mxu0 0
    %1857 = vmatpush1.bf16.msra.mxu0 0
    %1858 = vmatprep.subr.bf16.mxu0 0
    %1859 = vmatpush1.bf16.msra.mxu0 0
    %1860 = vmatprep.subr.bf16.mxu0 0
    %1861 = vmatpush1.bf16.msra.mxu0 0
    %1862 = vmatprep.subr.bf16.mxu0 0
    %1863 = vmatpush1.bf16.msra.mxu0 0
    %1864 = vmatprep.mubr.bf16.mxu0 0
    %1865 = vmatmul.mubr.bf16.gmra.mrb[0].mxu0 %v1830
    %v1866 = vpop.f32.mrb[0].mxu0
    %v1867 = vadd.f32 %v1759, %v1866
    %v1868 = vpop.f32.mrb[0].mxu0
    %v1869 = vadd.f32 %v1761, %v1868
    %v1870 = vpop.f32.mrb[0].mxu0
    %v1871 = vpop.f32.mrb[0].mxu0
    %1872 = vdwg.mxu0
    %1873 = vmatprep.subr.bf16.mxu0 %v1824
    %1874 = vmatpush1.bf16.msra.mxu0 %v1823
    %1875 = vmatprep.subr.bf16.mxu0 0
    %1876 = vmatpush1.bf16.msra.mxu0 0
    %1877 = vmatprep.subr.bf16.mxu0 0
    %1878 = vmatpush1.bf16.msra.mxu0 0
    %1879 = vmatprep.subr.bf16.mxu0 0
    %1880 = vmatpush1.bf16.msra.mxu0 0
    %1881 = vmatprep.subr.bf16.mxu0 0
    %1882 = vmatpush1.bf16.msra.mxu0 0
    %1883 = vmatprep.subr.bf16.mxu0 0
    %1884 = vmatpush1.bf16.msra.mxu0 0
    %1885 = vmatprep.subr.bf16.mxu0 0
    %1886 = vmatpush1.bf16.msra.mxu0 0
    %1887 = vmatprep.subr.bf16.mxu0 0
    %1888 = vmatpush1.bf16.msra.mxu0 0
    %1889 = vmatprep.subr.bf16.mxu0 0
    %1890 = vmatpush1.bf16.msra.mxu0 0
    %1891 = vmatprep.subr.bf16.mxu0 0
    %1892 = vmatpush1.bf16.msra.mxu0 0
    %1893 = vmatprep.subr.bf16.mxu0 0
    %1894 = vmatpush1.bf16.msra.mxu0 0
    %1895 = vmatprep.subr.bf16.mxu0 0
    %1896 = vmatpush1.bf16.msra.mxu0 0
    %1897 = vmatprep.subr.bf16.mxu0 0
    %1898 = vmatpush1.bf16.msra.mxu0 0
    %1899 = vmatprep.subr.bf16.mxu0 0
    %1900 = vmatpush1.bf16.msra.mxu0 0
    %1901 = vmatprep.subr.bf16.mxu0 0
    %1902 = vmatpush1.bf16.msra.mxu0 0
    %1903 = vmatprep.subr.bf16.mxu0 0
    %1904 = vmatpush1.bf16.msra.mxu0 0
    %1905 = vmatprep.mubr.bf16.mxu0 0
    %1906 = vmatmul.mubr.bf16.gmra.mrb[0].mxu0 %v1830
    %v1907 = vpop.f32.mrb[0].mxu0
    %v1908 = vadd.f32 %v1800, %v1907
    %v1909 = vpop.f32.mrb[0].mxu0
    %v1910 = vadd.f32 %v1802, %v1909
    %v1911 = vpop.f32.mrb[0].mxu0
    %v1912 = vpop.f32.mrb[0].mxu0
    %1913 = vdwg.mxu0
    %v1914 = vld [vmem:[%s418] ss:$8 sm:$0xf]
    %v1916 = vlaneseq
    %v1917 = vshrl.u32 %v1916, 7
    %v1918 = vsub.s32 0, %v1917
    %v1919 = vrot.slane %v1914, %v1918
    %v1920 = vlaneseq
    %v1921 = vshrl.u32 %v1920, 7
    %v1922 = vsub.s32 1, %v1921
    %v1923 = vrot.slane %v1914, %v1922
    %v1924 = vlaneseq
    %v1925 = vshrl.u32 %v1924, 7
    %v1926 = vsub.s32 2, %v1925
    %v1927 = vrot.slane %v1914, %v1926
    %v1928 = vlaneseq
    %v1929 = vshrl.u32 %v1928, 7
    %v1930 = vsub.s32 3, %v1929
    %v1931 = vrot.slane %v1914, %v1930
    %1932 = vrot.lane.b32.xlu0 %v1919, 113
    %v1933 = vpop.permute.xlu0 %1932
    %1934 = vrot.lane.b32.xlu0 %v1923, 113
    %v1935 = vpop.permute.xlu0 %1934
    %1936 = vrot.lane.b32.xlu0 %v1927, 113
    %v1937 = vpop.permute.xlu0 %1936
    %1938 = vrot.lane.b32.xlu0 %v1931, 113
    %v1939 = vpop.permute.xlu0 %1938
    %v1940 = vsel %vm445, %v1933, %v1935
    %v1941 = vsel %vm445, %v1935, %v1937
    %v1942 = vsel %vm445, %v1937, %v1939
    %v1948 = vmul.f32 %v1933, 0.0
    %v1949 = vmul.f32 %v1591, %v1940
    %v1950 = vmul.f32 %v1592, %v1941
    %v1951 = vmul.f32 %v1593, %v1942
    %v1952 = vmul.f32 %v1594, %v1939
    %v1953 = vmul.f32 %v1595, %v1940
    %v1954 = vmul.f32 %v1596, %v1941
    %v1955 = vmul.f32 %v1597, %v1942
    %v1956 = vmul.f32 %v1598, %v1939
    %s1957 = scalar_lea.vmem %s7, 8
    %v1958 = vld [vmem:[%s1957] sm:$0xf]
    %v1959 = vpack.c.bf16 %v1948, %v1948
    %v1960 = vpack.c.bf16 %v1953, %v1949
    %v1961 = vpack.c.bf16 %v1954, %v1950
    %v1962 = vpack.c.bf16 %v1955, %v1951
    %v1963 = vpack.c.bf16 %v1956, %v1952
    %1969 = vrot.lane.b32.xlu0 %v1959, 15
    %v1970 = vpop.permute.xlu0 %1969
    %1971 = vrot.lane.b32.xlu0 %v1960, 15
    %v1972 = vpop.permute.xlu0 %1971
    %1973 = vrot.lane.b32.xlu0 %v1961, 15
    %v1974 = vpop.permute.xlu0 %1973
    %1975 = vrot.lane.b32.xlu0 %v1962, 15
    %v1976 = vpop.permute.xlu0 %1975
    %1977 = vrot.lane.b32.xlu0 %v1963, 15
    %v1978 = vpop.permute.xlu0 %1977
    %v1979 = vsel %vm481, %v1970, %v1972
    %v1980 = vsel %vm481, %v1972, %v1974
    %v1981 = vsel %vm481, %v1974, %v1976
    %v1982 = vsel %vm481, %v1976, %v1978
    %v1988 = vsel %vm1228, %v1958, 0
    %1990 = vmatprep.subr.bf16.mxu0 %v1980
    %1991 = vmatpush1.bf16.msra.mxu0 %v1979
    %1992 = vmatprep.subr.bf16.mxu0 0
    %1993 = vmatpush1.bf16.msra.mxu0 0
    %1994 = vmatprep.subr.bf16.mxu0 0
    %1995 = vmatpush1.bf16.msra.mxu0 0
    %1996 = vmatprep.subr.bf16.mxu0 0
    %1997 = vmatpush1.bf16.msra.mxu0 0
    %1998 = vmatprep.subr.bf16.mxu0 0
    %1999 = vmatpush1.bf16.msra.mxu0 0
    %2000 = vmatprep.subr.bf16.mxu0 0
    %2001 = vmatpush1.bf16.msra.mxu0 0
    %2002 = vmatprep.subr.bf16.mxu0 0
    %2003 = vmatpush1.bf16.msra.mxu0 0
    %2004 = vmatprep.subr.bf16.mxu0 0
    %2005 = vmatpush1.bf16.msra.mxu0 0
    %2006 = vmatprep.subr.bf16.mxu0 0
    %2007 = vmatpush1.bf16.msra.mxu0 0
    %2008 = vmatprep.subr.bf16.mxu0 0
    %2009 = vmatpush1.bf16.msra.mxu0 0
    %2010 = vmatprep.subr.bf16.mxu0 0
    %2011 = vmatpush1.bf16.msra.mxu0 0
    %2012 = vmatprep.subr.bf16.mxu0 0
    %2013 = vmatpush1.bf16.msra.mxu0 0
    %2014 = vmatprep.subr.bf16.mxu0 0
    %2015 = vmatpush1.bf16.msra.mxu0 0
    %2016 = vmatprep.subr.bf16.mxu0 0
    %2017 = vmatpush1.bf16.msra.mxu0 0
    %2018 = vmatprep.subr.bf16.mxu0 0
    %2019 = vmatpush1.bf16.msra.mxu0 0
    %2020 = vmatprep.subr.bf16.mxu0 0
    %2021 = vmatpush1.bf16.msra.mxu0 0
    %2022 = vmatprep.mubr.bf16.mxu0 0
    %2023 = vmatmul.mubr.bf16.gmra.mrb[0].mxu0 %v1988
    %v2024 = vpop.f32.mrb[0].mxu0
    %v2025 = vadd.f32 0.0, %v2024
    %v2026 = vpop.f32.mrb[0].mxu0
    %v2027 = vadd.f32 0.0, %v2026
    %v2028 = vpop.f32.mrb[0].mxu0
    %v2029 = vpop.f32.mrb[0].mxu0
    %2030 = vdwg.mxu0
    %2031 = vmatprep.subr.bf16.mxu0 %v1982
    %2032 = vmatpush1.bf16.msra.mxu0 %v1981
    %2033 = vmatprep.subr.bf16.mxu0 0
    %2034 = vmatpush1.bf16.msra.mxu0 0
    %2035 = vmatprep.subr.bf16.mxu0 0
    %2036 = vmatpush1.bf16.msra.mxu0 0
    %2037 = vmatprep.subr.bf16.mxu0 0
    %2038 = vmatpush1.bf16.msra.mxu0 0
    %2039 = vmatprep.subr.bf16.mxu0 0
    %2040 = vmatpush1.bf16.msra.mxu0 0
    %2041 = vmatprep.subr.bf16.mxu0 0
    %2042 = vmatpush1.bf16.msra.mxu0 0
    %2043 = vmatprep.subr.bf16.mxu0 0
    %2044 = vmatpush1.bf16.msra.mxu0 0
    %2045 = vmatprep.subr.bf16.mxu0 0
    %2046 = vmatpush1.bf16.msra.mxu0 0
    %2047 = vmatprep.subr.bf16.mxu0 0
    %2048 = vmatpush1.bf16.msra.mxu0 0
    %2049 = vmatprep.subr.bf16.mxu0 0
    %2050 = vmatpush1.bf16.msra.mxu0 0
    %2051 = vmatprep.subr.bf16.mxu0 0
    %2052 = vmatpush1.bf16.msra.mxu0 0
    %2053 = vmatprep.subr.bf16.mxu0 0
    %2054 = vmatpush1.bf16.msra.mxu0 0
    %2055 = vmatprep.subr.bf16.mxu0 0
    %2056 = vmatpush1.bf16.msra.mxu0 0
    %2057 = vmatprep.subr.bf16.mxu0 0
    %2058 = vmatpush1.bf16.msra.mxu0 0
    %2059 = vmatprep.subr.bf16.mxu0 0
    %2060 = vmatpush1.bf16.msra.mxu0 0
    %2061 = vmatprep.subr.bf16.mxu0 0
    %2062 = vmatpush1.bf16.msra.mxu0 0
    %2063 = vmatprep.mubr.bf16.mxu0 0
    %2064 = vmatmul.mubr.bf16.gmra.mrb[0].mxu0 %v1988
    %v2065 = vpop.f32.mrb[0].mxu0
    %v2066 = vadd.f32 0.0, %v2065
    %v2067 = vpop.f32.mrb[0].mxu0
    %v2068 = vadd.f32 0.0, %v2067
    %v2069 = vpop.f32.mrb[0].mxu0
    %v2070 = vpop.f32.mrb[0].mxu0
    %2071 = vdwg.mxu0
    %v2072 = vadd.f32 %v1867, %v2025
    %v2073 = vadd.f32 %v1869, %v2027
    %v2074 = vadd.f32 %v1908, %v2066
    %v2075 = vadd.f32 %v1910, %v2068
    %v2076 = vld [vmem:[%s587] ss:$8 sm:$0xf]
    %v2078 = vlaneseq
    %v2079 = vshrl.u32 %v2078, 7
    %v2080 = vsub.s32 0, %v2079
    %v2081 = vrot.slane %v2076, %v2080
    %v2082 = vlaneseq
    %v2083 = vshrl.u32 %v2082, 7
    %v2084 = vsub.s32 1, %v2083
    %v2085 = vrot.slane %v2076, %v2084
    %v2086 = vlaneseq
    %v2087 = vshrl.u32 %v2086, 7
    %v2088 = vsub.s32 2, %v2087
    %v2089 = vrot.slane %v2076, %v2088
    %v2090 = vlaneseq
    %v2091 = vshrl.u32 %v2090, 7
    %v2092 = vsub.s32 3, %v2091
    %v2093 = vrot.slane %v2076, %v2092
    %2094 = vrot.lane.b32.xlu0 %v2081, 127
    %v2095 = vpop.permute.xlu0 %2094
    %2096 = vrot.lane.b32.xlu0 %v2085, 127
    %v2097 = vpop.permute.xlu0 %2096
    %2098 = vrot.lane.b32.xlu0 %v2089, 127
    %v2099 = vpop.permute.xlu0 %2098
    %2100 = vrot.lane.b32.xlu0 %v2093, 127
    %v2101 = vpop.permute.xlu0 %2100
    %v2102 = vsel %vm614, %v2095, %v2097
    %v2103 = vsel %vm614, %v2097, %v2099
    %v2104 = vsel %vm614, %v2099, %v2101
    %v2110 = vmul.f32 %v2095, 0.0
    %v2111 = vmul.f32 %v1591, %v2102
    %v2112 = vmul.f32 %v1592, %v2103
    %v2113 = vmul.f32 %v1593, %v2104
    %v2114 = vmul.f32 %v1594, %v2101
    %v2115 = vmul.f32 %v1595, %v2102
    %v2116 = vmul.f32 %v1596, %v2103
    %v2117 = vmul.f32 %v1597, %v2104
    %v2118 = vmul.f32 %v1598, %v2101
    %s2119 = scalar_lea.vmem %s7, 12
    %v2120 = vld [vmem:[%s2119] sm:$0xf]
    %v2121 = vpack.c.bf16 %v2110, %v2110
    %v2122 = vpack.c.bf16 %v2115, %v2111
    %v2123 = vpack.c.bf16 %v2116, %v2112
    %v2124 = vpack.c.bf16 %v2117, %v2113
    %v2125 = vpack.c.bf16 %v2118, %v2114
    %2131 = vrot.lane.b32.xlu0 %v2121, 1
    %v2132 = vpop.permute.xlu0 %2131
    %2133 = vrot.lane.b32.xlu0 %v2122, 1
    %v2134 = vpop.permute.xlu0 %2133
    %2135 = vrot.lane.b32.xlu0 %v2123, 1
    %v2136 = vpop.permute.xlu0 %2135
    %2137 = vrot.lane.b32.xlu0 %v2124, 1
    %v2138 = vpop.permute.xlu0 %2137
    %2139 = vrot.lane.b32.xlu0 %v2125, 1
    %v2140 = vpop.permute.xlu0 %2139
    %v2141 = vsel %vm650, %v2132, %v2134
    %v2142 = vsel %vm650, %v2134, %v2136
    %v2143 = vsel %vm650, %v2136, %v2138
    %v2144 = vsel %vm650, %v2138, %v2140
    %v2150 = vsel %vm1228, %v2120, 0
    %2152 = vmatprep.subr.bf16.mxu0 %v2142
    %2153 = vmatpush1.bf16.msra.mxu0 %v2141
    %2154 = vmatprep.subr.bf16.mxu0 0
    %2155 = vmatpush1.bf16.msra.mxu0 0
    %2156 = vmatprep.subr.bf16.mxu0 0
    %2157 = vmatpush1.bf16.msra.mxu0 0
    %2158 = vmatprep.subr.bf16.mxu0 0
    %2159 = vmatpush1.bf16.msra.mxu0 0
    %2160 = vmatprep.subr.bf16.mxu0 0
    %2161 = vmatpush1.bf16.msra.mxu0 0
    %2162 = vmatprep.subr.bf16.mxu0 0
    %2163 = vmatpush1.bf16.msra.mxu0 0
    %2164 = vmatprep.subr.bf16.mxu0 0
    %2165 = vmatpush1.bf16.msra.mxu0 0
    %2166 = vmatprep.subr.bf16.mxu0 0
    %2167 = vmatpush1.bf16.msra.mxu0 0
    %2168 = vmatprep.subr.bf16.mxu0 0
    %2169 = vmatpush1.bf16.msra.mxu0 0
    %2170 = vmatprep.subr.bf16.mxu0 0
    %2171 = vmatpush1.bf16.msra.mxu0 0
    %2172 = vmatprep.subr.bf16.mxu0 0
    %2173 = vmatpush1.bf16.msra.mxu0 0
    %2174 = vmatprep.subr.bf16.mxu0 0
    %2175 = vmatpush1.bf16.msra.mxu0 0
    %2176 = vmatprep.subr.bf16.mxu0 0
    %2177 = vmatpush1.bf16.msra.mxu0 0
    %2178 = vmatprep.subr.bf16.mxu0 0
    %2179 = vmatpush1.bf16.msra.mxu0 0
    %2180 = vmatprep.subr.bf16.mxu0 0
    %2181 = vmatpush1.bf16.msra.mxu0 0
    %2182 = vmatprep.subr.bf16.mxu0 0
    %2183 = vmatpush1.bf16.msra.mxu0 0
    %2184 = vmatprep.mubr.bf16.mxu0 0
    %2185 = vmatmul.mubr.bf16.gmra.mrb[0].mxu0 %v2150
    %v2186 = vpop.f32.mrb[0].mxu0
    %v2187 = vadd.f32 0.0, %v2186
    %v2188 = vpop.f32.mrb[0].mxu0
    %v2189 = vadd.f32 0.0, %v2188
    %v2190 = vpop.f32.mrb[0].mxu0
    %v2191 = vpop.f32.mrb[0].mxu0
    %2192 = vdwg.mxu0
    %2193 = vmatprep.subr.bf16.mxu0 %v2144
    %2194 = vmatpush1.bf16.msra.mxu0 %v2143
    %2195 = vmatprep.subr.bf16.mxu0 0
    %2196 = vmatpush1.bf16.msra.mxu0 0
    %2197 = vmatprep.subr.bf16.mxu0 0
    %2198 = vmatpush1.bf16.msra.mxu0 0
    %2199 = vmatprep.subr.bf16.mxu0 0
    %2200 = vmatpush1.bf16.msra.mxu0 0
    %2201 = vmatprep.subr.bf16.mxu0 0
    %2202 = vmatpush1.bf16.msra.mxu0 0
    %2203 = vmatprep.subr.bf16.mxu0 0
    %2204 = vmatpush1.bf16.msra.mxu0 0
    %2205 = vmatprep.subr.bf16.mxu0 0
    %2206 = vmatpush1.bf16.msra.mxu0 0
    %2207 = vmatprep.subr.bf16.mxu0 0
    %2208 = vmatpush1.bf16.msra.mxu0 0
    %2209 = vmatprep.subr.bf16.mxu0 0
    %2210 = vmatpush1.bf16.msra.mxu0 0
    %2211 = vmatprep.subr.bf16.mxu0 0
    %2212 = vmatpush1.bf16.msra.mxu0 0
    %2213 = vmatprep.subr.bf16.mxu0 0
    %2214 = vmatpush1.bf16.msra.mxu0 0
    %2215 = vmatprep.subr.bf16.mxu0 0
    %2216 = vmatpush1.bf16.msra.mxu0 0
    %2217 = vmatprep.subr.bf16.mxu0 0
    %2218 = vmatpush1.bf16.msra.mxu0 0
    %2219 = vmatprep.subr.bf16.mxu0 0
    %2220 = vmatpush1.bf16.msra.mxu0 0
    %2221 = vmatprep.subr.bf16.mxu0 0
    %2222 = vmatpush1.bf16.msra.mxu0 0
    %2223 = vmatprep.subr.bf16.mxu0 0
    %2224 = vmatpush1.bf16.msra.mxu0 0
    %2225 = vmatprep.mubr.bf16.mxu0 0
    %2226 = vmatmul.mubr.bf16.gmra.mrb[0].mxu0 %v2150
    %v2227 = vpop.f32.mrb[0].mxu0
    %v2228 = vadd.f32 0.0, %v2227
    %v2229 = vpop.f32.mrb[0].mxu0
    %v2230 = vadd.f32 0.0, %v2229
    %v2231 = vpop.f32.mrb[0].mxu0
    %v2232 = vpop.f32.mrb[0].mxu0
    %2233 = vdwg.mxu0
    %v2234 = vadd.f32 %v2072, %v2187
    %v2235 = vadd.f32 %v2073, %v2189
    %v2236 = vadd.f32 %v2074, %v2228
    %v2237 = vadd.f32 %v2075, %v2230
    %s2238 = scalar_lea.vmem %s7, 16
    %v2239 = vld [vmem:[%s2238] sm:$0xf]
    %v2240 = vpack.c.bf16 %v1595, %v1591
    %v2241 = vpack.c.bf16 %v1596, %v1592
    %v2242 = vpack.c.bf16 %v1597, %v1593
    %v2243 = vpack.c.bf16 %v1598, %v1594
    %v2245 = vsel %vm1228, %v2239, 0
    %2247 = vmatprep.subr.bf16.mxu0 %v2241
    %2248 = vmatpush1.bf16.msra.mxu0 %v2240
    %2249 = vmatprep.subr.bf16.mxu0 0
    %2250 = vmatpush1.bf16.msra.mxu0 0
    %2251 = vmatprep.subr.bf16.mxu0 0
    %2252 = vmatpush1.bf16.msra.mxu0 0
    %2253 = vmatprep.subr.bf16.mxu0 0
    %2254 = vmatpush1.bf16.msra.mxu0 0
    %2255 = vmatprep.subr.bf16.mxu0 0
    %2256 = vmatpush1.bf16.msra.mxu0 0
    %2257 = vmatprep.subr.bf16.mxu0 0
    %2258 = vmatpush1.bf16.msra.mxu0 0
    %2259 = vmatprep.subr.bf16.mxu0 0
    %2260 = vmatpush1.bf16.msra.mxu0 0
    %2261 = vmatprep.subr.bf16.mxu0 0
    %2262 = vmatpush1.bf16.msra.mxu0 0
    %2263 = vmatprep.subr.bf16.mxu0 0
    %2264 = vmatpush1.bf16.msra.mxu0 0
    %2265 = vmatprep.subr.bf16.mxu0 0
    %2266 = vmatpush1.bf16.msra.mxu0 0
    %2267 = vmatprep.subr.bf16.mxu0 0
    %2268 = vmatpush1.bf16.msra.mxu0 0
    %2269 = vmatprep.subr.bf16.mxu0 0
    %2270 = vmatpush1.bf16.msra.mxu0 0
    %2271 = vmatprep.subr.bf16.mxu0 0
    %2272 = vmatpush1.bf16.msra.mxu0 0
    %2273 = vmatprep.subr.bf16.mxu0 0
    %2274 = vmatpush1.bf16.msra.mxu0 0
    %2275 = vmatprep.subr.bf16.mxu0 0
    %2276 = vmatpush1.bf16.msra.mxu0 0
    %2277 = vmatprep.subr.bf16.mxu0 0
    %2278 = vmatpush1.bf16.msra.mxu0 0
    %2279 = vmatprep.mubr.bf16.mxu0 0
    %2280 = vmatmul.mubr.bf16.gmra.mrb[0].mxu0 %v2245
    %v2281 = vpop.f32.mrb[0].mxu0
    %v2282 = vadd.f32 0.0, %v2281
    %v2283 = vpop.f32.mrb[0].mxu0
    %v2284 = vadd.f32 0.0, %v2283
    %v2285 = vpop.f32.mrb[0].mxu0
    %v2286 = vpop.f32.mrb[0].mxu0
    %2287 = vdwg.mxu0
    %2288 = vmatprep.subr.bf16.mxu0 %v2243
    %2289 = vmatpush1.bf16.msra.mxu0 %v2242
    %2290 = vmatprep.subr.bf16.mxu0 0
    %2291 = vmatpush1.bf16.msra.mxu0 0
    %2292 = vmatprep.subr.bf16.mxu0 0
    %2293 = vmatpush1.bf16.msra.mxu0 0
    %2294 = vmatprep.subr.bf16.mxu0 0
    %2295 = vmatpush1.bf16.msra.mxu0 0
    %2296 = vmatprep.subr.bf16.mxu0 0
    %2297 = vmatpush1.bf16.msra.mxu0 0
    %2298 = vmatprep.subr.bf16.mxu0 0
    %2299 = vmatpush1.bf16.msra.mxu0 0
    %2300 = vmatprep.subr.bf16.mxu0 0
    %2301 = vmatpush1.bf16.msra.mxu0 0
    %2302 = vmatprep.subr.bf16.mxu0 0
    %2303 = vmatpush1.bf16.msra.mxu0 0
    %2304 = vmatprep.subr.bf16.mxu0 0
    %2305 = vmatpush1.bf16.msra.mxu0 0
    %2306 = vmatprep.subr.bf16.mxu0 0
    %2307 = vmatpush1.bf16.msra.mxu0 0
    %2308 = vmatprep.subr.bf16.mxu0 0
    %2309 = vmatpush1.bf16.msra.mxu0 0
    %2310 = vmatprep.subr.bf16.mxu0 0
    %2311 = vmatpush1.bf16.msra.mxu0 0
    %2312 = vmatprep.subr.bf16.mxu0 0
    %2313 = vmatpush1.bf16.msra.mxu0 0
    %2314 = vmatprep.subr.bf16.mxu0 0
    %2315 = vmatpush1.bf16.msra.mxu0 0
    %2316 = vmatprep.subr.bf16.mxu0 0
    %2317 = vmatpush1.bf16.msra.mxu0 0
    %2318 = vmatprep.subr.bf16.mxu0 0
    %2319 = vmatpush1.bf16.msra.mxu0 0
    %2320 = vmatprep.mubr.bf16.mxu0 0
    %2321 = vmatmul.mubr.bf16.gmra.mrb[0].mxu0 %v2245
    %v2322 = vpop.f32.mrb[0].mxu0
    %v2323 = vadd.f32 0.0, %v2322
    %v2324 = vpop.f32.mrb[0].mxu0
    %v2325 = vadd.f32 0.0, %v2324
    %v2326 = vpop.f32.mrb[0].mxu0
    %v2327 = vpop.f32.mrb[0].mxu0
    %2328 = vdwg.mxu0
    %v2329 = vadd.f32 %v2234, %v2282
    %v2330 = vadd.f32 %v2235, %v2284
    %v2331 = vadd.f32 %v2236, %v2323
    %v2332 = vadd.f32 %v2237, %v2325
    %v2333 = vld [vmem:[%s863] ss:$8 sm:$0xf]
    %v2335 = vlaneseq
    %v2336 = vshrl.u32 %v2335, 7
    %v2337 = vsub.s32 0, %v2336
    %v2338 = vrot.slane %v2333, %v2337
    %v2339 = vlaneseq
    %v2340 = vshrl.u32 %v2339, 7
    %v2341 = vsub.s32 1, %v2340
    %v2342 = vrot.slane %v2333, %v2341
    %v2343 = vlaneseq
    %v2344 = vshrl.u32 %v2343, 7
    %v2345 = vsub.s32 2, %v2344
    %v2346 = vrot.slane %v2333, %v2345
    %v2347 = vlaneseq
    %v2348 = vshrl.u32 %v2347, 7
    %v2349 = vsub.s32 3, %v2348
    %v2350 = vrot.slane %v2333, %v2349
    %2351 = vrot.lane.b32.xlu0 %v2338, 1
    %v2352 = vpop.permute.xlu0 %2351
    %2353 = vrot.lane.b32.xlu0 %v2342, 1
    %v2354 = vpop.permute.xlu0 %2353
    %2355 = vrot.lane.b32.xlu0 %v2346, 1
    %v2356 = vpop.permute.xlu0 %2355
    %2357 = vrot.lane.b32.xlu0 %v2350, 1
    %v2358 = vpop.permute.xlu0 %2357
    %v2359 = vsel %vm890, %v2352, %v2354
    %v2360 = vsel %vm890, %v2354, %v2356
    %v2361 = vsel %vm890, %v2356, %v2358
    %v2367 = vmul.f32 %v1591, %v2352
    %v2368 = vmul.f32 %v1592, %v2359
    %v2369 = vmul.f32 %v1593, %v2360
    %v2370 = vmul.f32 %v1594, %v2361
    %v2371 = vmul.f32 %v2358, 0.0
    %v2372 = vmul.f32 %v1595, %v2352
    %v2373 = vmul.f32 %v1596, %v2359
    %v2374 = vmul.f32 %v1597, %v2360
    %v2375 = vmul.f32 %v1598, %v2361
    %s2376 = scalar_lea.vmem %s7, 20
    %v2377 = vld [vmem:[%s2376] sm:$0xf]
    %v2378 = vpack.c.bf16 %v2372, %v2367
    %v2379 = vpack.c.bf16 %v2373, %v2368
    %v2380 = vpack.c.bf16 %v2374, %v2369
    %v2381 = vpack.c.bf16 %v2375, %v2370
    %v2382 = vpack.c.bf16 %v2371, %v2371
    %2388 = vrot.lane.b32.xlu0 %v2378, 127
    %v2389 = vpop.permute.xlu0 %2388
    %2390 = vrot.lane.b32.xlu0 %v2379, 127
    %v2391 = vpop.permute.xlu0 %2390
    %2392 = vrot.lane.b32.xlu0 %v2380, 127
    %v2393 = vpop.permute.xlu0 %2392
    %2394 = vrot.lane.b32.xlu0 %v2381, 127
    %v2395 = vpop.permute.xlu0 %2394
    %2396 = vrot.lane.b32.xlu0 %v2382, 127
    %v2397 = vpop.permute.xlu0 %2396
    %v2398 = vsel %vm926, %v2389, %v2391
    %v2399 = vsel %vm926, %v2391, %v2393
    %v2400 = vsel %vm926, %v2393, %v2395
    %v2401 = vsel %vm926, %v2395, %v2397
    %v2407 = vsel %vm1228, %v2377, 0
    %2409 = vmatprep.subr.bf16.mxu0 %v2399
    %2410 = vmatpush1.bf16.msra.mxu0 %v2398
    %2411 = vmatprep.subr.bf16.mxu0 0
    %2412 = vmatpush1.bf16.msra.mxu0 0
    %2413 = vmatprep.subr.bf16.mxu0 0
    %2414 = vmatpush1.bf16.msra.mxu0 0
    %2415 = vmatprep.subr.bf16.mxu0 0
    %2416 = vmatpush1.bf16.msra.mxu0 0
    %2417 = vmatprep.subr.bf16.mxu0 0
    %2418 = vmatpush1.bf16.msra.mxu0 0
    %2419 = vmatprep.subr.bf16.mxu0 0
    %2420 = vmatpush1.bf16.msra.mxu0 0
    %2421 = vmatprep.subr.bf16.mxu0 0
    %2422 = vmatpush1.bf16.msra.mxu0 0
    %2423 = vmatprep.subr.bf16.mxu0 0
    %2424 = vmatpush1.bf16.msra.mxu0 0
    %2425 = vmatprep.subr.bf16.mxu0 0
    %2426 = vmatpush1.bf16.msra.mxu0 0
    %2427 = vmatprep.subr.bf16.mxu0 0
    %2428 = vmatpush1.bf16.msra.mxu0 0
    %2429 = vmatprep.subr.bf16.mxu0 0
    %2430 = vmatpush1.bf16.msra.mxu0 0
    %2431 = vmatprep.subr.bf16.mxu0 0
    %2432 = vmatpush1.bf16.msra.mxu0 0
    %2433 = vmatprep.subr.bf16.mxu0 0
    %2434 = vmatpush1.bf16.msra.mxu0 0
    %2435 = vmatprep.subr.bf16.mxu0 0
    %2436 = vmatpush1.bf16.msra.mxu0 0
    %2437 = vmatprep.subr.bf16.mxu0 0
    %2438 = vmatpush1.bf16.msra.mxu0 0
    %2439 = vmatprep.subr.bf16.mxu0 0
    %2440 = vmatpush1.bf16.msra.mxu0 0
    %2441 = vmatprep.mubr.bf16.mxu0 0
    %2442 = vmatmul.mubr.bf16.gmra.mrb[0].mxu0 %v2407
    %v2443 = vpop.f32.mrb[0].mxu0
    %v2444 = vadd.f32 0.0, %v2443
    %v2445 = vpop.f32.mrb[0].mxu0
    %v2446 = vadd.f32 0.0, %v2445
    %v2447 = vpop.f32.mrb[0].mxu0
    %v2448 = vpop.f32.mrb[0].mxu0
    %2449 = vdwg.mxu0
    %2450 = vmatprep.subr.bf16.mxu0 %v2401
    %2451 = vmatpush1.bf16.msra.mxu0 %v2400
    %2452 = vmatprep.subr.bf16.mxu0 0
    %2453 = vmatpush1.bf16.msra.mxu0 0
    %2454 = vmatprep.subr.bf16.mxu0 0
    %2455 = vmatpush1.bf16.msra.mxu0 0
    %2456 = vmatprep.subr.bf16.mxu0 0
    %2457 = vmatpush1.bf16.msra.mxu0 0
    %2458 = vmatprep.subr.bf16.mxu0 0
    %2459 = vmatpush1.bf16.msra.mxu0 0
    %2460 = vmatprep.subr.bf16.mxu0 0
    %2461 = vmatpush1.bf16.msra.mxu0 0
    %2462 = vmatprep.subr.bf16.mxu0 0
    %2463 = vmatpush1.bf16.msra.mxu0 0
    %2464 = vmatprep.subr.bf16.mxu0 0
    %2465 = vmatpush1.bf16.msra.mxu0 0
    %2466 = vmatprep.subr.bf16.mxu0 0
    %2467 = vmatpush1.bf16.msra.mxu0 0
    %2468 = vmatprep.subr.bf16.mxu0 0
    %2469 = vmatpush1.bf16.msra.mxu0 0
    %2470 = vmatprep.subr.bf16.mxu0 0
    %2471 = vmatpush1.bf16.msra.mxu0 0
    %2472 = vmatprep.subr.bf16.mxu0 0
    %2473 = vmatpush1.bf16.msra.mxu0 0
    %2474 = vmatprep.subr.bf16.mxu0 0
    %2475 = vmatpush1.bf16.msra.mxu0 0
    %2476 = vmatprep.subr.bf16.mxu0 0
    %2477 = vmatpush1.bf16.msra.mxu0 0
    %2478 = vmatprep.subr.bf16.mxu0 0
    %2479 = vmatpush1.bf16.msra.mxu0 0
    %2480 = vmatprep.subr.bf16.mxu0 0
    %2481 = vmatpush1.bf16.msra.mxu0 0
    %2482 = vmatprep.mubr.bf16.mxu0 0
    %2483 = vmatmul.mubr.bf16.gmra.mrb[0].mxu0 %v2407
    %v2484 = vpop.f32.mrb[0].mxu0
    %v2485 = vadd.f32 0.0, %v2484
    %v2486 = vpop.f32.mrb[0].mxu0
    %v2487 = vadd.f32 0.0, %v2486
    %v2488 = vpop.f32.mrb[0].mxu0
    %v2489 = vpop.f32.mrb[0].mxu0
    %2490 = vdwg.mxu0
    %v2491 = vadd.f32 %v2329, %v2444
    %v2492 = vadd.f32 %v2330, %v2446
    %v2493 = vadd.f32 %v2331, %v2485
    %v2494 = vadd.f32 %v2332, %v2487
    %v2495 = vld [vmem:[%s1032] ss:$8 sm:$0xf]
    %v2497 = vlaneseq
    %v2498 = vshrl.u32 %v2497, 7
    %v2499 = vsub.s32 0, %v2498
    %v2500 = vrot.slane %v2495, %v2499
    %v2501 = vlaneseq
    %v2502 = vshrl.u32 %v2501, 7
    %v2503 = vsub.s32 1, %v2502
    %v2504 = vrot.slane %v2495, %v2503
    %v2505 = vlaneseq
    %v2506 = vshrl.u32 %v2505, 7
    %v2507 = vsub.s32 2, %v2506
    %v2508 = vrot.slane %v2495, %v2507
    %v2509 = vlaneseq
    %v2510 = vshrl.u32 %v2509, 7
    %v2511 = vsub.s32 3, %v2510
    %v2512 = vrot.slane %v2495, %v2511
    %2513 = vrot.lane.b32.xlu0 %v2500, 15
    %v2514 = vpop.permute.xlu0 %2513
    %2515 = vrot.lane.b32.xlu0 %v2504, 15
    %v2516 = vpop.permute.xlu0 %2515
    %2517 = vrot.lane.b32.xlu0 %v2508, 15
    %v2518 = vpop.permute.xlu0 %2517
    %2519 = vrot.lane.b32.xlu0 %v2512, 15
    %v2520 = vpop.permute.xlu0 %2519
    %v2521 = vsel %vm1059, %v2514, %v2516
    %v2522 = vsel %vm1059, %v2516, %v2518
    %v2523 = vsel %vm1059, %v2518, %v2520
    %v2529 = vmul.f32 %v1591, %v2514
    %v2530 = vmul.f32 %v1592, %v2521
    %v2531 = vmul.f32 %v1593, %v2522
    %v2532 = vmul.f32 %v1594, %v2523
    %v2533 = vmul.f32 %v2520, 0.0
    %v2534 = vmul.f32 %v1595, %v2514
    %v2535 = vmul.f32 %v1596, %v2521
    %v2536 = vmul.f32 %v1597, %v2522
    %v2537 = vmul.f32 %v1598, %v2523
    %s2538 = scalar_lea.vmem %s7, 24
    %v2539 = vld [vmem:[%s2538] sm:$0xf]
    %v2540 = vpack.c.bf16 %v2534, %v2529
    %v2541 = vpack.c.bf16 %v2535, %v2530
    %v2542 = vpack.c.bf16 %v2536, %v2531
    %v2543 = vpack.c.bf16 %v2537, %v2532
    %v2544 = vpack.c.bf16 %v2533, %v2533
    %2550 = vrot.lane.b32.xlu0 %v2540, 113
    %v2551 = vpop.permute.xlu0 %2550
    %2552 = vrot.lane.b32.xlu0 %v2541, 113
    %v2553 = vpop.permute.xlu0 %2552
    %2554 = vrot.lane.b32.xlu0 %v2542, 113
    %v2555 = vpop.permute.xlu0 %2554
    %2556 = vrot.lane.b32.xlu0 %v2543, 113
    %v2557 = vpop.permute.xlu0 %2556
    %2558 = vrot.lane.b32.xlu0 %v2544, 113
    %v2559 = vpop.permute.xlu0 %2558
    %v2560 = vsel %vm1095, %v2551, %v2553
    %v2561 = vsel %vm1095, %v2553, %v2555
    %v2562 = vsel %vm1095, %v2555, %v2557
    %v2563 = vsel %vm1095, %v2557, %v2559
    %v2569 = vsel %vm1228, %v2539, 0
    %2571 = vmatprep.subr.bf16.mxu0 %v2561
    %2572 = vmatpush1.bf16.msra.mxu0 %v2560
    %2573 = vmatprep.subr.bf16.mxu0 0
    %2574 = vmatpush1.bf16.msra.mxu0 0
    %2575 = vmatprep.subr.bf16.mxu0 0
    %2576 = vmatpush1.bf16.msra.mxu0 0
    %2577 = vmatprep.subr.bf16.mxu0 0
    %2578 = vmatpush1.bf16.msra.mxu0 0
    %2579 = vmatprep.subr.bf16.mxu0 0
    %2580 = vmatpush1.bf16.msra.mxu0 0
    %2581 = vmatprep.subr.bf16.mxu0 0
    %2582 = vmatpush1.bf16.msra.mxu0 0
    %2583 = vmatprep.subr.bf16.mxu0 0
    %2584 = vmatpush1.bf16.msra.mxu0 0
    %2585 = vmatprep.subr.bf16.mxu0 0
    %2586 = vmatpush1.bf16.msra.mxu0 0
    %2587 = vmatprep.subr.bf16.mxu0 0
    %2588 = vmatpush1.bf16.msra.mxu0 0
    %2589 = vmatprep.subr.bf16.mxu0 0
    %2590 = vmatpush1.bf16.msra.mxu0 0
    %2591 = vmatprep.subr.bf16.mxu0 0
    %2592 = vmatpush1.bf16.msra.mxu0 0
    %2593 = vmatprep.subr.bf16.mxu0 0
    %2594 = vmatpush1.bf16.msra.mxu0 0
    %2595 = vmatprep.subr.bf16.mxu0 0
    %2596 = vmatpush1.bf16.msra.mxu0 0
    %2597 = vmatprep.subr.bf16.mxu0 0
    %2598 = vmatpush1.bf16.msra.mxu0 0
    %2599 = vmatprep.subr.bf16.mxu0 0
    %2600 = vmatpush1.bf16.msra.mxu0 0
    %2601 = vmatprep.subr.bf16.mxu0 0
    %2602 = vmatpush1.bf16.msra.mxu0 0
    %2603 = vmatprep.mubr.bf16.mxu0 0
    %2604 = vmatmul.mubr.bf16.gmra.mrb[0].mxu0 %v2569
    %v2605 = vpop.f32.mrb[0].mxu0
    %v2606 = vadd.f32 0.0, %v2605
    %v2607 = vpop.f32.mrb[0].mxu0
    %v2608 = vadd.f32 0.0, %v2607
    %v2609 = vpop.f32.mrb[0].mxu0
    %v2610 = vpop.f32.mrb[0].mxu0
    %2611 = vdwg.mxu0
    %2612 = vmatprep.subr.bf16.mxu0 %v2563
    %2613 = vmatpush1.bf16.msra.mxu0 %v2562
    %2614 = vmatprep.subr.bf16.mxu0 0
    %2615 = vmatpush1.bf16.msra.mxu0 0
    %2616 = vmatprep.subr.bf16.mxu0 0
    %2617 = vmatpush1.bf16.msra.mxu0 0
    %2618 = vmatprep.subr.bf16.mxu0 0
    %2619 = vmatpush1.bf16.msra.mxu0 0
    %2620 = vmatprep.subr.bf16.mxu0 0
    %2621 = vmatpush1.bf16.msra.mxu0 0
    %2622 = vmatprep.subr.bf16.mxu0 0
    %2623 = vmatpush1.bf16.msra.mxu0 0
    %2624 = vmatprep.subr.bf16.mxu0 0
    %2625 = vmatpush1.bf16.msra.mxu0 0
    %2626 = vmatprep.subr.bf16.mxu0 0
    %2627 = vmatpush1.bf16.msra.mxu0 0
    %2628 = vmatprep.subr.bf16.mxu0 0
    %2629 = vmatpush1.bf16.msra.mxu0 0
    %2630 = vmatprep.subr.bf16.mxu0 0
    %2631 = vmatpush1.bf16.msra.mxu0 0
    %2632 = vmatprep.subr.bf16.mxu0 0
    %2633 = vmatpush1.bf16.msra.mxu0 0
    %2634 = vmatprep.subr.bf16.mxu0 0
    %2635 = vmatpush1.bf16.msra.mxu0 0
    %2636 = vmatprep.subr.bf16.mxu0 0
    %2637 = vmatpush1.bf16.msra.mxu0 0
    %2638 = vmatprep.subr.bf16.mxu0 0
    %2639 = vmatpush1.bf16.msra.mxu0 0
    %2640 = vmatprep.subr.bf16.mxu0 0
    %2641 = vmatpush1.bf16.msra.mxu0 0
    %2642 = vmatprep.subr.bf16.mxu0 0
    %2643 = vmatpush1.bf16.msra.mxu0 0
    %2644 = vmatprep.mubr.bf16.mxu0 0
    %2645 = vmatmul.mubr.bf16.gmra.mrb[0].mxu0 %v2569
    %v2646 = vpop.f32.mrb[0].mxu0
    %v2647 = vadd.f32 0.0, %v2646
    %v2648 = vpop.f32.mrb[0].mxu0
    %v2649 = vadd.f32 0.0, %v2648
    %v2650 = vpop.f32.mrb[0].mxu0
    %v2651 = vpop.f32.mrb[0].mxu0
    %2652 = vdwg.mxu0
    %v2653 = vadd.f32 %v2491, %v2606
    %v2654 = vadd.f32 %v2492, %v2608
    %v2655 = vadd.f32 %v2493, %v2647
    %v2656 = vadd.f32 %v2494, %v2649
    %v2657 = vld [vmem:[%s1201] ss:$8 sm:$0xf]
    %v2659 = vlaneseq
    %v2660 = vshrl.u32 %v2659, 7
    %v2661 = vsub.s32 0, %v2660
    %v2662 = vrot.slane %v2657, %v2661
    %v2663 = vlaneseq
    %v2664 = vshrl.u32 %v2663, 7
    %v2665 = vsub.s32 1, %v2664
    %v2666 = vrot.slane %v2657, %v2665
    %v2667 = vlaneseq
    %v2668 = vshrl.u32 %v2667, 7
    %v2669 = vsub.s32 2, %v2668
    %v2670 = vrot.slane %v2657, %v2669
    %v2671 = vlaneseq
    %v2672 = vshrl.u32 %v2671, 7
    %v2673 = vsub.s32 3, %v2672
    %v2674 = vrot.slane %v2657, %v2673
    %2675 = vrot.lane.b32.xlu0 %v2662, 16
    %v2676 = vpop.permute.xlu0 %2675
    %2677 = vrot.lane.b32.xlu0 %v2666, 16
    %v2678 = vpop.permute.xlu0 %2677
    %2679 = vrot.lane.b32.xlu0 %v2670, 16
    %v2680 = vpop.permute.xlu0 %2679
    %2681 = vrot.lane.b32.xlu0 %v2674, 16
    %v2682 = vpop.permute.xlu0 %2681
    %v2683 = vsel %vm1228, %v2676, %v2678
    %v2684 = vsel %vm1228, %v2678, %v2680
    %v2685 = vsel %vm1228, %v2680, %v2682
    %v2691 = vmul.f32 %v1591, %v2676
    %v2692 = vmul.f32 %v1592, %v2683
    %v2693 = vmul.f32 %v1593, %v2684
    %v2694 = vmul.f32 %v1594, %v2685
    %v2695 = vmul.f32 %v2682, 0.0
    %v2696 = vmul.f32 %v1595, %v2676
    %v2697 = vmul.f32 %v1596, %v2683
    %v2698 = vmul.f32 %v1597, %v2684
    %v2699 = vmul.f32 %v1598, %v2685
    %s2700 = scalar_lea.vmem %s7, 28
    %v2701 = vld [vmem:[%s2700] sm:$0xf]
    %v2702 = vpack.c.bf16 %v2696, %v2691
    %v2703 = vpack.c.bf16 %v2697, %v2692
    %v2704 = vpack.c.bf16 %v2698, %v2693
    %v2705 = vpack.c.bf16 %v2699, %v2694
    %v2706 = vpack.c.bf16 %v2695, %v2695
    %2712 = vrot.lane.b32.xlu0 %v2702, 112
    %v2713 = vpop.permute.xlu0 %2712
    %2714 = vrot.lane.b32.xlu0 %v2703, 112
    %v2715 = vpop.permute.xlu0 %2714
    %2716 = vrot.lane.b32.xlu0 %v2704, 112
    %v2717 = vpop.permute.xlu0 %2716
    %2718 = vrot.lane.b32.xlu0 %v2705, 112
    %v2719 = vpop.permute.xlu0 %2718
    %2720 = vrot.lane.b32.xlu0 %v2706, 112
    %v2721 = vpop.permute.xlu0 %2720
    %v2722 = vsel %vm1264, %v2713, %v2715
    %v2723 = vsel %vm1264, %v2715, %v2717
    %v2724 = vsel %vm1264, %v2717, %v2719
    %v2725 = vsel %vm1264, %v2719, %v2721
    %v2731 = vsel %vm1228, %v2701, 0
    %2733 = vmatprep.subr.bf16.mxu0 %v2723
    %2734 = vmatpush1.bf16.msra.mxu0 %v2722
    %2735 = vmatprep.subr.bf16.mxu0 0
    %2736 = vmatpush1.bf16.msra.mxu0 0
    %2737 = vmatprep.subr.bf16.mxu0 0
    %2738 = vmatpush1.bf16.msra.mxu0 0
    %2739 = vmatprep.subr.bf16.mxu0 0
    %2740 = vmatpush1.bf16.msra.mxu0 0
    %2741 = vmatprep.subr.bf16.mxu0 0
    %2742 = vmatpush1.bf16.msra.mxu0 0
    %2743 = vmatprep.subr.bf16.mxu0 0
    %2744 = vmatpush1.bf16.msra.mxu0 0
    %2745 = vmatprep.subr.bf16.mxu0 0
    %2746 = vmatpush1.bf16.msra.mxu0 0
    %2747 = vmatprep.subr.bf16.mxu0 0
    %2748 = vmatpush1.bf16.msra.mxu0 0
    %2749 = vmatprep.subr.bf16.mxu0 0
    %2750 = vmatpush1.bf16.msra.mxu0 0
    %2751 = vmatprep.subr.bf16.mxu0 0
    %2752 = vmatpush1.bf16.msra.mxu0 0
    %2753 = vmatprep.subr.bf16.mxu0 0
    %2754 = vmatpush1.bf16.msra.mxu0 0
    %2755 = vmatprep.subr.bf16.mxu0 0
    %2756 = vmatpush1.bf16.msra.mxu0 0
    %2757 = vmatprep.subr.bf16.mxu0 0
    %2758 = vmatpush1.bf16.msra.mxu0 0
    %2759 = vmatprep.subr.bf16.mxu0 0
    %2760 = vmatpush1.bf16.msra.mxu0 0
    %2761 = vmatprep.subr.bf16.mxu0 0
    %2762 = vmatpush1.bf16.msra.mxu0 0
    %2763 = vmatprep.subr.bf16.mxu0 0
    %2764 = vmatpush1.bf16.msra.mxu0 0
    %2765 = vmatprep.mubr.bf16.mxu0 0
    %2766 = vmatmul.mubr.bf16.gmra.mrb[0].mxu0 %v2731
    %v2767 = vpop.f32.mrb[0].mxu0
    %v2768 = vadd.f32 0.0, %v2767
    %v2769 = vpop.f32.mrb[0].mxu0
    %v2770 = vadd.f32 0.0, %v2769
    %v2771 = vpop.f32.mrb[0].mxu0
    %v2772 = vpop.f32.mrb[0].mxu0
    %2773 = vdwg.mxu0
    %2774 = vmatprep.subr.bf16.mxu0 %v2725
    %2775 = vmatpush1.bf16.msra.mxu0 %v2724
    %2776 = vmatprep.subr.bf16.mxu0 0
    %2777 = vmatpush1.bf16.msra.mxu0 0
    %2778 = vmatprep.subr.bf16.mxu0 0
    %2779 = vmatpush1.bf16.msra.mxu0 0
    %2780 = vmatprep.subr.bf16.mxu0 0
    %2781 = vmatpush1.bf16.msra.mxu0 0
    %2782 = vmatprep.subr.bf16.mxu0 0
    %2783 = vmatpush1.bf16.msra.mxu0 0
    %2784 = vmatprep.subr.bf16.mxu0 0
    %2785 = vmatpush1.bf16.msra.mxu0 0
    %2786 = vmatprep.subr.bf16.mxu0 0
    %2787 = vmatpush1.bf16.msra.mxu0 0
    %2788 = vmatprep.subr.bf16.mxu0 0
    %2789 = vmatpush1.bf16.msra.mxu0 0
    %2790 = vmatprep.subr.bf16.mxu0 0
    %2791 = vmatpush1.bf16.msra.mxu0 0
    %2792 = vmatprep.subr.bf16.mxu0 0
    %2793 = vmatpush1.bf16.msra.mxu0 0
    %2794 = vmatprep.subr.bf16.mxu0 0
    %2795 = vmatpush1.bf16.msra.mxu0 0
    %2796 = vmatprep.subr.bf16.mxu0 0
    %2797 = vmatpush1.bf16.msra.mxu0 0
    %2798 = vmatprep.subr.bf16.mxu0 0
    %2799 = vmatpush1.bf16.msra.mxu0 0
    %2800 = vmatprep.subr.bf16.mxu0 0
    %2801 = vmatpush1.bf16.msra.mxu0 0
    %2802 = vmatprep.subr.bf16.mxu0 0
    %2803 = vmatpush1.bf16.msra.mxu0 0
    %2804 = vmatprep.subr.bf16.mxu0 0
    %2805 = vmatpush1.bf16.msra.mxu0 0
    %2806 = vmatprep.mubr.bf16.mxu0 0
    %2807 = vmatmul.mubr.bf16.gmra.mrb[0].mxu0 %v2731
    %v2808 = vpop.f32.mrb[0].mxu0
    %v2809 = vadd.f32 0.0, %v2808
    %v2810 = vpop.f32.mrb[0].mxu0
    %v2811 = vadd.f32 0.0, %v2810
    %v2812 = vpop.f32.mrb[0].mxu0
    %v2813 = vpop.f32.mrb[0].mxu0
    %2814 = vdwg.mxu0
    %v2815 = vadd.f32 %v2653, %v2768
    %v2816 = vadd.f32 %v2654, %v2770
    %v2817 = vadd.f32 %v2655, %v2809
    %v2818 = vadd.f32 %v2656, %v2811
    %v2819 = vld [vmem:[%s1370] ss:$8 sm:$0xf]
    %v2821 = vlaneseq
    %v2822 = vshrl.u32 %v2821, 7
    %v2823 = vsub.s32 0, %v2822
    %v2824 = vrot.slane %v2819, %v2823
    %v2825 = vlaneseq
    %v2826 = vshrl.u32 %v2825, 7
    %v2827 = vsub.s32 1, %v2826
    %v2828 = vrot.slane %v2819, %v2827
    %v2829 = vlaneseq
    %v2830 = vshrl.u32 %v2829, 7
    %v2831 = vsub.s32 2, %v2830
    %v2832 = vrot.slane %v2819, %v2831
    %v2833 = vlaneseq
    %v2834 = vshrl.u32 %v2833, 7
    %v2835 = vsub.s32 3, %v2834
    %v2836 = vrot.slane %v2819, %v2835
    %2837 = vrot.lane.b32.xlu0 %v2824, 17
    %v2838 = vpop.permute.xlu0 %2837
    %2839 = vrot.lane.b32.xlu0 %v2828, 17
    %v2840 = vpop.permute.xlu0 %2839
    %2841 = vrot.lane.b32.xlu0 %v2832, 17
    %v2842 = vpop.permute.xlu0 %2841
    %2843 = vrot.lane.b32.xlu0 %v2836, 17
    %v2844 = vpop.permute.xlu0 %2843
    %v2845 = vsel %vm1397, %v2838, %v2840
    %v2846 = vsel %vm1397, %v2840, %v2842
    %v2847 = vsel %vm1397, %v2842, %v2844
    %v2853 = vmul.f32 %v1591, %v2838
    %v2854 = vmul.f32 %v1592, %v2845
    %v2855 = vmul.f32 %v1593, %v2846
    %v2856 = vmul.f32 %v1594, %v2847
    %v2857 = vmul.f32 %v2844, 0.0
    %v2858 = vmul.f32 %v1595, %v2838
    %v2859 = vmul.f32 %v1596, %v2845
    %v2860 = vmul.f32 %v1597, %v2846
    %v2861 = vmul.f32 %v1598, %v2847
    %s2862 = scalar_lea.vmem %s7, 32
    %v2863 = vld [vmem:[%s2862] sm:$0xf]
    %v2864 = vpack.c.bf16 %v2858, %v2853
    %v2865 = vpack.c.bf16 %v2859, %v2854
    %v2866 = vpack.c.bf16 %v2860, %v2855
    %v2867 = vpack.c.bf16 %v2861, %v2856
    %v2868 = vpack.c.bf16 %v2857, %v2857
    %2874 = vrot.lane.b32.xlu0 %v2864, 111
    %v2875 = vpop.permute.xlu0 %2874
    %2876 = vrot.lane.b32.xlu0 %v2865, 111
    %v2877 = vpop.permute.xlu0 %2876
    %2878 = vrot.lane.b32.xlu0 %v2866, 111
    %v2879 = vpop.permute.xlu0 %2878
    %2880 = vrot.lane.b32.xlu0 %v2867, 111
    %v2881 = vpop.permute.xlu0 %2880
    %2882 = vrot.lane.b32.xlu0 %v2868, 111
    %v2883 = vpop.permute.xlu0 %2882
    %v2884 = vsel %vm1433, %v2875, %v2877
    %v2885 = vsel %vm1433, %v2877, %v2879
    %v2886 = vsel %vm1433, %v2879, %v2881
    %v2887 = vsel %vm1433, %v2881, %v2883
    %v2893 = vsel %vm1228, %v2863, 0
    %2895 = vmatprep.subr.bf16.mxu0 %v2885
    %2896 = vmatpush1.bf16.msra.mxu0 %v2884
    %2897 = vmatprep.subr.bf16.mxu0 0
    %2898 = vmatpush1.bf16.msra.mxu0 0
    %2899 = vmatprep.subr.bf16.mxu0 0
    %2900 = vmatpush1.bf16.msra.mxu0 0
    %2901 = vmatprep.subr.bf16.mxu0 0
    %2902 = vmatpush1.bf16.msra.mxu0 0
    %2903 = vmatprep.subr.bf16.mxu0 0
    %2904 = vmatpush1.bf16.msra.mxu0 0
    %2905 = vmatprep.subr.bf16.mxu0 0
    %2906 = vmatpush1.bf16.msra.mxu0 0
    %2907 = vmatprep.subr.bf16.mxu0 0
    %2908 = vmatpush1.bf16.msra.mxu0 0
    %2909 = vmatprep.subr.bf16.mxu0 0
    %2910 = vmatpush1.bf16.msra.mxu0 0
    %2911 = vmatprep.subr.bf16.mxu0 0
    %2912 = vmatpush1.bf16.msra.mxu0 0
    %2913 = vmatprep.subr.bf16.mxu0 0
    %2914 = vmatpush1.bf16.msra.mxu0 0
    %2915 = vmatprep.subr.bf16.mxu0 0
    %2916 = vmatpush1.bf16.msra.mxu0 0
    %2917 = vmatprep.subr.bf16.mxu0 0
    %2918 = vmatpush1.bf16.msra.mxu0 0
    %2919 = vmatprep.subr.bf16.mxu0 0
    %2920 = vmatpush1.bf16.msra.mxu0 0
    %2921 = vmatprep.subr.bf16.mxu0 0
    %2922 = vmatpush1.bf16.msra.mxu0 0
    %2923 = vmatprep.subr.bf16.mxu0 0
    %2924 = vmatpush1.bf16.msra.mxu0 0
    %2925 = vmatprep.subr.bf16.mxu0 0
    %2926 = vmatpush1.bf16.msra.mxu0 0
    %2927 = vmatprep.mubr.bf16.mxu0 0
    %2928 = vmatmul.mubr.bf16.gmra.mrb[0].mxu0 %v2893
    %v2929 = vpop.f32.mrb[0].mxu0
    %v2930 = vadd.f32 0.0, %v2929
    %v2931 = vpop.f32.mrb[0].mxu0
    %v2932 = vadd.f32 0.0, %v2931
    %v2933 = vpop.f32.mrb[0].mxu0
    %v2934 = vpop.f32.mrb[0].mxu0
    %2935 = vdwg.mxu0
    %2936 = vmatprep.subr.bf16.mxu0 %v2887
    %2937 = vmatpush1.bf16.msra.mxu0 %v2886
    %2938 = vmatprep.subr.bf16.mxu0 0
    %2939 = vmatpush1.bf16.msra.mxu0 0
    %2940 = vmatprep.subr.bf16.mxu0 0
    %2941 = vmatpush1.bf16.msra.mxu0 0
    %2942 = vmatprep.subr.bf16.mxu0 0
    %2943 = vmatpush1.bf16.msra.mxu0 0
    %2944 = vmatprep.subr.bf16.mxu0 0
    %2945 = vmatpush1.bf16.msra.mxu0 0
    %2946 = vmatprep.subr.bf16.mxu0 0
    %2947 = vmatpush1.bf16.msra.mxu0 0
    %2948 = vmatprep.subr.bf16.mxu0 0
    %2949 = vmatpush1.bf16.msra.mxu0 0
    %2950 = vmatprep.subr.bf16.mxu0 0
    %2951 = vmatpush1.bf16.msra.mxu0 0
    %2952 = vmatprep.subr.bf16.mxu0 0
    %2953 = vmatpush1.bf16.msra.mxu0 0
    %2954 = vmatprep.subr.bf16.mxu0 0
    %2955 = vmatpush1.bf16.msra.mxu0 0
    %2956 = vmatprep.subr.bf16.mxu0 0
    %2957 = vmatpush1.bf16.msra.mxu0 0
    %2958 = vmatprep.subr.bf16.mxu0 0
    %2959 = vmatpush1.bf16.msra.mxu0 0
    %2960 = vmatprep.subr.bf16.mxu0 0
    %2961 = vmatpush1.bf16.msra.mxu0 0
    %2962 = vmatprep.subr.bf16.mxu0 0
    %2963 = vmatpush1.bf16.msra.mxu0 0
    %2964 = vmatprep.subr.bf16.mxu0 0
    %2965 = vmatpush1.bf16.msra.mxu0 0
    %2966 = vmatprep.subr.bf16.mxu0 0
    %2967 = vmatpush1.bf16.msra.mxu0 0
    %2968 = vmatprep.mubr.bf16.mxu0 0
    %2969 = vmatmul.mubr.bf16.gmra.mrb[0].mxu0 %v2893
    %v2970 = vpop.f32.mrb[0].mxu0
    %v2971 = vadd.f32 0.0, %v2970
    %v2972 = vpop.f32.mrb[0].mxu0
    %v2973 = vadd.f32 0.0, %v2972
    %v2974 = vpop.f32.mrb[0].mxu0
    %v2975 = vpop.f32.mrb[0].mxu0
    %2976 = vdwg.mxu0
    %v2977 = vadd.f32 %v2815, %v2930
    %v2978 = vadd.f32 %v2816, %v2932
    %v2979 = vadd.f32 %v2817, %v2971
    %v2980 = vadd.f32 %v2818, %v2973
    %2981 = vst [vmem:[#allocation5 + $0x40] sm:$0xff] %v2977
    %2982 = vst [vmem:[#allocation5 + $0x48] sm:$0xff] %v2978
    %2983 = vst [vmem:[#allocation5 + $0x50] sm:$0xff] %v2979
    %2984 = vst [vmem:[#allocation5 + $0x58] sm:$0xff] %v2980
    %v2985 = vld [vmem:[#allocation5] sm:$0xff]
    %v2986 = vld [vmem:[#allocation5 + $0x8] sm:$0xff]
    %v2987 = vld [vmem:[#allocation5 + $0x10] sm:$0xff]
    %v2988 = vld [vmem:[#allocation5 + $0x18] sm:$0xff]
    %v2989 = vld [vmem:[#allocation5 + $0x20] sm:$0xff]
    %v2990 = vld [vmem:[#allocation5 + $0x28] sm:$0xff]
    %v2991 = vld [vmem:[#allocation5 + $0x30] sm:$0xff]
    %v2992 = vld [vmem:[#allocation5 + $0x38] sm:$0xff]
    %v2993 = vld [vmem:[#allocation5 + $0x40] sm:$0xff]
    %v2994 = vld [vmem:[#allocation5 + $0x48] sm:$0xff]
    %v2995 = vld [vmem:[#allocation5 + $0x50] sm:$0xff]
    %v2996 = vld [vmem:[#allocation5 + $0x58] sm:$0xff]
    %v2997 = vld [vmem:[%s8] sm:$0xff]
    %v2998 = vld [vmem:[%s8 + $0x8] sm:$0xff]
    %v2999 = vld [vmem:[%s8 + $0x10] sm:$0xff]
    %3001 = vset.pattern.permute.xlu0 0
    %3002 = vperm.xlu0 %3001, %v2997
    %v3003 = vpop.permute.xlu0 %3002
    %3006 = vset.pattern.permute.xlu0 0
    %3007 = vperm.xlu0 %3006, %v2998
    %v3008 = vpop.permute.xlu0 %3007
    %3011 = vset.pattern.permute.xlu0 0
    %3012 = vperm.xlu0 %3011, %v2999
    %v3013 = vpop.permute.xlu0 %3012
    %v3015 = vmul.f32 %v2985, %v3003
    %v3016 = vmul.f32 %v2986, %v3003
    %v3017 = vmul.f32 %v2987, %v3003
    %v3018 = vmul.f32 %v2988, %v3003
    %v3019 = vmul.f32 %v2989, %v3008
    %v3020 = vmul.f32 %v2990, %v3008
    %v3021 = vmul.f32 %v2991, %v3008
    %v3022 = vmul.f32 %v2992, %v3008
    %v3023 = vmul.f32 %v2993, %v3013
    %v3024 = vmul.f32 %v2994, %v3013
    %v3025 = vmul.f32 %v2995, %v3013
    %v3026 = vmul.f32 %v2996, %v3013
    %v3027 = vld [vmem:[%s9] sm:$0xff]
    %v3028 = vld [vmem:[%s9 + $0x8] sm:$0xff]
    %v3029 = vld [vmem:[%s9 + $0x10] sm:$0xff]
    %3031 = vset.pattern.permute.xlu0 0
    %3032 = vperm.xlu0 %3031, %v3027
    %v3033 = vpop.permute.xlu0 %3032
    %3036 = vset.pattern.permute.xlu0 0
    %3037 = vperm.xlu0 %3036, %v3028
    %v3038 = vpop.permute.xlu0 %3037
    %3041 = vset.pattern.permute.xlu0 0
    %3042 = vperm.xlu0 %3041, %v3029
    %v3043 = vpop.permute.xlu0 %3042
    %v3045 = vadd.f32 %v3015, %v3033
    %v3046 = vadd.f32 %v3016, %v3033
    %v3047 = vadd.f32 %v3017, %v3033
    %v3048 = vadd.f32 %v3018, %v3033
    %v3049 = vadd.f32 %v3019, %v3038
    %v3050 = vadd.f32 %v3020, %v3038
    %v3051 = vadd.f32 %v3021, %v3038
    %v3052 = vadd.f32 %v3022, %v3038
    %v3053 = vadd.f32 %v3023, %v3043
    %v3054 = vadd.f32 %v3024, %v3043
    %v3055 = vadd.f32 %v3025, %v3043
    %v3056 = vadd.f32 %v3026, %v3043
    %v3057 = vmax.f32 %v3045, 0.0
    %v3058 = vmax.f32 %v3046, 0.0
    %v3059 = vmax.f32 %v3047, 0.0
    %v3060 = vmax.f32 %v3048, 0.0
    %v3061 = vmax.f32 %v3049, 0.0
    %v3062 = vmax.f32 %v3050, 0.0
    %v3063 = vmax.f32 %v3051, 0.0
    %v3064 = vmax.f32 %v3052, 0.0
    %v3065 = vmax.f32 %v3053, 0.0
    %v3066 = vmax.f32 %v3054, 0.0
    %v3067 = vmax.f32 %v3055, 0.0
    %v3068 = vmax.f32 %v3056, 0.0
    %v3069 = vld [vmem:[%s1] ss:$8 sm:$0xf]
    %v3071 = vlaneseq
    %v3072 = vshrl.u32 %v3071, 7
    %v3073 = vsub.s32 0, %v3072
    %v3074 = vrot.slane %v3069, %v3073
    %v3075 = vlaneseq
    %v3076 = vshrl.u32 %v3075, 7
    %v3077 = vsub.s32 1, %v3076
    %v3078 = vrot.slane %v3069, %v3077
    %v3079 = vlaneseq
    %v3080 = vshrl.u32 %v3079, 7
    %v3081 = vsub.s32 2, %v3080
    %v3082 = vrot.slane %v3069, %v3081
    %v3083 = vlaneseq
    %v3084 = vshrl.u32 %v3083, 7
    %v3085 = vsub.s32 3, %v3084
    %v3086 = vrot.slane %v3069, %v3085
    %3087 = vrot.lane.b32.xlu0 %v3074, 111
    %v3088 = vpop.permute.xlu0 %3087
    %3089 = vrot.lane.b32.xlu0 %v3078, 111
    %v3090 = vpop.permute.xlu0 %3089
    %3091 = vrot.lane.b32.xlu0 %v3082, 111
    %v3092 = vpop.permute.xlu0 %3091
    %3093 = vrot.lane.b32.xlu0 %v3086, 111
    %v3094 = vpop.permute.xlu0 %3093
    %v3095 = vsel %vm114, %v3088, %v3090
    %v3096 = vsel %vm114, %v3090, %v3092
    %v3097 = vsel %vm114, %v3092, %v3094
    %v3103 = vmul.f32 %v3088, 0.0
    %v3104 = vmul.f32 %v3057, %v3095
    %v3105 = vmul.f32 %v3058, %v3096
    %v3106 = vmul.f32 %v3059, %v3097
    %v3107 = vmul.f32 %v3060, %v3094
    %v3108 = vmul.f32 %v3061, %v3095
    %v3109 = vmul.f32 %v3062, %v3096
    %v3110 = vmul.f32 %v3063, %v3097
    %v3111 = vmul.f32 %v3064, %v3094
    %v3112 = vmul.f32 %v3065, %v3095
    %v3113 = vmul.f32 %v3066, %v3096
    %v3114 = vmul.f32 %v3067, %v3097
    %v3115 = vmul.f32 %v3068, %v3094
    %v3116 = vld [vmem:[%s10] sm:$0xf]
    %v3117 = vpack.c.bf16 %v3103, %v3103
    %v3118 = vpack.c.bf16 %v3108, %v3104
    %v3119 = vpack.c.bf16 %v3109, %v3105
    %v3120 = vpack.c.bf16 %v3110, %v3106
    %v3121 = vpack.c.bf16 %v3111, %v3107
    %v3122 = vpack.c.bf16 %v3112, %v3112
    %v3123 = vpack.c.bf16 %v3113, %v3113
    %v3124 = vpack.c.bf16 %v3114, %v3114
    %v3125 = vpack.c.bf16 %v3115, %v3115
    %v3126 = vld [vmem:[%s134] ss:$8 sm:$0xf]
    %v3128 = vlaneseq
    %v3129 = vshrl.u32 %v3128, 7
    %v3130 = vsub.s32 0, %v3129
    %v3131 = vrot.slane %v3126, %v3130
    %v3132 = vlaneseq
    %v3133 = vshrl.u32 %v3132, 7
    %v3134 = vsub.s32 1, %v3133
    %v3135 = vrot.slane %v3126, %v3134
    %v3136 = vlaneseq
    %v3137 = vshrl.u32 %v3136, 7
    %v3138 = vsub.s32 2, %v3137
    %v3139 = vrot.slane %v3126, %v3138
    %v3140 = vlaneseq
    %v3141 = vshrl.u32 %v3140, 7
    %v3142 = vsub.s32 3, %v3141
    %v3143 = vrot.slane %v3126, %v3142
    %3144 = vrot.lane.b32.xlu0 %v3131, 112
    %v3145 = vpop.permute.xlu0 %3144
    %3146 = vrot.lane.b32.xlu0 %v3135, 112
    %v3147 = vpop.permute.xlu0 %3146
    %3148 = vrot.lane.b32.xlu0 %v3139, 112
    %v3149 = vpop.permute.xlu0 %3148
    %3150 = vrot.lane.b32.xlu0 %v3143, 112
    %v3151 = vpop.permute.xlu0 %3150
    %v3152 = vsel %vm161, %v3145, %v3147
    %v3153 = vsel %vm161, %v3147, %v3149
    %v3154 = vsel %vm161, %v3149, %v3151
    %v3160 = vmul.f32 %v3145, 0.0
    %v3161 = vmul.f32 %v3057, %v3152
    %v3162 = vmul.f32 %v3058, %v3153
    %v3163 = vmul.f32 %v3059, %v3154
    %v3164 = vmul.f32 %v3060, %v3151
    %v3165 = vmul.f32 %v3061, %v3152
    %v3166 = vmul.f32 %v3062, %v3153
    %v3167 = vmul.f32 %v3063, %v3154
    %v3168 = vmul.f32 %v3064, %v3151
    %v3169 = vmul.f32 %v3065, %v3152
    %v3170 = vmul.f32 %v3066, %v3153
    %v3171 = vmul.f32 %v3067, %v3154
    %v3172 = vmul.f32 %v3068, %v3151
    %s3173 = scalar_lea.vmem %s10, 4
    %v3174 = vld [vmem:[%s3173] sm:$0xf]
    %v3175 = vpack.c.bf16 %v3160, %v3160
    %v3176 = vpack.c.bf16 %v3165, %v3161
    %v3177 = vpack.c.bf16 %v3166, %v3162
    %v3178 = vpack.c.bf16 %v3167, %v3163
    %v3179 = vpack.c.bf16 %v3168, %v3164
    %v3180 = vpack.c.bf16 %v3169, %v3169
    %v3181 = vpack.c.bf16 %v3170, %v3170
    %v3182 = vpack.c.bf16 %v3171, %v3171
    %v3183 = vpack.c.bf16 %v3172, %v3172
    %3193 = vrot.lane.b32.xlu0 %v3175, 16
    %v3194 = vpop.permute.xlu0 %3193
    %3195 = vrot.lane.b32.xlu0 %v3176, 16
    %v3196 = vpop.permute.xlu0 %3195
    %3197 = vrot.lane.b32.xlu0 %v3177, 16
    %v3198 = vpop.permute.xlu0 %3197
    %3199 = vrot.lane.b32.xlu0 %v3178, 16
    %v3200 = vpop.permute.xlu0 %3199
    %3201 = vrot.lane.b32.xlu0 %v3179, 16
    %v3202 = vpop.permute.xlu0 %3201
    %3203 = vrot.lane.b32.xlu0 %v3180, 16
    %v3204 = vpop.permute.xlu0 %3203
    %3205 = vrot.lane.b32.xlu0 %v3181, 16
    %v3206 = vpop.permute.xlu0 %3205
    %3207 = vrot.lane.b32.xlu0 %v3182, 16
    %v3208 = vpop.permute.xlu0 %3207
    %3209 = vrot.lane.b32.xlu0 %v3183, 16
    %v3210 = vpop.permute.xlu0 %3209
    %v3211 = vsel %vm197, %v3194, %v3196
    %v3212 = vsel %vm197, %v3196, %v3198
    %v3213 = vsel %vm197, %v3198, %v3200
    %v3214 = vsel %vm197, %v3200, %v3202
    %v3215 = vsel %vm197, %v3194, %v3204
    %v3216 = vsel %vm197, %v3204, %v3206
    %v3217 = vsel %vm197, %v3206, %v3208
    %v3218 = vsel %vm197, %v3208, %v3210
    %vm3223 = vcmask 195584
    %v3225 = vsel %vm3223, %v3174, 0
    %v3228 = vsel %vm206, %v3215, 0
    %v3231 = vsel %vm206, %v3216, 0
    %v3234 = vsel %vm206, %v3217, 0
    %v3237 = vsel %vm206, %v3218, 0
    %3239 = vmatprep.subr.bf16.mxu0 %v3212
    %3240 = vmatpush1.bf16.msra.mxu0 %v3211
    %3241 = vmatprep.subr.bf16.mxu0 %v3231
    %3242 = vmatpush1.bf16.msra.mxu0 %v3228
    %3243 = vmatprep.subr.bf16.mxu0 0
    %3244 = vmatpush1.bf16.msra.mxu0 0
    %3245 = vmatprep.subr.bf16.mxu0 0
    %3246 = vmatpush1.bf16.msra.mxu0 0
    %3247 = vmatprep.subr.bf16.mxu0 0
    %3248 = vmatpush1.bf16.msra.mxu0 0
    %3249 = vmatprep.subr.bf16.mxu0 0
    %3250 = vmatpush1.bf16.msra.mxu0 0
    %3251 = vmatprep.subr.bf16.mxu0 0
    %3252 = vmatpush1.bf16.msra.mxu0 0
    %3253 = vmatprep.subr.bf16.mxu0 0
    %3254 = vmatpush1.bf16.msra.mxu0 0
    %3255 = vmatprep.subr.bf16.mxu0 0
    %3256 = vmatpush1.bf16.msra.mxu0 0
    %3257 = vmatprep.subr.bf16.mxu0 0
    %3258 = vmatpush1.bf16.msra.mxu0 0
    %3259 = vmatprep.subr.bf16.mxu0 0
    %3260 = vmatpush1.bf16.msra.mxu0 0
    %3261 = vmatprep.subr.bf16.mxu0 0
    %3262 = vmatpush1.bf16.msra.mxu0 0
    %3263 = vmatprep.subr.bf16.mxu0 0
    %3264 = vmatpush1.bf16.msra.mxu0 0
    %3265 = vmatprep.subr.bf16.mxu0 0
    %3266 = vmatpush1.bf16.msra.mxu0 0
    %3267 = vmatprep.subr.bf16.mxu0 0
    %3268 = vmatpush1.bf16.msra.mxu0 0
    %3269 = vmatprep.subr.bf16.mxu0 0
    %3270 = vmatpush1.bf16.msra.mxu0 0
    %3271 = vmatprep.mubr.bf16.mxu0 0
    %3272 = vmatmul.mubr.bf16.gmra.mrb[0].mxu0 %v3225
    %v3273 = vpop.f32.mrb[0].mxu0
    %v3274 = vadd.f32 0.0, %v3273
    %v3275 = vpop.f32.mrb[0].mxu0
    %v3276 = vadd.f32 0.0, %v3275
    %v3277 = vpop.f32.mrb[0].mxu0
    %v3278 = vpop.f32.mrb[0].mxu0
    %3279 = vdwg.mxu0
    %3280 = vmatprep.subr.bf16.mxu0 %v3214
    %3281 = vmatpush1.bf16.msra.mxu0 %v3213
    %3282 = vmatprep.subr.bf16.mxu0 %v3237
    %3283 = vmatpush1.bf16.msra.mxu0 %v3234
    %3284 = vmatprep.subr.bf16.mxu0 0
    %3285 = vmatpush1.bf16.msra.mxu0 0
    %3286 = vmatprep.subr.bf16.mxu0 0
    %3287 = vmatpush1.bf16.msra.mxu0 0
    %3288 = vmatprep.subr.bf16.mxu0 0
    %3289 = vmatpush1.bf16.msra.mxu0 0
    %3290 = vmatprep.subr.bf16.mxu0 0
    %3291 = vmatpush1.bf16.msra.mxu0 0
    %3292 = vmatprep.subr.bf16.mxu0 0
    %3293 = vmatpush1.bf16.msra.mxu0 0
    %3294 = vmatprep.subr.bf16.mxu0 0
    %3295 = vmatpush1.bf16.msra.mxu0 0
    %3296 = vmatprep.subr.bf16.mxu0 0
    %3297 = vmatpush1.bf16.msra.mxu0 0
    %3298 = vmatprep.subr.bf16.mxu0 0
    %3299 = vmatpush1.bf16.msra.mxu0 0
    %3300 = vmatprep.subr.bf16.mxu0 0
    %3301 = vmatpush1.bf16.msra.mxu0 0
    %3302 = vmatprep.subr.bf16.mxu0 0
    %3303 = vmatpush1.bf16.msra.mxu0 0
    %3304 = vmatprep.subr.bf16.mxu0 0
    %3305 = vmatpush1.bf16.msra.mxu0 0
    %3306 = vmatprep.subr.bf16.mxu0 0
    %3307 = vmatpush1.bf16.msra.mxu0 0
    %3308 = vmatprep.subr.bf16.mxu0 0
    %3309 = vmatpush1.bf16.msra.mxu0 0
    %3310 = vmatprep.subr.bf16.mxu0 0
    %3311 = vmatpush1.bf16.msra.mxu0 0
    %3312 = vmatprep.mubr.bf16.mxu0 0
    %3313 = vmatmul.mubr.bf16.gmra.mrb[0].mxu0 %v3225
    %v3314 = vpop.f32.mrb[0].mxu0
    %v3315 = vadd.f32 0.0, %v3314
    %v3316 = vpop.f32.mrb[0].mxu0
    %v3317 = vadd.f32 0.0, %v3316
    %v3318 = vpop.f32.mrb[0].mxu0
    %v3319 = vpop.f32.mrb[0].mxu0
    %3320 = vdwg.mxu0
    %3330 = vrot.lane.b32.xlu0 %v3117, 17
    %v3331 = vpop.permute.xlu0 %3330
    %3332 = vrot.lane.b32.xlu0 %v3118, 17
    %v3333 = vpop.permute.xlu0 %3332
    %3334 = vrot.lane.b32.xlu0 %v3119, 17
    %v3335 = vpop.permute.xlu0 %3334
    %3336 = vrot.lane.b32.xlu0 %v3120, 17
    %v3337 = vpop.permute.xlu0 %3336
    %3338 = vrot.lane.b32.xlu0 %v3121, 17
    %v3339 = vpop.permute.xlu0 %3338
    %3340 = vrot.lane.b32.xlu0 %v3122, 17
    %v3341 = vpop.permute.xlu0 %3340
    %3342 = vrot.lane.b32.xlu0 %v3123, 17
    %v3343 = vpop.permute.xlu0 %3342
    %3344 = vrot.lane.b32.xlu0 %v3124, 17
    %v3345 = vpop.permute.xlu0 %3344
    %3346 = vrot.lane.b32.xlu0 %v3125, 17
    %v3347 = vpop.permute.xlu0 %3346
    %v3348 = vsel %vm316, %v3331, %v3333
    %v3349 = vsel %vm316, %v3333, %v3335
    %v3350 = vsel %vm316, %v3335, %v3337
    %v3351 = vsel %vm316, %v3337, %v3339
    %v3352 = vsel %vm316, %v3331, %v3341
    %v3353 = vsel %vm316, %v3341, %v3343
    %v3354 = vsel %vm316, %v3343, %v3345
    %v3355 = vsel %vm316, %v3345, %v3347
    %v3361 = vsel %vm3223, %v3116, 0
    %v3364 = vsel %vm206, %v3352, 0
    %v3367 = vsel %vm206, %v3353, 0
    %v3370 = vsel %vm206, %v3354, 0
    %v3373 = vsel %vm206, %v3355, 0
    %3375 = vmatprep.subr.bf16.mxu0 %v3349
    %3376 = vmatpush1.bf16.msra.mxu0 %v3348
    %3377 = vmatprep.subr.bf16.mxu0 %v3367
    %3378 = vmatpush1.bf16.msra.mxu0 %v3364
    %3379 = vmatprep.subr.bf16.mxu0 0
    %3380 = vmatpush1.bf16.msra.mxu0 0
    %3381 = vmatprep.subr.bf16.mxu0 0
    %3382 = vmatpush1.bf16.msra.mxu0 0
    %3383 = vmatprep.subr.bf16.mxu0 0
    %3384 = vmatpush1.bf16.msra.mxu0 0
    %3385 = vmatprep.subr.bf16.mxu0 0
    %3386 = vmatpush1.bf16.msra.mxu0 0
    %3387 = vmatprep.subr.bf16.mxu0 0
    %3388 = vmatpush1.bf16.msra.mxu0 0
    %3389 = vmatprep.subr.bf16.mxu0 0
    %3390 = vmatpush1.bf16.msra.mxu0 0
    %3391 = vmatprep.subr.bf16.mxu0 0
    %3392 = vmatpush1.bf16.msra.mxu0 0
    %3393 = vmatprep.subr.bf16.mxu0 0
    %3394 = vmatpush1.bf16.msra.mxu0 0
    %3395 = vmatprep.subr.bf16.mxu0 0
    %3396 = vmatpush1.bf16.msra.mxu0 0
    %3397 = vmatprep.subr.bf16.mxu0 0
    %3398 = vmatpush1.bf16.msra.mxu0 0
    %3399 = vmatprep.subr.bf16.mxu0 0
    %3400 = vmatpush1.bf16.msra.mxu0 0
    %3401 = vmatprep.subr.bf16.mxu0 0
    %3402 = vmatpush1.bf16.msra.mxu0 0
    %3403 = vmatprep.subr.bf16.mxu0 0
    %3404 = vmatpush1.bf16.msra.mxu0 0
    %3405 = vmatprep.subr.bf16.mxu0 0
    %3406 = vmatpush1.bf16.msra.mxu0 0
    %3407 = vmatprep.mubr.bf16.mxu0 0
    %3408 = vmatmul.mubr.bf16.gmra.mrb[0].mxu0 %v3361
    %v3409 = vpop.f32.mrb[0].mxu0
    %v3410 = vadd.f32 %v3274, %v3409
    %v3411 = vpop.f32.mrb[0].mxu0
    %v3412 = vadd.f32 %v3276, %v3411
    %v3413 = vpop.f32.mrb[0].mxu0
    %v3414 = vpop.f32.mrb[0].mxu0
    %3415 = vdwg.mxu0
    %3416 = vmatprep.subr.bf16.mxu0 %v3351
    %3417 = vmatpush1.bf16.msra.mxu0 %v3350
    %3418 = vmatprep.subr.bf16.mxu0 %v3373
    %3419 = vmatpush1.bf16.msra.mxu0 %v3370
    %3420 = vmatprep.subr.bf16.mxu0 0
    %3421 = vmatpush1.bf16.msra.mxu0 0
    %3422 = vmatprep.subr.bf16.mxu0 0
    %3423 = vmatpush1.bf16.msra.mxu0 0
    %3424 = vmatprep.subr.bf16.mxu0 0
    %3425 = vmatpush1.bf16.msra.mxu0 0
    %3426 = vmatprep.subr.bf16.mxu0 0
    %3427 = vmatpush1.bf16.msra.mxu0 0
    %3428 = vmatprep.subr.bf16.mxu0 0
    %3429 = vmatpush1.bf16.msra.mxu0 0
    %3430 = vmatprep.subr.bf16.mxu0 0
    %3431 = vmatpush1.bf16.msra.mxu0 0
    %3432 = vmatprep.subr.bf16.mxu0 0
    %3433 = vmatpush1.bf16.msra.mxu0 0
    %3434 = vmatprep.subr.bf16.mxu0 0
    %3435 = vmatpush1.bf16.msra.mxu0 0
    %3436 = vmatprep.subr.bf16.mxu0 0
    %3437 = vmatpush1.bf16.msra.mxu0 0
    %3438 = vmatprep.subr.bf16.mxu0 0
    %3439 = vmatpush1.bf16.msra.mxu0 0
    %3440 = vmatprep.subr.bf16.mxu0 0
    %3441 = vmatpush1.bf16.msra.mxu0 0
    %3442 = vmatprep.subr.bf16.mxu0 0
    %3443 = vmatpush1.bf16.msra.mxu0 0
    %3444 = vmatprep.subr.bf16.mxu0 0
    %3445 = vmatpush1.bf16.msra.mxu0 0
    %3446 = vmatprep.subr.bf16.mxu0 0
    %3447 = vmatpush1.bf16.msra.mxu0 0
    %3448 = vmatprep.mubr.bf16.mxu0 0
    %3449 = vmatmul.mubr.bf16.gmra.mrb[0].mxu0 %v3361
    %v3450 = vpop.f32.mrb[0].mxu0
    %v3451 = vadd.f32 %v3315, %v3450
    %v3452 = vpop.f32.mrb[0].mxu0
    %v3453 = vadd.f32 %v3317, %v3452
    %v3454 = vpop.f32.mrb[0].mxu0
    %v3455 = vpop.f32.mrb[0].mxu0
    %3456 = vdwg.mxu0
    %v3457 = vld [vmem:[%s418] ss:$8 sm:$0xf]
    %v3459 = vlaneseq
    %v3460 = vshrl.u32 %v3459, 7
    %v3461 = vsub.s32 0, %v3460
    %v3462 = vrot.slane %v3457, %v3461
    %v3463 = vlaneseq
    %v3464 = vshrl.u32 %v3463, 7
    %v3465 = vsub.s32 1, %v3464
    %v3466 = vrot.slane %v3457, %v3465
    %v3467 = vlaneseq
    %v3468 = vshrl.u32 %v3467, 7
    %v3469 = vsub.s32 2, %v3468
    %v3470 = vrot.slane %v3457, %v3469
    %v3471 = vlaneseq
    %v3472 = vshrl.u32 %v3471, 7
    %v3473 = vsub.s32 3, %v3472
    %v3474 = vrot.slane %v3457, %v3473
    %3475 = vrot.lane.b32.xlu0 %v3462, 113
    %v3476 = vpop.permute.xlu0 %3475
    %3477 = vrot.lane.b32.xlu0 %v3466, 113
    %v3478 = vpop.permute.xlu0 %3477
    %3479 = vrot.lane.b32.xlu0 %v3470, 113
    %v3480 = vpop.permute.xlu0 %3479
    %3481 = vrot.lane.b32.xlu0 %v3474, 113
    %v3482 = vpop.permute.xlu0 %3481
    %v3483 = vsel %vm445, %v3476, %v3478
    %v3484 = vsel %vm445, %v3478, %v3480
    %v3485 = vsel %vm445, %v3480, %v3482
    %v3491 = vmul.f32 %v3476, 0.0
    %v3492 = vmul.f32 %v3057, %v3483
    %v3493 = vmul.f32 %v3058, %v3484
    %v3494 = vmul.f32 %v3059, %v3485
    %v3495 = vmul.f32 %v3060, %v3482
    %v3496 = vmul.f32 %v3061, %v3483
    %v3497 = vmul.f32 %v3062, %v3484
    %v3498 = vmul.f32 %v3063, %v3485
    %v3499 = vmul.f32 %v3064, %v3482
    %v3500 = vmul.f32 %v3065, %v3483
    %v3501 = vmul.f32 %v3066, %v3484
    %v3502 = vmul.f32 %v3067, %v3485
    %v3503 = vmul.f32 %v3068, %v3482
    %s3504 = scalar_lea.vmem %s10, 8
    %v3505 = vld [vmem:[%s3504] sm:$0xf]
    %v3506 = vpack.c.bf16 %v3491, %v3491
    %v3507 = vpack.c.bf16 %v3496, %v3492
    %v3508 = vpack.c.bf16 %v3497, %v3493
    %v3509 = vpack.c.bf16 %v3498, %v3494
    %v3510 = vpack.c.bf16 %v3499, %v3495
    %v3511 = vpack.c.bf16 %v3500, %v3500
    %v3512 = vpack.c.bf16 %v3501, %v3501
    %v3513 = vpack.c.bf16 %v3502, %v3502
    %v3514 = vpack.c.bf16 %v3503, %v3503
    %3524 = vrot.lane.b32.xlu0 %v3506, 15
    %v3525 = vpop.permute.xlu0 %3524
    %3526 = vrot.lane.b32.xlu0 %v3507, 15
    %v3527 = vpop.permute.xlu0 %3526
    %3528 = vrot.lane.b32.xlu0 %v3508, 15
    %v3529 = vpop.permute.xlu0 %3528
    %3530 = vrot.lane.b32.xlu0 %v3509, 15
    %v3531 = vpop.permute.xlu0 %3530
    %3532 = vrot.lane.b32.xlu0 %v3510, 15
    %v3533 = vpop.permute.xlu0 %3532
    %3534 = vrot.lane.b32.xlu0 %v3511, 15
    %v3535 = vpop.permute.xlu0 %3534
    %3536 = vrot.lane.b32.xlu0 %v3512, 15
    %v3537 = vpop.permute.xlu0 %3536
    %3538 = vrot.lane.b32.xlu0 %v3513, 15
    %v3539 = vpop.permute.xlu0 %3538
    %3540 = vrot.lane.b32.xlu0 %v3514, 15
    %v3541 = vpop.permute.xlu0 %3540
    %v3542 = vsel %vm481, %v3525, %v3527
    %v3543 = vsel %vm481, %v3527, %v3529
    %v3544 = vsel %vm481, %v3529, %v3531
    %v3545 = vsel %vm481, %v3531, %v3533
    %v3546 = vsel %vm481, %v3525, %v3535
    %v3547 = vsel %vm481, %v3535, %v3537
    %v3548 = vsel %vm481, %v3537, %v3539
    %v3549 = vsel %vm481, %v3539, %v3541
    %v3555 = vsel %vm3223, %v3505, 0
    %v3558 = vsel %vm206, %v3546, 0
    %v3561 = vsel %vm206, %v3547, 0
    %v3564 = vsel %vm206, %v3548, 0
    %v3567 = vsel %vm206, %v3549, 0
    %3569 = vmatprep.subr.bf16.mxu0 %v3543
    %3570 = vmatpush1.bf16.msra.mxu0 %v3542
    %3571 = vmatprep.subr.bf16.mxu0 %v3561
    %3572 = vmatpush1.bf16.msra.mxu0 %v3558
    %3573 = vmatprep.subr.bf16.mxu0 0
    %3574 = vmatpush1.bf16.msra.mxu0 0
    %3575 = vmatprep.subr.bf16.mxu0 0
    %3576 = vmatpush1.bf16.msra.mxu0 0
    %3577 = vmatprep.subr.bf16.mxu0 0
    %3578 = vmatpush1.bf16.msra.mxu0 0
    %3579 = vmatprep.subr.bf16.mxu0 0
    %3580 = vmatpush1.bf16.msra.mxu0 0
    %3581 = vmatprep.subr.bf16.mxu0 0
    %3582 = vmatpush1.bf16.msra.mxu0 0
    %3583 = vmatprep.subr.bf16.mxu0 0
    %3584 = vmatpush1.bf16.msra.mxu0 0
    %3585 = vmatprep.subr.bf16.mxu0 0
    %3586 = vmatpush1.bf16.msra.mxu0 0
    %3587 = vmatprep.subr.bf16.mxu0 0
    %3588 = vmatpush1.bf16.msra.mxu0 0
    %3589 = vmatprep.subr.bf16.mxu0 0
    %3590 = vmatpush1.bf16.msra.mxu0 0
    %3591 = vmatprep.subr.bf16.mxu0 0
    %3592 = vmatpush1.bf16.msra.mxu0 0
    %3593 = vmatprep.subr.bf16.mxu0 0
    %3594 = vmatpush1.bf16.msra.mxu0 0
    %3595 = vmatprep.subr.bf16.mxu0 0
    %3596 = vmatpush1.bf16.msra.mxu0 0
    %3597 = vmatprep.subr.bf16.mxu0 0
    %3598 = vmatpush1.bf16.msra.mxu0 0
    %3599 = vmatprep.subr.bf16.mxu0 0
    %3600 = vmatpush1.bf16.msra.mxu0 0
    %3601 = vmatprep.mubr.bf16.mxu0 0
    %3602 = vmatmul.mubr.bf16.gmra.mrb[0].mxu0 %v3555
    %v3603 = vpop.f32.mrb[0].mxu0
    %v3604 = vadd.f32 0.0, %v3603
    %v3605 = vpop.f32.mrb[0].mxu0
    %v3606 = vadd.f32 0.0, %v3605
    %v3607 = vpop.f32.mrb[0].mxu0
    %v3608 = vpop.f32.mrb[0].mxu0
    %3609 = vdwg.mxu0
    %3610 = vmatprep.subr.bf16.mxu0 %v3545
    %3611 = vmatpush1.bf16.msra.mxu0 %v3544
    %3612 = vmatprep.subr.bf16.mxu0 %v3567
    %3613 = vmatpush1.bf16.msra.mxu0 %v3564
    %3614 = vmatprep.subr.bf16.mxu0 0
    %3615 = vmatpush1.bf16.msra.mxu0 0
    %3616 = vmatprep.subr.bf16.mxu0 0
    %3617 = vmatpush1.bf16.msra.mxu0 0
    %3618 = vmatprep.subr.bf16.mxu0 0
    %3619 = vmatpush1.bf16.msra.mxu0 0
    %3620 = vmatprep.subr.bf16.mxu0 0
    %3621 = vmatpush1.bf16.msra.mxu0 0
    %3622 = vmatprep.subr.bf16.mxu0 0
    %3623 = vmatpush1.bf16.msra.mxu0 0
    %3624 = vmatprep.subr.bf16.mxu0 0
    %3625 = vmatpush1.bf16.msra.mxu0 0
    %3626 = vmatprep.subr.bf16.mxu0 0
    %3627 = vmatpush1.bf16.msra.mxu0 0
    %3628 = vmatprep.subr.bf16.mxu0 0
    %3629 = vmatpush1.bf16.msra.mxu0 0
    %3630 = vmatprep.subr.bf16.mxu0 0
    %3631 = vmatpush1.bf16.msra.mxu0 0
    %3632 = vmatprep.subr.bf16.mxu0 0
    %3633 = vmatpush1.bf16.msra.mxu0 0
    %3634 = vmatprep.subr.bf16.mxu0 0
    %3635 = vmatpush1.bf16.msra.mxu0 0
    %3636 = vmatprep.subr.bf16.mxu0 0
    %3637 = vmatpush1.bf16.msra.mxu0 0
    %3638 = vmatprep.subr.bf16.mxu0 0
    %3639 = vmatpush1.bf16.msra.mxu0 0
    %3640 = vmatprep.subr.bf16.mxu0 0
    %3641 = vmatpush1.bf16.msra.mxu0 0
    %3642 = vmatprep.mubr.bf16.mxu0 0
    %3643 = vmatmul.mubr.bf16.gmra.mrb[0].mxu0 %v3555
    %v3644 = vpop.f32.mrb[0].mxu0
    %v3645 = vadd.f32 0.0, %v3644
    %v3646 = vpop.f32.mrb[0].mxu0
    %v3647 = vadd.f32 0.0, %v3646
    %v3648 = vpop.f32.mrb[0].mxu0
    %v3649 = vpop.f32.mrb[0].mxu0
    %3650 = vdwg.mxu0
    %v3651 = vadd.f32 %v3410, %v3604
    %v3652 = vadd.f32 %v3412, %v3606
    %v3653 = vadd.f32 %v3451, %v3645
    %v3654 = vadd.f32 %v3453, %v3647
    %v3655 = vld [vmem:[%s587] ss:$8 sm:$0xf]
    %v3657 = vlaneseq
    %v3658 = vshrl.u32 %v3657, 7
    %v3659 = vsub.s32 0, %v3658
    %v3660 = vrot.slane %v3655, %v3659
    %v3661 = vlaneseq
    %v3662 = vshrl.u32 %v3661, 7
    %v3663 = vsub.s32 1, %v3662
    %v3664 = vrot.slane %v3655, %v3663
    %v3665 = vlaneseq
    %v3666 = vshrl.u32 %v3665, 7
    %v3667 = vsub.s32 2, %v3666
    %v3668 = vrot.slane %v3655, %v3667
    %v3669 = vlaneseq
    %v3670 = vshrl.u32 %v3669, 7
    %v3671 = vsub.s32 3, %v3670
    %v3672 = vrot.slane %v3655, %v3671
    %3673 = vrot.lane.b32.xlu0 %v3660, 127
    %v3674 = vpop.permute.xlu0 %3673
    %3675 = vrot.lane.b32.xlu0 %v3664, 127
    %v3676 = vpop.permute.xlu0 %3675
    %3677 = vrot.lane.b32.xlu0 %v3668, 127
    %v3678 = vpop.permute.xlu0 %3677
    %3679 = vrot.lane.b32.xlu0 %v3672, 127
    %v3680 = vpop.permute.xlu0 %3679
    %v3681 = vsel %vm614, %v3674, %v3676
    %v3682 = vsel %vm614, %v3676, %v3678
    %v3683 = vsel %vm614, %v3678, %v3680
    %v3689 = vmul.f32 %v3674, 0.0
    %v3690 = vmul.f32 %v3057, %v3681
    %v3691 = vmul.f32 %v3058, %v3682
    %v3692 = vmul.f32 %v3059, %v3683
    %v3693 = vmul.f32 %v3060, %v3680
    %v3694 = vmul.f32 %v3061, %v3681
    %v3695 = vmul.f32 %v3062, %v3682
    %v3696 = vmul.f32 %v3063, %v3683
    %v3697 = vmul.f32 %v3064, %v3680
    %v3698 = vmul.f32 %v3065, %v3681
    %v3699 = vmul.f32 %v3066, %v3682
    %v3700 = vmul.f32 %v3067, %v3683
    %v3701 = vmul.f32 %v3068, %v3680
    %s3702 = scalar_lea.vmem %s10, 12
    %v3703 = vld [vmem:[%s3702] sm:$0xf]
    %v3704 = vpack.c.bf16 %v3689, %v3689
    %v3705 = vpack.c.bf16 %v3694, %v3690
    %v3706 = vpack.c.bf16 %v3695, %v3691
    %v3707 = vpack.c.bf16 %v3696, %v3692
    %v3708 = vpack.c.bf16 %v3697, %v3693
    %v3709 = vpack.c.bf16 %v3698, %v3698
    %v3710 = vpack.c.bf16 %v3699, %v3699
    %v3711 = vpack.c.bf16 %v3700, %v3700
    %v3712 = vpack.c.bf16 %v3701, %v3701
    %3722 = vrot.lane.b32.xlu0 %v3704, 1
    %v3723 = vpop.permute.xlu0 %3722
    %3724 = vrot.lane.b32.xlu0 %v3705, 1
    %v3725 = vpop.permute.xlu0 %3724
    %3726 = vrot.lane.b32.xlu0 %v3706, 1
    %v3727 = vpop.permute.xlu0 %3726
    %3728 = vrot.lane.b32.xlu0 %v3707, 1
    %v3729 = vpop.permute.xlu0 %3728
    %3730 = vrot.lane.b32.xlu0 %v3708, 1
    %v3731 = vpop.permute.xlu0 %3730
    %3732 = vrot.lane.b32.xlu0 %v3709, 1
    %v3733 = vpop.permute.xlu0 %3732
    %3734 = vrot.lane.b32.xlu0 %v3710, 1
    %v3735 = vpop.permute.xlu0 %3734
    %3736 = vrot.lane.b32.xlu0 %v3711, 1
    %v3737 = vpop.permute.xlu0 %3736
    %3738 = vrot.lane.b32.xlu0 %v3712, 1
    %v3739 = vpop.permute.xlu0 %3738
    %v3740 = vsel %vm650, %v3723, %v3725
    %v3741 = vsel %vm650, %v3725, %v3727
    %v3742 = vsel %vm650, %v3727, %v3729
    %v3743 = vsel %vm650, %v3729, %v3731
    %v3744 = vsel %vm650, %v3723, %v3733
    %v3745 = vsel %vm650, %v3733, %v3735
    %v3746 = vsel %vm650, %v3735, %v3737
    %v3747 = vsel %vm650, %v3737, %v3739
    %v3753 = vsel %vm3223, %v3703, 0
    %v3756 = vsel %vm206, %v3744, 0
    %v3759 = vsel %vm206, %v3745, 0
    %v3762 = vsel %vm206, %v3746, 0
    %v3765 = vsel %vm206, %v3747, 0
    %3767 = vmatprep.subr.bf16.mxu0 %v3741
    %3768 = vmatpush1.bf16.msra.mxu0 %v3740
    %3769 = vmatprep.subr.bf16.mxu0 %v3759
    %3770 = vmatpush1.bf16.msra.mxu0 %v3756
    %3771 = vmatprep.subr.bf16.mxu0 0
    %3772 = vmatpush1.bf16.msra.mxu0 0
    %3773 = vmatprep.subr.bf16.mxu0 0
    %3774 = vmatpush1.bf16.msra.mxu0 0
    %3775 = vmatprep.subr.bf16.mxu0 0
    %3776 = vmatpush1.bf16.msra.mxu0 0
    %3777 = vmatprep.subr.bf16.mxu0 0
    %3778 = vmatpush1.bf16.msra.mxu0 0
    %3779 = vmatprep.subr.bf16.mxu0 0
    %3780 = vmatpush1.bf16.msra.mxu0 0
    %3781 = vmatprep.subr.bf16.mxu0 0
    %3782 = vmatpush1.bf16.msra.mxu0 0
    %3783 = vmatprep.subr.bf16.mxu0 0
    %3784 = vmatpush1.bf16.msra.mxu0 0
    %3785 = vmatprep.subr.bf16.mxu0 0
    %3786 = vmatpush1.bf16.msra.mxu0 0
    %3787 = vmatprep.subr.bf16.mxu0 0
    %3788 = vmatpush1.bf16.msra.mxu0 0
    %3789 = vmatprep.subr.bf16.mxu0 0
    %3790 = vmatpush1.bf16.msra.mxu0 0
    %3791 = vmatprep.subr.bf16.mxu0 0
    %3792 = vmatpush1.bf16.msra.mxu0 0
    %3793 = vmatprep.subr.bf16.mxu0 0
    %3794 = vmatpush1.bf16.msra.mxu0 0
    %3795 = vmatprep.subr.bf16.mxu0 0
    %3796 = vmatpush1.bf16.msra.mxu0 0
    %3797 = vmatprep.subr.bf16.mxu0 0
    %3798 = vmatpush1.bf16.msra.mxu0 0
    %3799 = vmatprep.mubr.bf16.mxu0 0
    %3800 = vmatmul.mubr.bf16.gmra.mrb[0].mxu0 %v3753
    %v3801 = vpop.f32.mrb[0].mxu0
    %v3802 = vadd.f32 0.0, %v3801
    %v3803 = vpop.f32.mrb[0].mxu0
    %v3804 = vadd.f32 0.0, %v3803
    %v3805 = vpop.f32.mrb[0].mxu0
    %v3806 = vpop.f32.mrb[0].mxu0
    %3807 = vdwg.mxu0
    %3808 = vmatprep.subr.bf16.mxu0 %v3743
    %3809 = vmatpush1.bf16.msra.mxu0 %v3742
    %3810 = vmatprep.subr.bf16.mxu0 %v3765
    %3811 = vmatpush1.bf16.msra.mxu0 %v3762
    %3812 = vmatprep.subr.bf16.mxu0 0
    %3813 = vmatpush1.bf16.msra.mxu0 0
    %3814 = vmatprep.subr.bf16.mxu0 0
    %3815 = vmatpush1.bf16.msra.mxu0 0
    %3816 = vmatprep.subr.bf16.mxu0 0
    %3817 = vmatpush1.bf16.msra.mxu0 0
    %3818 = vmatprep.subr.bf16.mxu0 0
    %3819 = vmatpush1.bf16.msra.mxu0 0
    %3820 = vmatprep.subr.bf16.mxu0 0
    %3821 = vmatpush1.bf16.msra.mxu0 0
    %3822 = vmatprep.subr.bf16.mxu0 0
    %3823 = vmatpush1.bf16.msra.mxu0 0
    %3824 = vmatprep.subr.bf16.mxu0 0
    %3825 = vmatpush1.bf16.msra.mxu0 0
    %3826 = vmatprep.subr.bf16.mxu0 0
    %3827 = vmatpush1.bf16.msra.mxu0 0
    %3828 = vmatprep.subr.bf16.mxu0 0
    %3829 = vmatpush1.bf16.msra.mxu0 0
    %3830 = vmatprep.subr.bf16.mxu0 0
    %3831 = vmatpush1.bf16.msra.mxu0 0
    %3832 = vmatprep.subr.bf16.mxu0 0
    %3833 = vmatpush1.bf16.msra.mxu0 0
    %3834 = vmatprep.subr.bf16.mxu0 0
    %3835 = vmatpush1.bf16.msra.mxu0 0
    %3836 = vmatprep.subr.bf16.mxu0 0
    %3837 = vmatpush1.bf16.msra.mxu0 0
    %3838 = vmatprep.subr.bf16.mxu0 0
    %3839 = vmatpush1.bf16.msra.mxu0 0
    %3840 = vmatprep.mubr.bf16.mxu0 0
    %3841 = vmatmul.mubr.bf16.gmra.mrb[0].mxu0 %v3753
    %v3842 = vpop.f32.mrb[0].mxu0
    %v3843 = vadd.f32 0.0, %v3842
    %v3844 = vpop.f32.mrb[0].mxu0
    %v3845 = vadd.f32 0.0, %v3844
    %v3846 = vpop.f32.mrb[0].mxu0
    %v3847 = vpop.f32.mrb[0].mxu0
    %3848 = vdwg.mxu0
    %v3849 = vadd.f32 %v3651, %v3802
    %v3850 = vadd.f32 %v3652, %v3804
    %v3851 = vadd.f32 %v3653, %v3843
    %v3852 = vadd.f32 %v3654, %v3845
    %s3853 = scalar_lea.vmem %s10, 16
    %v3854 = vld [vmem:[%s3853] sm:$0xf]
    %v3855 = vpack.c.bf16 %v3061, %v3057
    %v3856 = vpack.c.bf16 %v3062, %v3058
    %v3857 = vpack.c.bf16 %v3063, %v3059
    %v3858 = vpack.c.bf16 %v3064, %v3060
    %v3859 = vpack.c.bf16 %v3065, %v3065
    %v3860 = vpack.c.bf16 %v3066, %v3066
    %v3861 = vpack.c.bf16 %v3067, %v3067
    %v3862 = vpack.c.bf16 %v3068, %v3068
    %v3864 = vsel %vm3223, %v3854, 0
    %v3867 = vsel %vm206, %v3859, 0
    %v3870 = vsel %vm206, %v3860, 0
    %v3873 = vsel %vm206, %v3861, 0
    %v3876 = vsel %vm206, %v3862, 0
    %3878 = vmatprep.subr.bf16.mxu0 %v3856
    %3879 = vmatpush1.bf16.msra.mxu0 %v3855
    %3880 = vmatprep.subr.bf16.mxu0 %v3870
    %3881 = vmatpush1.bf16.msra.mxu0 %v3867
    %3882 = vmatprep.subr.bf16.mxu0 0
    %3883 = vmatpush1.bf16.msra.mxu0 0
    %3884 = vmatprep.subr.bf16.mxu0 0
    %3885 = vmatpush1.bf16.msra.mxu0 0
    %3886 = vmatprep.subr.bf16.mxu0 0
    %3887 = vmatpush1.bf16.msra.mxu0 0
    %3888 = vmatprep.subr.bf16.mxu0 0
    %3889 = vmatpush1.bf16.msra.mxu0 0
    %3890 = vmatprep.subr.bf16.mxu0 0
    %3891 = vmatpush1.bf16.msra.mxu0 0
    %3892 = vmatprep.subr.bf16.mxu0 0
    %3893 = vmatpush1.bf16.msra.mxu0 0
    %3894 = vmatprep.subr.bf16.mxu0 0
    %3895 = vmatpush1.bf16.msra.mxu0 0
    %3896 = vmatprep.subr.bf16.mxu0 0
    %3897 = vmatpush1.bf16.msra.mxu0 0
    %3898 = vmatprep.subr.bf16.mxu0 0
    %3899 = vmatpush1.bf16.msra.mxu0 0
    %3900 = vmatprep.subr.bf16.mxu0 0
    %3901 = vmatpush1.bf16.msra.mxu0 0
    %3902 = vmatprep.subr.bf16.mxu0 0
    %3903 = vmatpush1.bf16.msra.mxu0 0
    %3904 = vmatprep.subr.bf16.mxu0 0
    %3905 = vmatpush1.bf16.msra.mxu0 0
    %3906 = vmatprep.subr.bf16.mxu0 0
    %3907 = vmatpush1.bf16.msra.mxu0 0
    %3908 = vmatprep.subr.bf16.mxu0 0
    %3909 = vmatpush1.bf16.msra.mxu0 0
    %3910 = vmatprep.mubr.bf16.mxu0 0
    %3911 = vmatmul.mubr.bf16.gmra.mrb[0].mxu0 %v3864
    %v3912 = vpop.f32.mrb[0].mxu0
    %v3913 = vadd.f32 0.0, %v3912
    %v3914 = vpop.f32.mrb[0].mxu0
    %v3915 = vadd.f32 0.0, %v3914
    %v3916 = vpop.f32.mrb[0].mxu0
    %v3917 = vpop.f32.mrb[0].mxu0
    %3918 = vdwg.mxu0
    %3919 = vmatprep.subr.bf16.mxu0 %v3858
    %3920 = vmatpush1.bf16.msra.mxu0 %v3857
    %3921 = vmatprep.subr.bf16.mxu0 %v3876
    %3922 = vmatpush1.bf16.msra.mxu0 %v3873
    %3923 = vmatprep.subr.bf16.mxu0 0
    %3924 = vmatpush1.bf16.msra.mxu0 0
    %3925 = vmatprep.subr.bf16.mxu0 0
    %3926 = vmatpush1.bf16.msra.mxu0 0
    %3927 = vmatprep.subr.bf16.mxu0 0
    %3928 = vmatpush1.bf16.msra.mxu0 0
    %3929 = vmatprep.subr.bf16.mxu0 0
    %3930 = vmatpush1.bf16.msra.mxu0 0
    %3931 = vmatprep.subr.bf16.mxu0 0
    %3932 = vmatpush1.bf16.msra.mxu0 0
    %3933 = vmatprep.subr.bf16.mxu0 0
    %3934 = vmatpush1.bf16.msra.mxu0 0
    %3935 = vmatprep.subr.bf16.mxu0 0
    %3936 = vmatpush1.bf16.msra.mxu0 0
    %3937 = vmatprep.subr.bf16.mxu0 0
    %3938 = vmatpush1.bf16.msra.mxu0 0
    %3939 = vmatprep.subr.bf16.mxu0 0
    %3940 = vmatpush1.bf16.msra.mxu0 0
    %3941 = vmatprep.subr.bf16.mxu0 0
    %3942 = vmatpush1.bf16.msra.mxu0 0
    %3943 = vmatprep.subr.bf16.mxu0 0
    %3944 = vmatpush1.bf16.msra.mxu0 0
    %3945 = vmatprep.subr.bf16.mxu0 0
    %3946 = vmatpush1.bf16.msra.mxu0 0
    %3947 = vmatprep.subr.bf16.mxu0 0
    %3948 = vmatpush1.bf16.msra.mxu0 0
    %3949 = vmatprep.subr.bf16.mxu0 0
    %3950 = vmatpush1.bf16.msra.mxu0 0
    %3951 = vmatprep.mubr.bf16.mxu0 0
    %3952 = vmatmul.mubr.bf16.gmra.mrb[0].mxu0 %v3864
    %v3953 = vpop.f32.mrb[0].mxu0
    %v3954 = vadd.f32 0.0, %v3953
    %v3955 = vpop.f32.mrb[0].mxu0
    %v3956 = vadd.f32 0.0, %v3955
    %v3957 = vpop.f32.mrb[0].mxu0
    %v3958 = vpop.f32.mrb[0].mxu0
    %3959 = vdwg.mxu0
    %v3960 = vadd.f32 %v3849, %v3913
    %v3961 = vadd.f32 %v3850, %v3915
    %v3962 = vadd.f32 %v3851, %v3954
    %v3963 = vadd.f32 %v3852, %v3956
    %v3964 = vld [vmem:[%s863] ss:$8 sm:$0xf]
    %v3966 = vlaneseq
    %v3967 = vshrl.u32 %v3966, 7
    %v3968 = vsub.s32 0, %v3967
    %v3969 = vrot.slane %v3964, %v3968
    %v3970 = vlaneseq
    %v3971 = vshrl.u32 %v3970, 7
    %v3972 = vsub.s32 1, %v3971
    %v3973 = vrot.slane %v3964, %v3972
    %v3974 = vlaneseq
    %v3975 = vshrl.u32 %v3974, 7
    %v3976 = vsub.s32 2, %v3975
    %v3977 = vrot.slane %v3964, %v3976
    %v3978 = vlaneseq
    %v3979 = vshrl.u32 %v3978, 7
    %v3980 = vsub.s32 3, %v3979
    %v3981 = vrot.slane %v3964, %v3980
    %3982 = vrot.lane.b32.xlu0 %v3969, 1
    %v3983 = vpop.permute.xlu0 %3982
    %3984 = vrot.lane.b32.xlu0 %v3973, 1
    %v3985 = vpop.permute.xlu0 %3984
    %3986 = vrot.lane.b32.xlu0 %v3977, 1
    %v3987 = vpop.permute.xlu0 %3986
    %3988 = vrot.lane.b32.xlu0 %v3981, 1
    %v3989 = vpop.permute.xlu0 %3988
    %v3990 = vsel %vm890, %v3983, %v3985
    %v3991 = vsel %vm890, %v3985, %v3987
    %v3992 = vsel %vm890, %v3987, %v3989
    %v3998 = vmul.f32 %v3057, %v3983
    %v3999 = vmul.f32 %v3058, %v3990
    %v4000 = vmul.f32 %v3059, %v3991
    %v4001 = vmul.f32 %v3060, %v3992
    %v4002 = vmul.f32 %v3989, 0.0
    %v4003 = vmul.f32 %v3061, %v3983
    %v4004 = vmul.f32 %v3062, %v3990
    %v4005 = vmul.f32 %v3063, %v3991
    %v4006 = vmul.f32 %v3064, %v3992
    %v4007 = vmul.f32 %v3065, %v3983
    %v4008 = vmul.f32 %v3066, %v3990
    %v4009 = vmul.f32 %v3067, %v3991
    %v4010 = vmul.f32 %v3068, %v3992
    %s4011 = scalar_lea.vmem %s10, 20
    %v4012 = vld [vmem:[%s4011] sm:$0xf]
    %v4013 = vpack.c.bf16 %v4003, %v3998
    %v4014 = vpack.c.bf16 %v4004, %v3999
    %v4015 = vpack.c.bf16 %v4005, %v4000
    %v4016 = vpack.c.bf16 %v4006, %v4001
    %v4017 = vpack.c.bf16 %v4002, %v4002
    %v4018 = vpack.c.bf16 %v4007, %v4007
    %v4019 = vpack.c.bf16 %v4008, %v4008
    %v4020 = vpack.c.bf16 %v4009, %v4009
    %v4021 = vpack.c.bf16 %v4010, %v4010
    %4031 = vrot.lane.b32.xlu0 %v4013, 127
    %v4032 = vpop.permute.xlu0 %4031
    %4033 = vrot.lane.b32.xlu0 %v4014, 127
    %v4034 = vpop.permute.xlu0 %4033
    %4035 = vrot.lane.b32.xlu0 %v4015, 127
    %v4036 = vpop.permute.xlu0 %4035
    %4037 = vrot.lane.b32.xlu0 %v4016, 127
    %v4038 = vpop.permute.xlu0 %4037
    %4039 = vrot.lane.b32.xlu0 %v4017, 127
    %v4040 = vpop.permute.xlu0 %4039
    %4041 = vrot.lane.b32.xlu0 %v4018, 127
    %v4042 = vpop.permute.xlu0 %4041
    %4043 = vrot.lane.b32.xlu0 %v4019, 127
    %v4044 = vpop.permute.xlu0 %4043
    %4045 = vrot.lane.b32.xlu0 %v4020, 127
    %v4046 = vpop.permute.xlu0 %4045
    %4047 = vrot.lane.b32.xlu0 %v4021, 127
    %v4048 = vpop.permute.xlu0 %4047
    %v4049 = vsel %vm926, %v4032, %v4034
    %v4050 = vsel %vm926, %v4034, %v4036
    %v4051 = vsel %vm926, %v4036, %v4038
    %v4052 = vsel %vm926, %v4038, %v4040
    %v4053 = vsel %vm926, %v4042, %v4044
    %v4054 = vsel %vm926, %v4044, %v4046
    %v4055 = vsel %vm926, %v4046, %v4048
    %v4056 = vsel %vm926, %v4048, %v4040
    %v4062 = vsel %vm3223, %v4012, 0
    %v4065 = vsel %vm206, %v4053, 0
    %v4068 = vsel %vm206, %v4054, 0
    %v4071 = vsel %vm206, %v4055, 0
    %v4074 = vsel %vm206, %v4056, 0
    %4076 = vmatprep.subr.bf16.mxu0 %v4050
    %4077 = vmatpush1.bf16.msra.mxu0 %v4049
    %4078 = vmatprep.subr.bf16.mxu0 %v4068
    %4079 = vmatpush1.bf16.msra.mxu0 %v4065
    %4080 = vmatprep.subr.bf16.mxu0 0
    %4081 = vmatpush1.bf16.msra.mxu0 0
    %4082 = vmatprep.subr.bf16.mxu0 0
    %4083 = vmatpush1.bf16.msra.mxu0 0
    %4084 = vmatprep.subr.bf16.mxu0 0
    %4085 = vmatpush1.bf16.msra.mxu0 0
    %4086 = vmatprep.subr.bf16.mxu0 0
    %4087 = vmatpush1.bf16.msra.mxu0 0
    %4088 = vmatprep.subr.bf16.mxu0 0
    %4089 = vmatpush1.bf16.msra.mxu0 0
    %4090 = vmatprep.subr.bf16.mxu0 0
    %4091 = vmatpush1.bf16.msra.mxu0 0
    %4092 = vmatprep.subr.bf16.mxu0 0
    %4093 = vmatpush1.bf16.msra.mxu0 0
    %4094 = vmatprep.subr.bf16.mxu0 0
    %4095 = vmatpush1.bf16.msra.mxu0 0
    %4096 = vmatprep.subr.bf16.mxu0 0
    %4097 = vmatpush1.bf16.msra.mxu0 0
    %4098 = vmatprep.subr.bf16.mxu0 0
    %4099 = vmatpush1.bf16.msra.mxu0 0
    %4100 = vmatprep.subr.bf16.mxu0 0
    %4101 = vmatpush1.bf16.msra.mxu0 0
    %4102 = vmatprep.subr.bf16.mxu0 0
    %4103 = vmatpush1.bf16.msra.mxu0 0
    %4104 = vmatprep.subr.bf16.mxu0 0
    %4105 = vmatpush1.bf16.msra.mxu0 0
    %4106 = vmatprep.subr.bf16.mxu0 0
    %4107 = vmatpush1.bf16.msra.mxu0 0
    %4108 = vmatprep.mubr.bf16.mxu0 0
    %4109 = vmatmul.mubr.bf16.gmra.mrb[0].mxu0 %v4062
    %v4110 = vpop.f32.mrb[0].mxu0
    %v4111 = vadd.f32 0.0, %v4110
    %v4112 = vpop.f32.mrb[0].mxu0
    %v4113 = vadd.f32 0.0, %v4112
    %v4114 = vpop.f32.mrb[0].mxu0
    %v4115 = vpop.f32.mrb[0].mxu0
    %4116 = vdwg.mxu0
    %4117 = vmatprep.subr.bf16.mxu0 %v4052
    %4118 = vmatpush1.bf16.msra.mxu0 %v4051
    %4119 = vmatprep.subr.bf16.mxu0 %v4074
    %4120 = vmatpush1.bf16.msra.mxu0 %v4071
    %4121 = vmatprep.subr.bf16.mxu0 0
    %4122 = vmatpush1.bf16.msra.mxu0 0
    %4123 = vmatprep.subr.bf16.mxu0 0
    %4124 = vmatpush1.bf16.msra.mxu0 0
    %4125 = vmatprep.subr.bf16.mxu0 0
    %4126 = vmatpush1.bf16.msra.mxu0 0
    %4127 = vmatprep.subr.bf16.mxu0 0
    %4128 = vmatpush1.bf16.msra.mxu0 0
    %4129 = vmatprep.subr.bf16.mxu0 0
    %4130 = vmatpush1.bf16.msra.mxu0 0
    %4131 = vmatprep.subr.bf16.mxu0 0
    %4132 = vmatpush1.bf16.msra.mxu0 0
    %4133 = vmatprep.subr.bf16.mxu0 0
    %4134 = vmatpush1.bf16.msra.mxu0 0
    %4135 = vmatprep.subr.bf16.mxu0 0
    %4136 = vmatpush1.bf16.msra.mxu0 0
    %4137 = vmatprep.subr.bf16.mxu0 0
    %4138 = vmatpush1.bf16.msra.mxu0 0
    %4139 = vmatprep.subr.bf16.mxu0 0
    %4140 = vmatpush1.bf16.msra.mxu0 0
    %4141 = vmatprep.subr.bf16.mxu0 0
    %4142 = vmatpush1.bf16.msra.mxu0 0
    %4143 = vmatprep.subr.bf16.mxu0 0
    %4144 = vmatpush1.bf16.msra.mxu0 0
    %4145 = vmatprep.subr.bf16.mxu0 0
    %4146 = vmatpush1.bf16.msra.mxu0 0
    %4147 = vmatprep.subr.bf16.mxu0 0
    %4148 = vmatpush1.bf16.msra.mxu0 0
    %4149 = vmatprep.mubr.bf16.mxu0 0
    %4150 = vmatmul.mubr.bf16.gmra.mrb[0].mxu0 %v4062
    %v4151 = vpop.f32.mrb[0].mxu0
    %v4152 = vadd.f32 0.0, %v4151
    %v4153 = vpop.f32.mrb[0].mxu0
    %v4154 = vadd.f32 0.0, %v4153
    %v4155 = vpop.f32.mrb[0].mxu0
    %v4156 = vpop.f32.mrb[0].mxu0
    %4157 = vdwg.mxu0
    %v4158 = vadd.f32 %v3960, %v4111
    %v4159 = vadd.f32 %v3961, %v4113
    %v4160 = vadd.f32 %v3962, %v4152
    %v4161 = vadd.f32 %v3963, %v4154
    %v4162 = vld [vmem:[%s1032] ss:$8 sm:$0xf]
    %v4164 = vlaneseq
    %v4165 = vshrl.u32 %v4164, 7
    %v4166 = vsub.s32 0, %v4165
    %v4167 = vrot.slane %v4162, %v4166
    %v4168 = vlaneseq
    %v4169 = vshrl.u32 %v4168, 7
    %v4170 = vsub.s32 1, %v4169
    %v4171 = vrot.slane %v4162, %v4170
    %v4172 = vlaneseq
    %v4173 = vshrl.u32 %v4172, 7
    %v4174 = vsub.s32 2, %v4173
    %v4175 = vrot.slane %v4162, %v4174
    %v4176 = vlaneseq
    %v4177 = vshrl.u32 %v4176, 7
    %v4178 = vsub.s32 3, %v4177
    %v4179 = vrot.slane %v4162, %v4178
    %4180 = vrot.lane.b32.xlu0 %v4167, 15
    %v4181 = vpop.permute.xlu0 %4180
    %4182 = vrot.lane.b32.xlu0 %v4171, 15
    %v4183 = vpop.permute.xlu0 %4182
    %4184 = vrot.lane.b32.xlu0 %v4175, 15
    %v4185 = vpop.permute.xlu0 %4184
    %4186 = vrot.lane.b32.xlu0 %v4179, 15
    %v4187 = vpop.permute.xlu0 %4186
    %v4188 = vsel %vm1059, %v4181, %v4183
    %v4189 = vsel %vm1059, %v4183, %v4185
    %v4190 = vsel %vm1059, %v4185, %v4187
    %v4196 = vmul.f32 %v3057, %v4181
    %v4197 = vmul.f32 %v3058, %v4188
    %v4198 = vmul.f32 %v3059, %v4189
    %v4199 = vmul.f32 %v3060, %v4190
    %v4200 = vmul.f32 %v4187, 0.0
    %v4201 = vmul.f32 %v3061, %v4181
    %v4202 = vmul.f32 %v3062, %v4188
    %v4203 = vmul.f32 %v3063, %v4189
    %v4204 = vmul.f32 %v3064, %v4190
    %v4205 = vmul.f32 %v3065, %v4181
    %v4206 = vmul.f32 %v3066, %v4188
    %v4207 = vmul.f32 %v3067, %v4189
    %v4208 = vmul.f32 %v3068, %v4190
    %s4209 = scalar_lea.vmem %s10, 24
    %v4210 = vld [vmem:[%s4209] sm:$0xf]
    %v4211 = vpack.c.bf16 %v4201, %v4196
    %v4212 = vpack.c.bf16 %v4202, %v4197
    %v4213 = vpack.c.bf16 %v4203, %v4198
    %v4214 = vpack.c.bf16 %v4204, %v4199
    %v4215 = vpack.c.bf16 %v4200, %v4200
    %v4216 = vpack.c.bf16 %v4205, %v4205
    %v4217 = vpack.c.bf16 %v4206, %v4206
    %v4218 = vpack.c.bf16 %v4207, %v4207
    %v4219 = vpack.c.bf16 %v4208, %v4208
    %4229 = vrot.lane.b32.xlu0 %v4211, 113
    %v4230 = vpop.permute.xlu0 %4229
    %4231 = vrot.lane.b32.xlu0 %v4212, 113
    %v4232 = vpop.permute.xlu0 %4231
    %4233 = vrot.lane.b32.xlu0 %v4213, 113
    %v4234 = vpop.permute.xlu0 %4233
    %4235 = vrot.lane.b32.xlu0 %v4214, 113
    %v4236 = vpop.permute.xlu0 %4235
    %4237 = vrot.lane.b32.xlu0 %v4215, 113
    %v4238 = vpop.permute.xlu0 %4237
    %4239 = vrot.lane.b32.xlu0 %v4216, 113
    %v4240 = vpop.permute.xlu0 %4239
    %4241 = vrot.lane.b32.xlu0 %v4217, 113
    %v4242 = vpop.permute.xlu0 %4241
    %4243 = vrot.lane.b32.xlu0 %v4218, 113
    %v4244 = vpop.permute.xlu0 %4243
    %4245 = vrot.lane.b32.xlu0 %v4219, 113
    %v4246 = vpop.permute.xlu0 %4245
    %v4247 = vsel %vm1095, %v4230, %v4232
    %v4248 = vsel %vm1095, %v4232, %v4234
    %v4249 = vsel %vm1095, %v4234, %v4236
    %v4250 = vsel %vm1095, %v4236, %v4238
    %v4251 = vsel %vm1095, %v4240, %v4242
    %v4252 = vsel %vm1095, %v4242, %v4244
    %v4253 = vsel %vm1095, %v4244, %v4246
    %v4254 = vsel %vm1095, %v4246, %v4238
    %v4260 = vsel %vm3223, %v4210, 0
    %v4263 = vsel %vm206, %v4251, 0
    %v4266 = vsel %vm206, %v4252, 0
    %v4269 = vsel %vm206, %v4253, 0
    %v4272 = vsel %vm206, %v4254, 0
    %4274 = vmatprep.subr.bf16.mxu0 %v4248
    %4275 = vmatpush1.bf16.msra.mxu0 %v4247
    %4276 = vmatprep.subr.bf16.mxu0 %v4266
    %4277 = vmatpush1.bf16.msra.mxu0 %v4263
    %4278 = vmatprep.subr.bf16.mxu0 0
    %4279 = vmatpush1.bf16.msra.mxu0 0
    %4280 = vmatprep.subr.bf16.mxu0 0
    %4281 = vmatpush1.bf16.msra.mxu0 0
    %4282 = vmatprep.subr.bf16.mxu0 0
    %4283 = vmatpush1.bf16.msra.mxu0 0
    %4284 = vmatprep.subr.bf16.mxu0 0
    %4285 = vmatpush1.bf16.msra.mxu0 0
    %4286 = vmatprep.subr.bf16.mxu0 0
    %4287 = vmatpush1.bf16.msra.mxu0 0
    %4288 = vmatprep.subr.bf16.mxu0 0
    %4289 = vmatpush1.bf16.msra.mxu0 0
    %4290 = vmatprep.subr.bf16.mxu0 0
    %4291 = vmatpush1.bf16.msra.mxu0 0
    %4292 = vmatprep.subr.bf16.mxu0 0
    %4293 = vmatpush1.bf16.msra.mxu0 0
    %4294 = vmatprep.subr.bf16.mxu0 0
    %4295 = vmatpush1.bf16.msra.mxu0 0
    %4296 = vmatprep.subr.bf16.mxu0 0
    %4297 = vmatpush1.bf16.msra.mxu0 0
    %4298 = vmatprep.subr.bf16.mxu0 0
    %4299 = vmatpush1.bf16.msra.mxu0 0
    %4300 = vmatprep.subr.bf16.mxu0 0
    %4301 = vmatpush1.bf16.msra.mxu0 0
    %4302 = vmatprep.subr.bf16.mxu0 0
    %4303 = vmatpush1.bf16.msra.mxu0 0
    %4304 = vmatprep.subr.bf16.mxu0 0
    %4305 = vmatpush1.bf16.msra.mxu0 0
    %4306 = vmatprep.mubr.bf16.mxu0 0
    %4307 = vmatmul.mubr.bf16.gmra.mrb[0].mxu0 %v4260
    %v4308 = vpop.f32.mrb[0].mxu0
    %v4309 = vadd.f32 0.0, %v4308
    %v4310 = vpop.f32.mrb[0].mxu0
    %v4311 = vadd.f32 0.0, %v4310
    %v4312 = vpop.f32.mrb[0].mxu0
    %v4313 = vpop.f32.mrb[0].mxu0
    %4314 = vdwg.mxu0
    %4315 = vmatprep.subr.bf16.mxu0 %v4250
    %4316 = vmatpush1.bf16.msra.mxu0 %v4249
    %4317 = vmatprep.subr.bf16.mxu0 %v4272
    %4318 = vmatpush1.bf16.msra.mxu0 %v4269
    %4319 = vmatprep.subr.bf16.mxu0 0
    %4320 = vmatpush1.bf16.msra.mxu0 0
    %4321 = vmatprep.subr.bf16.mxu0 0
    %4322 = vmatpush1.bf16.msra.mxu0 0
    %4323 = vmatprep.subr.bf16.mxu0 0
    %4324 = vmatpush1.bf16.msra.mxu0 0
    %4325 = vmatprep.subr.bf16.mxu0 0
    %4326 = vmatpush1.bf16.msra.mxu0 0
    %4327 = vmatprep.subr.bf16.mxu0 0
    %4328 = vmatpush1.bf16.msra.mxu0 0
    %4329 = vmatprep.subr.bf16.mxu0 0
    %4330 = vmatpush1.bf16.msra.mxu0 0
    %4331 = vmatprep.subr.bf16.mxu0 0
    %4332 = vmatpush1.bf16.msra.mxu0 0
    %4333 = vmatprep.subr.bf16.mxu0 0
    %4334 = vmatpush1.bf16.msra.mxu0 0
    %4335 = vmatprep.subr.bf16.mxu0 0
    %4336 = vmatpush1.bf16.msra.mxu0 0
    %4337 = vmatprep.subr.bf16.mxu0 0
    %4338 = vmatpush1.bf16.msra.mxu0 0
    %4339 = vmatprep.subr.bf16.mxu0 0
    %4340 = vmatpush1.bf16.msra.mxu0 0
    %4341 = vmatprep.subr.bf16.mxu0 0
    %4342 = vmatpush1.bf16.msra.mxu0 0
    %4343 = vmatprep.subr.bf16.mxu0 0
    %4344 = vmatpush1.bf16.msra.mxu0 0
    %4345 = vmatprep.subr.bf16.mxu0 0
    %4346 = vmatpush1.bf16.msra.mxu0 0
    %4347 = vmatprep.mubr.bf16.mxu0 0
    %4348 = vmatmul.mubr.bf16.gmra.mrb[0].mxu0 %v4260
    %v4349 = vpop.f32.mrb[0].mxu0
    %v4350 = vadd.f32 0.0, %v4349
    %v4351 = vpop.f32.mrb[0].mxu0
    %v4352 = vadd.f32 0.0, %v4351
    %v4353 = vpop.f32.mrb[0].mxu0
    %v4354 = vpop.f32.mrb[0].mxu0
    %4355 = vdwg.mxu0
    %v4356 = vadd.f32 %v4158, %v4309
    %v4357 = vadd.f32 %v4159, %v4311
    %v4358 = vadd.f32 %v4160, %v4350
    %v4359 = vadd.f32 %v4161, %v4352
    %v4360 = vld [vmem:[%s1201] ss:$8 sm:$0xf]
    %v4362 = vlaneseq
    %v4363 = vshrl.u32 %v4362, 7
    %v4364 = vsub.s32 0, %v4363
    %v4365 = vrot.slane %v4360, %v4364
    %v4366 = vlaneseq
    %v4367 = vshrl.u32 %v4366, 7
    %v4368 = vsub.s32 1, %v4367
    %v4369 = vrot.slane %v4360, %v4368
    %v4370 = vlaneseq
    %v4371 = vshrl.u32 %v4370, 7
    %v4372 = vsub.s32 2, %v4371
    %v4373 = vrot.slane %v4360, %v4372
    %v4374 = vlaneseq
    %v4375 = vshrl.u32 %v4374, 7
    %v4376 = vsub.s32 3, %v4375
    %v4377 = vrot.slane %v4360, %v4376
    %4378 = vrot.lane.b32.xlu0 %v4365, 16
    %v4379 = vpop.permute.xlu0 %4378
    %4380 = vrot.lane.b32.xlu0 %v4369, 16
    %v4381 = vpop.permute.xlu0 %4380
    %4382 = vrot.lane.b32.xlu0 %v4373, 16
    %v4383 = vpop.permute.xlu0 %4382
    %4384 = vrot.lane.b32.xlu0 %v4377, 16
    %v4385 = vpop.permute.xlu0 %4384
    %v4386 = vsel %vm1228, %v4379, %v4381
    %v4387 = vsel %vm1228, %v4381, %v4383
    %v4388 = vsel %vm1228, %v4383, %v4385
    %v4394 = vmul.f32 %v3057, %v4379
    %v4395 = vmul.f32 %v3058, %v4386
    %v4396 = vmul.f32 %v3059, %v4387
    %v4397 = vmul.f32 %v3060, %v4388
    %v4398 = vmul.f32 %v4385, 0.0
    %v4399 = vmul.f32 %v3061, %v4379
    %v4400 = vmul.f32 %v3062, %v4386
    %v4401 = vmul.f32 %v3063, %v4387
    %v4402 = vmul.f32 %v3064, %v4388
    %v4403 = vmul.f32 %v3065, %v4379
    %v4404 = vmul.f32 %v3066, %v4386
    %v4405 = vmul.f32 %v3067, %v4387
    %v4406 = vmul.f32 %v3068, %v4388
    %s4407 = scalar_lea.vmem %s10, 28
    %v4408 = vld [vmem:[%s4407] sm:$0xf]
    %v4409 = vpack.c.bf16 %v4399, %v4394
    %v4410 = vpack.c.bf16 %v4400, %v4395
    %v4411 = vpack.c.bf16 %v4401, %v4396
    %v4412 = vpack.c.bf16 %v4402, %v4397
    %v4413 = vpack.c.bf16 %v4398, %v4398
    %v4414 = vpack.c.bf16 %v4403, %v4403
    %v4415 = vpack.c.bf16 %v4404, %v4404
    %v4416 = vpack.c.bf16 %v4405, %v4405
    %v4417 = vpack.c.bf16 %v4406, %v4406
    %4427 = vrot.lane.b32.xlu0 %v4409, 112
    %v4428 = vpop.permute.xlu0 %4427
    %4429 = vrot.lane.b32.xlu0 %v4410, 112
    %v4430 = vpop.permute.xlu0 %4429
    %4431 = vrot.lane.b32.xlu0 %v4411, 112
    %v4432 = vpop.permute.xlu0 %4431
    %4433 = vrot.lane.b32.xlu0 %v4412, 112
    %v4434 = vpop.permute.xlu0 %4433
    %4435 = vrot.lane.b32.xlu0 %v4413, 112
    %v4436 = vpop.permute.xlu0 %4435
    %4437 = vrot.lane.b32.xlu0 %v4414, 112
    %v4438 = vpop.permute.xlu0 %4437
    %4439 = vrot.lane.b32.xlu0 %v4415, 112
    %v4440 = vpop.permute.xlu0 %4439
    %4441 = vrot.lane.b32.xlu0 %v4416, 112
    %v4442 = vpop.permute.xlu0 %4441
    %4443 = vrot.lane.b32.xlu0 %v4417, 112
    %v4444 = vpop.permute.xlu0 %4443
    %v4445 = vsel %vm1264, %v4428, %v4430
    %v4446 = vsel %vm1264, %v4430, %v4432
    %v4447 = vsel %vm1264, %v4432, %v4434
    %v4448 = vsel %vm1264, %v4434, %v4436
    %v4449 = vsel %vm1264, %v4438, %v4440
    %v4450 = vsel %vm1264, %v4440, %v4442
    %v4451 = vsel %vm1264, %v4442, %v4444
    %v4452 = vsel %vm1264, %v4444, %v4436
    %v4458 = vsel %vm3223, %v4408, 0
    %v4461 = vsel %vm206, %v4449, 0
    %v4464 = vsel %vm206, %v4450, 0
    %v4467 = vsel %vm206, %v4451, 0
    %v4470 = vsel %vm206, %v4452, 0
    %4472 = vmatprep.subr.bf16.mxu0 %v4446
    %4473 = vmatpush1.bf16.msra.mxu0 %v4445
    %4474 = vmatprep.subr.bf16.mxu0 %v4464
    %4475 = vmatpush1.bf16.msra.mxu0 %v4461
    %4476 = vmatprep.subr.bf16.mxu0 0
    %4477 = vmatpush1.bf16.msra.mxu0 0
    %4478 = vmatprep.subr.bf16.mxu0 0
    %4479 = vmatpush1.bf16.msra.mxu0 0
    %4480 = vmatprep.subr.bf16.mxu0 0
    %4481 = vmatpush1.bf16.msra.mxu0 0
    %4482 = vmatprep.subr.bf16.mxu0 0
    %4483 = vmatpush1.bf16.msra.mxu0 0
    %4484 = vmatprep.subr.bf16.mxu0 0
    %4485 = vmatpush1.bf16.msra.mxu0 0
    %4486 = vmatprep.subr.bf16.mxu0 0
    %4487 = vmatpush1.bf16.msra.mxu0 0
    %4488 = vmatprep.subr.bf16.mxu0 0
    %4489 = vmatpush1.bf16.msra.mxu0 0
    %4490 = vmatprep.subr.bf16.mxu0 0
    %4491 = vmatpush1.bf16.msra.mxu0 0
    %4492 = vmatprep.subr.bf16.mxu0 0
    %4493 = vmatpush1.bf16.msra.mxu0 0
    %4494 = vmatprep.subr.bf16.mxu0 0
    %4495 = vmatpush1.bf16.msra.mxu0 0
    %4496 = vmatprep.subr.bf16.mxu0 0
    %4497 = vmatpush1.bf16.msra.mxu0 0
    %4498 = vmatprep.subr.bf16.mxu0 0
    %4499 = vmatpush1.bf16.msra.mxu0 0
    %4500 = vmatprep.subr.bf16.mxu0 0
    %4501 = vmatpush1.bf16.msra.mxu0 0
    %4502 = vmatprep.subr.bf16.mxu0 0
    %4503 = vmatpush1.bf16.msra.mxu0 0
    %4504 = vmatprep.mubr.bf16.mxu0 0
    %4505 = vmatmul.mubr.bf16.gmra.mrb[0].mxu0 %v4458
    %v4506 = vpop.f32.mrb[0].mxu0
    %v4507 = vadd.f32 0.0, %v4506
    %v4508 = vpop.f32.mrb[0].mxu0
    %v4509 = vadd.f32 0.0, %v4508
    %v4510 = vpop.f32.mrb[0].mxu0
    %v4511 = vpop.f32.mrb[0].mxu0
    %4512 = vdwg.mxu0
    %4513 = vmatprep.subr.bf16.mxu0 %v4448
    %4514 = vmatpush1.bf16.msra.mxu0 %v4447
    %4515 = vmatprep.subr.bf16.mxu0 %v4470
    %4516 = vmatpush1.bf16.msra.mxu0 %v4467
    %4517 = vmatprep.subr.bf16.mxu0 0
    %4518 = vmatpush1.bf16.msra.mxu0 0
    %4519 = vmatprep.subr.bf16.mxu0 0
    %4520 = vmatpush1.bf16.msra.mxu0 0
    %4521 = vmatprep.subr.bf16.mxu0 0
    %4522 = vmatpush1.bf16.msra.mxu0 0
    %4523 = vmatprep.subr.bf16.mxu0 0
    %4524 = vmatpush1.bf16.msra.mxu0 0
    %4525 = vmatprep.subr.bf16.mxu0 0
    %4526 = vmatpush1.bf16.msra.mxu0 0
    %4527 = vmatprep.subr.bf16.mxu0 0
    %4528 = vmatpush1.bf16.msra.mxu0 0
    %4529 = vmatprep.subr.bf16.mxu0 0
    %4530 = vmatpush1.bf16.msra.mxu0 0
    %4531 = vmatprep.subr.bf16.mxu0 0
    %4532 = vmatpush1.bf16.msra.mxu0 0
    %4533 = vmatprep.subr.bf16.mxu0 0
    %4534 = vmatpush1.bf16.msra.mxu0 0
    %4535 = vmatprep.subr.bf16.mxu0 0
    %4536 = vmatpush1.bf16.msra.mxu0 0
    %4537 = vmatprep.subr.bf16.mxu0 0
    %4538 = vmatpush1.bf16.msra.mxu0 0
    %4539 = vmatprep.subr.bf16.mxu0 0
    %4540 = vmatpush1.bf16.msra.mxu0 0
    %4541 = vmatprep.subr.bf16.mxu0 0
    %4542 = vmatpush1.bf16.msra.mxu0 0
    %4543 = vmatprep.subr.bf16.mxu0 0
    %4544 = vmatpush1.bf16.msra.mxu0 0
    %4545 = vmatprep.mubr.bf16.mxu0 0
    %4546 = vmatmul.mubr.bf16.gmra.mrb[0].mxu0 %v4458
    %v4547 = vpop.f32.mrb[0].mxu0
    %v4548 = vadd.f32 0.0, %v4547
    %v4549 = vpop.f32.mrb[0].mxu0
    %v4550 = vadd.f32 0.0, %v4549
    %v4551 = vpop.f32.mrb[0].mxu0
    %v4552 = vpop.f32.mrb[0].mxu0
    %4553 = vdwg.mxu0
    %v4554 = vadd.f32 %v4356, %v4507
    %v4555 = vadd.f32 %v4357, %v4509
    %v4556 = vadd.f32 %v4358, %v4548
    %v4557 = vadd.f32 %v4359, %v4550
    %v4558 = vld [vmem:[%s1370] ss:$8 sm:$0xf]
    %v4560 = vlaneseq
    %v4561 = vshrl.u32 %v4560, 7
    %v4562 = vsub.s32 0, %v4561
    %v4563 = vrot.slane %v4558, %v4562
    %v4564 = vlaneseq
    %v4565 = vshrl.u32 %v4564, 7
    %v4566 = vsub.s32 1, %v4565
    %v4567 = vrot.slane %v4558, %v4566
    %v4568 = vlaneseq
    %v4569 = vshrl.u32 %v4568, 7
    %v4570 = vsub.s32 2, %v4569
    %v4571 = vrot.slane %v4558, %v4570
    %v4572 = vlaneseq
    %v4573 = vshrl.u32 %v4572, 7
    %v4574 = vsub.s32 3, %v4573
    %v4575 = vrot.slane %v4558, %v4574
    %4576 = vrot.lane.b32.xlu0 %v4563, 17
    %v4577 = vpop.permute.xlu0 %4576
    %4578 = vrot.lane.b32.xlu0 %v4567, 17
    %v4579 = vpop.permute.xlu0 %4578
    %4580 = vrot.lane.b32.xlu0 %v4571, 17
    %v4581 = vpop.permute.xlu0 %4580
    %4582 = vrot.lane.b32.xlu0 %v4575, 17
    %v4583 = vpop.permute.xlu0 %4582
    %v4584 = vsel %vm1397, %v4577, %v4579
    %v4585 = vsel %vm1397, %v4579, %v4581
    %v4586 = vsel %vm1397, %v4581, %v4583
    %v4592 = vmul.f32 %v3057, %v4577
    %v4593 = vmul.f32 %v3058, %v4584
    %v4594 = vmul.f32 %v3059, %v4585
    %v4595 = vmul.f32 %v3060, %v4586
    %v4596 = vmul.f32 %v4583, 0.0
    %v4597 = vmul.f32 %v3061, %v4577
    %v4598 = vmul.f32 %v3062, %v4584
    %v4599 = vmul.f32 %v3063, %v4585
    %v4600 = vmul.f32 %v3064, %v4586
    %v4601 = vmul.f32 %v3065, %v4577
    %v4602 = vmul.f32 %v3066, %v4584
    %v4603 = vmul.f32 %v3067, %v4585
    %v4604 = vmul.f32 %v3068, %v4586
    %s4605 = scalar_lea.vmem %s10, 32
    %v4606 = vld [vmem:[%s4605] sm:$0xf]
    %v4607 = vpack.c.bf16 %v4597, %v4592
    %v4608 = vpack.c.bf16 %v4598, %v4593
    %v4609 = vpack.c.bf16 %v4599, %v4594
    %v4610 = vpack.c.bf16 %v4600, %v4595
    %v4611 = vpack.c.bf16 %v4596, %v4596
    %v4612 = vpack.c.bf16 %v4601, %v4601
    %v4613 = vpack.c.bf16 %v4602, %v4602
    %v4614 = vpack.c.bf16 %v4603, %v4603
    %v4615 = vpack.c.bf16 %v4604, %v4604
    %4625 = vrot.lane.b32.xlu0 %v4607, 111
    %v4626 = vpop.permute.xlu0 %4625
    %4627 = vrot.lane.b32.xlu0 %v4608, 111
    %v4628 = vpop.permute.xlu0 %4627
    %4629 = vrot.lane.b32.xlu0 %v4609, 111
    %v4630 = vpop.permute.xlu0 %4629
    %4631 = vrot.lane.b32.xlu0 %v4610, 111
    %v4632 = vpop.permute.xlu0 %4631
    %4633 = vrot.lane.b32.xlu0 %v4611, 111
    %v4634 = vpop.permute.xlu0 %4633
    %4635 = vrot.lane.b32.xlu0 %v4612, 111
    %v4636 = vpop.permute.xlu0 %4635
    %4637 = vrot.lane.b32.xlu0 %v4613, 111
    %v4638 = vpop.permute.xlu0 %4637
    %4639 = vrot.lane.b32.xlu0 %v4614, 111
    %v4640 = vpop.permute.xlu0 %4639
    %4641 = vrot.lane.b32.xlu0 %v4615, 111
    %v4642 = vpop.permute.xlu0 %4641
    %v4643 = vsel %vm1433, %v4626, %v4628
    %v4644 = vsel %vm1433, %v4628, %v4630
    %v4645 = vsel %vm1433, %v4630, %v4632
    %v4646 = vsel %vm1433, %v4632, %v4634
    %v4647 = vsel %vm1433, %v4636, %v4638
    %v4648 = vsel %vm1433, %v4638, %v4640
    %v4649 = vsel %vm1433, %v4640, %v4642
    %v4650 = vsel %vm1433, %v4642, %v4634
    %v4656 = vsel %vm3223, %v4606, 0
    %v4659 = vsel %vm206, %v4647, 0
    %v4662 = vsel %vm206, %v4648, 0
    %v4665 = vsel %vm206, %v4649, 0
    %v4668 = vsel %vm206, %v4650, 0
    %4670 = vmatprep.subr.bf16.mxu0 %v4644
    %4671 = vmatpush1.bf16.msra.mxu0 %v4643
    %4672 = vmatprep.subr.bf16.mxu0 %v4662
    %4673 = vmatpush1.bf16.msra.mxu0 %v4659
    %4674 = vmatprep.subr.bf16.mxu0 0
    %4675 = vmatpush1.bf16.msra.mxu0 0
    %4676 = vmatprep.subr.bf16.mxu0 0
    %4677 = vmatpush1.bf16.msra.mxu0 0
    %4678 = vmatprep.subr.bf16.mxu0 0
    %4679 = vmatpush1.bf16.msra.mxu0 0
    %4680 = vmatprep.subr.bf16.mxu0 0
    %4681 = vmatpush1.bf16.msra.mxu0 0
    %4682 = vmatprep.subr.bf16.mxu0 0
    %4683 = vmatpush1.bf16.msra.mxu0 0
    %4684 = vmatprep.subr.bf16.mxu0 0
    %4685 = vmatpush1.bf16.msra.mxu0 0
    %4686 = vmatprep.subr.bf16.mxu0 0
    %4687 = vmatpush1.bf16.msra.mxu0 0
    %4688 = vmatprep.subr.bf16.mxu0 0
    %4689 = vmatpush1.bf16.msra.mxu0 0
    %4690 = vmatprep.subr.bf16.mxu0 0
    %4691 = vmatpush1.bf16.msra.mxu0 0
    %4692 = vmatprep.subr.bf16.mxu0 0
    %4693 = vmatpush1.bf16.msra.mxu0 0
    %4694 = vmatprep.subr.bf16.mxu0 0
    %4695 = vmatpush1.bf16.msra.mxu0 0
    %4696 = vmatprep.subr.bf16.mxu0 0
    %4697 = vmatpush1.bf16.msra.mxu0 0
    %4698 = vmatprep.subr.bf16.mxu0 0
    %4699 = vmatpush1.bf16.msra.mxu0 0
    %4700 = vmatprep.subr.bf16.mxu0 0
    %4701 = vmatpush1.bf16.msra.mxu0 0
    %4702 = vmatprep.mubr.bf16.mxu0 0
    %4703 = vmatmul.mubr.bf16.gmra.mrb[0].mxu0 %v4656
    %v4704 = vpop.f32.mrb[0].mxu0
    %v4705 = vadd.f32 0.0, %v4704
    %v4706 = vpop.f32.mrb[0].mxu0
    %v4707 = vadd.f32 0.0, %v4706
    %v4708 = vpop.f32.mrb[0].mxu0
    %v4709 = vpop.f32.mrb[0].mxu0
    %4710 = vdwg.mxu0
    %4711 = vmatprep.subr.bf16.mxu0 %v4646
    %4712 = vmatpush1.bf16.msra.mxu0 %v4645
    %4713 = vmatprep.subr.bf16.mxu0 %v4668
    %4714 = vmatpush1.bf16.msra.mxu0 %v4665
    %4715 = vmatprep.subr.bf16.mxu0 0
    %4716 = vmatpush1.bf16.msra.mxu0 0
    %4717 = vmatprep.subr.bf16.mxu0 0
    %4718 = vmatpush1.bf16.msra.mxu0 0
    %4719 = vmatprep.subr.bf16.mxu0 0
    %4720 = vmatpush1.bf16.msra.mxu0 0
    %4721 = vmatprep.subr.bf16.mxu0 0
    %4722 = vmatpush1.bf16.msra.mxu0 0
    %4723 = vmatprep.subr.bf16.mxu0 0
    %4724 = vmatpush1.bf16.msra.mxu0 0
    %4725 = vmatprep.subr.bf16.mxu0 0
    %4726 = vmatpush1.bf16.msra.mxu0 0
    %4727 = vmatprep.subr.bf16.mxu0 0
    %4728 = vmatpush1.bf16.msra.mxu0 0
    %4729 = vmatprep.subr.bf16.mxu0 0
    %4730 = vmatpush1.bf16.msra.mxu0 0
    %4731 = vmatprep.subr.bf16.mxu0 0
    %4732 = vmatpush1.bf16.msra.mxu0 0
    %4733 = vmatprep.subr.bf16.mxu0 0
    %4734 = vmatpush1.bf16.msra.mxu0 0
    %4735 = vmatprep.subr.bf16.mxu0 0
    %4736 = vmatpush1.bf16.msra.mxu0 0
    %4737 = vmatprep.subr.bf16.mxu0 0
    %4738 = vmatpush1.bf16.msra.mxu0 0
    %4739 = vmatprep.subr.bf16.mxu0 0
    %4740 = vmatpush1.bf16.msra.mxu0 0
    %4741 = vmatprep.subr.bf16.mxu0 0
    %4742 = vmatpush1.bf16.msra.mxu0 0
    %4743 = vmatprep.mubr.bf16.mxu0 0
    %4744 = vmatmul.mubr.bf16.gmra.mrb[0].mxu0 %v4656
    %v4745 = vpop.f32.mrb[0].mxu0
    %v4746 = vadd.f32 0.0, %v4745
    %v4747 = vpop.f32.mrb[0].mxu0
    %v4748 = vadd.f32 0.0, %v4747
    %v4749 = vpop.f32.mrb[0].mxu0
    %v4750 = vpop.f32.mrb[0].mxu0
    %4751 = vdwg.mxu0
    %v4752 = vadd.f32 %v4554, %v4705
    %v4753 = vadd.f32 %v4555, %v4707
    %v4754 = vadd.f32 %v4556, %v4746
    %v4755 = vadd.f32 %v4557, %v4748
    %4756 = vst [vmem:[#allocation5 + $0x60] sm:$0xff] %v4752
    %4757 = vst [vmem:[#allocation5 + $0x68] sm:$0xff] %v4753
    %4758 = vst [vmem:[#allocation5 + $0x70] sm:$0xff] %v4754
    %4759 = vst [vmem:[#allocation5 + $0x78] sm:$0xff] %v4755
    // Predicated region
    $region50: #{tpu_custom_call.1} parent=1 // pred_check
      _
    $region51: #{tpu_custom_call.1} parent=1 // pred_check_branch
      %4761 = sbr.rel (0) target = $region53
    $region52: #{tpu_custom_call.1} parent=1 // pred_region
      %s4763 = ssub.s32 2048, 2048
      %4764 = vsyncadd [#allocation4], %s4763
      %s4765 = sshll.u32 [#allocation5], 4
      %s4766 = int_to_ptr.vmem [resolvable:$true] %s4765
      %4771 = dma.vmem_to_hbm [thread:$0]  %s4766, 2048, %s11, [#allocation4], 512, 512, 32
    $region53: #{tpu_custom_call.1} parent=1 // pred_fallthru
      _
    // Predicated region
    $region54: #{tpu_custom_call.1} parent=1 // pred_check
      _
    $region55: #{tpu_custom_call.1} parent=1 // pred_check_branch
      %4773 = sbr.rel (0) target = $region57
    $region56: #{tpu_custom_call.1} parent=1 // pred_region
      %4774 = dma.done [#allocation4], 2048
    $region57: #{tpu_custom_call.1} parent=1 // pred_fallthru
      _
    %4775 = vsyncpa [#allocation3], 1
    %4776 = vsyncpa [#allocation4], 1

</llo_original>
